<compile_context>
chip_gen: v6e
topology: v6e:2x2x1
jax: 0.10.0
libtpu: 0.0.40
codegen_flags: <defaults>
</compile_context>

<pallas_src>
import functools

import jax
import jax.numpy as jnp
from jax import lax
from jax.experimental import pallas as pl
from jax.experimental.pallas import tpu as pltpu


# ----------------------------- Pallas kernel ------------------------------ #
def _stage_kernel(x_ref, wf_ref, bias_ref, w2_ref, o_ref, *, H, W, Cp, depth):
    """Fused BasicStage (depth MLPBlocks) for one batch element.

    x_ref   : (1, H*W, C)          f32   input, spatially flattened (NHWC)
    wf_ref  : (depth, K_pad, Hid)  bf16  fused [1x1*bn ; folded 3x3 taps ; 0-pad]
    bias_ref: (depth, 1, Hid)      f32   folded BN bias
    w2_ref  : (depth, Hid, C)      bf16  conv1x1_2
    o_ref   : (1, H*W, C)          f32   output
    """
    N, C = x_ref.shape[1], x_ref.shape[2]
    K_pad = wf_ref.shape[1]
    K_used = C + 9 * Cp
    x = x_ref[0]                                       # (N, C) f32 residual carrier

    # ---- loop-invariant boundary masks / zero pad (hoisted: JAX won't CSE) ----
    row = lax.broadcasted_iota(jnp.int32, (N, 1), 0)   # flat spatial index n
    col = row % W                                      # w = n % W
    not_top = row >= W                                 # dh=0 taps need row h-1
    not_bottom = row < (N - W)                         # dh=2 taps need row h+1
    not_left = col >= 1                                # dw=0 taps need col w-1
    not_right = col < (W - 1)                          # dw=2 taps need col w+1
    kpad = (jnp.zeros((N, K_pad - K_used), jnp.float32)
            if K_pad > K_used else None)

    for d in range(depth):                             # depth is static -> unrolled
        # ---- im2col of the partial-3x3 taps via XLU sublane rolls + masks ----
        # roll(x, s)[n] = x[(n - s) mod N]; negative shifts expressed mod N.
        x1 = x[:, :Cp]                                               # (N, Cp)
        up = jnp.where(not_top, pltpu.roll(x1, W, axis=0), 0.0)      # x[h-1, w]
        down = jnp.where(not_bottom, pltpu.roll(x1, N - W, axis=0), 0.0)  # x[h+1, w]
        hband = jnp.concatenate([up, x1, down], axis=-1)             # (N, 3Cp): dh=0,1,2
        left = jnp.where(not_left, pltpu.roll(hband, 1, axis=0), 0.0)        # dw=0
        right = jnp.where(not_right, pltpu.roll(hband, N - 1, axis=0), 0.0)  # dw=2
        parts = [x, left, hband, right]                # columns: [C | dw=0 | dw=1 | dw=2]
        if kpad is not None:
            parts.append(kpad)
        im2col = jnp.concatenate(parts, axis=-1).astype(jnp.bfloat16)  # (N, K_pad)

        # ---- one wide-K MXU matmul: 1x1-conv + folded 3x3 + BN scale ----
        h1 = jnp.dot(im2col, wf_ref[d], preferred_element_type=jnp.float32)  # (N, Hid)
        h1 = jnp.maximum(h1 + bias_ref[d], 0.0)        # folded BN bias + ReLU
        h2 = jnp.dot(h1.astype(jnp.bfloat16), w2_ref[d],
                     preferred_element_type=jnp.float32)              # (N, C)
        x = x + h2                                     # residual add, f32

    o_ref[0] = x.astype(o_ref.dtype)


# --------------------------- Weight folding -------------------------------- #
def fold_stage_params(params, compute_dtype=jnp.bfloat16):
    """Fold BN scale + partial 3x3 conv + first 1x1 into one (K_pad, Hid) weight."""
    w3_0, w1_0, _, _, w2_0 = params[0]
    C, Hid = w1_0.shape
    Cp = w3_0.shape[2]
    assert w3_0.shape == (3, 3, Cp, Cp) and w2_0.shape == (Hid, C)
    K = C + 9 * Cp
    K_pad = ((K + 127) // 128) * 128        # full-depth MXU passes (zero rows)

    wf_l, b_l, w2_l = [], [], []
    for (w3, w1, scale, bias, w2) in params:
        w1s = w1 * scale[None, :]                                # fold BN scale (f32)
        w1r = w1s.at[:Cp, :].set(0.0)                            # conv replaces ch [0:Cp)
        # Tap order (dw outer, dh inner) matches the kernel's im2col column order.
        taps = [w3[dh, dw] @ w1s[:Cp] for dw in range(3) for dh in range(3)]
        wf = jnp.concatenate([w1r] + taps, axis=0)               # (K, Hid)
        wf = jnp.pad(wf, ((0, K_pad - K), (0, 0)))               # zero rows -> K_pad
        wf_l.append(wf)
        b_l.append(bias.reshape(1, Hid))
        w2_l.append(w2)

    WF = jnp.stack(wf_l).astype(compute_dtype)                   # (depth, K_pad, Hid)
    BI = jnp.stack(b_l).astype(jnp.float32)                      # (depth, 1, Hid)
    W2 = jnp.stack(w2_l).astype(compute_dtype)                   # (depth, Hid, C)
    return WF, BI, W2


# --------------------------------- Stage ----------------------------------- #
def basic_stage(x_nchw, params):
    """BasicStage.forward.  Input/output NCHW (PyTorch convention)."""
    x = jnp.transpose(x_nchw, (0, 2, 3, 1))                      # NCHW -> NHWC
    B, H, W, C = x.shape
    Cp = params[0][0].shape[2]
    assert params[0][1].shape[0] == C, "conv1x1_1 input dim must equal C"

    WF, BI, W2 = fold_stage_params(params)
    depth, K_pad, Hid = WF.shape
    N = H * W

    # Explicit scoped-VMEM budget: x/out double-buffered + resident weights +
    # per-block working set (im2col, h1, residual), with 2x headroom.
    io_bytes = 2 * 2 * N * C * 4
    w_bytes = 2 * (WF.size * 2 + W2.size * 2 + BI.size * 4)
    work_bytes = N * (K_pad * 6 + Hid * 6 + 4 * C * 4)
    vmem_limit = int(min(100 * 2**20, max(32 * 2**20,
                                          2 * (io_bytes + w_bytes + work_bytes))))

    out = pl.pallas_call(
        functools.partial(_stage_kernel, H=H, W=W, Cp=Cp, depth=depth),
        out_shape=jax.ShapeDtypeStruct((B, N, C), x.dtype),
        grid=(B,),
        in_specs=[
            pl.BlockSpec((1, N, C), lambda b: (b, 0, 0)),
            pl.BlockSpec((depth, K_pad, Hid), lambda b: (0, 0, 0)),
            pl.BlockSpec((depth, 1, Hid), lambda b: (0, 0, 0)),
            pl.BlockSpec((depth, Hid, C), lambda b: (0, 0, 0)),
        ],
        out_specs=pl.BlockSpec((1, N, C), lambda b: (b, 0, 0)),
        compiler_params=pltpu.CompilerParams(
            dimension_semantics=("parallel",),
            vmem_limit_bytes=vmem_limit),
    )(x.reshape(B, N, C), WF, BI, W2)

    return jnp.transpose(out.reshape(B, H, W, C), (0, 3, 1, 2))  # NHWC -> NCHW


# --------------------------- Parameter creation ---------------------------- #
def init_basic_stage_params(key, dim, depth, n_div, mlp_ratio):
    assert dim % n_div == 0, "dim must be divisible by n_div"
    Cp = dim // n_div
    hid = int(dim * mlp_ratio)
    params = []
    for _ in range(depth):
        key, k3, k1, k2, kg, kb, km, kv = jax.random.split(key, 8)
        w3 = jax.random.normal(k3, (3, 3, Cp, Cp), jnp.float32) * 0.1   # HWIO
        w1 = jax.random.normal(k1, (dim, hid), jnp.float32) * 0.1
        w2 = jax.random.normal(k2, (hid, dim), jnp.float32) * 0.1
        gamma = 1.0 + 0.1 * jax.random.normal(kg, (hid,), jnp.float32)
        beta = 0.1 * jax.random.normal(kb, (hid,), jnp.float32)
        rmean = 0.1 * jax.random.normal(km, (hid,), jnp.float32)
        rvar = 1.0 + 0.1 * jax.random.uniform(kv, (hid,), jnp.float32)
        eps = 1e-5
        scale = gamma / jnp.sqrt(rvar + eps)
        bias = beta - rmean * scale
        params.append((w3, w1, scale, bias, w2))
    return params


# ------------------------- Pure-JAX reference (check) ----------------------- #
def _ref_block(x_nhwc, p):
    w3, w1, scale, bias, w2 = p
    Cp = w3.shape[2]
    x1 = x_nhwc[..., :Cp]
    x2 = x_nhwc[..., Cp:]
    y1 = lax.conv_general_dilated(
        x1, w3, window_strides=(1, 1), padding="SAME",
        dimension_numbers=("NHWC", "HWIO", "NHWC"))
    t = jnp.concatenate([y1, x2], axis=-1)
    h = jnp.einsum("bhwc,cd->bhwd", t, w1)
    h = jnp.maximum(h * scale + bias, 0.0)
    h = jnp.einsum("bhwd,dc->bhwc", h, w2)
    return x_nhwc + h


def _ref_stage(x_nchw, params):
    x = jnp.transpose(x_nchw, (0, 2, 3, 1))
    for p in params:
        x = _ref_block(x, p)
    return jnp.transpose(x, (0, 3, 1, 2))


# ----------------------------------- Main ----------------------------------- #
if __name__ == "__main__":
    B, C, H, W = 2, 64, 16, 16
    depth, n_div, mlp_ratio = 2, 4, 2.0

    key = jax.random.PRNGKey(0)
    kx, kp = jax.random.split(key)
    x = jax.random.normal(kx, (B, C, H, W), jnp.float32)
    params = init_basic_stage_params(kp, C, depth, n_div, mlp_ratio)

    out = jax.jit(functools.partial(basic_stage, params=params))(x)
    out = jax.block_until_ready(out)

    ref = _ref_stage(x, params)
    assert out.shape == (B, C, H, W)
    # bf16 MXU operands vs pure-f32 reference -> looser tolerance than f32-only.
    assert bool(jnp.allclose(out, ref, atol=1e-1, rtol=1e-1)), "mismatch vs reference"

    print("KERNEL_OK")
</pallas_src>

<mosaic_0001>
module attributes {stable_mosaic.version = 11 : i64} {
  func.func @_stage_kernel(%arg0: i32, %arg1: memref<1x256x64xf32, #tpu.memory_space<vmem>>, %arg2: memref<2x256x128xbf16, #tpu.memory_space<vmem>>, %arg3: memref<2x1x128xf32, #tpu.memory_space<vmem>>, %arg4: memref<2x128x64xbf16, #tpu.memory_space<vmem>>, %arg5: memref<1x256x64xf32, #tpu.memory_space<vmem>>) attributes {dimension_semantics = [#tpu.dimension_semantics<parallel>], iteration_bounds = array<i64: 2>, scalar_prefetch = 0 : i64, scratch_operands = 0 : i64, tpu.core_type = #tpu.core_type<tc>, window_params = [{transform_indices = @transform_0, window_bounds = array<i64: 1, 256, 64>}, {pipeline_mode = #tpu.pipeline_mode<synchronous>, transform_indices = @transform_1, window_bounds = array<i64: 2, 256, 128>}, {pipeline_mode = #tpu.pipeline_mode<synchronous>, transform_indices = @transform_2, window_bounds = array<i64: 2, 1, 128>}, {pipeline_mode = #tpu.pipeline_mode<synchronous>, transform_indices = @transform_3, window_bounds = array<i64: 2, 128, 64>}, {transform_indices = @transform_4, window_bounds = array<i64: 1, 256, 64>}]} {
    %c0 = arith.constant 0 : index
    %c0_0 = arith.constant 0 : index
    %c0_1 = arith.constant 0 : index
    %0 = vector.load %arg1[%c0, %c0_0, %c0_1] : memref<1x256x64xf32, #tpu.memory_space<vmem>>, vector<1x256x64xf32>
    %1 = vector.shape_cast %0 : vector<1x256x64xf32> to vector<256x64xf32>
    %2 = tpu.iota {dimensions = array<i32: 0>} : vector<256x1xi32>
    %c16_i32 = arith.constant 16 : i32
    %c0_i32 = arith.constant 0 : i32
    %3 = arith.cmpi eq, %c16_i32, %c0_i32 : i32
    %c1_i32 = arith.constant 1 : i32
    %4 = arith.select %3, %c1_i32, %c16_i32 : i32
    %5 = vector.broadcast %4 : i32 to vector<256x1xi32>
    %6 = arith.remsi %2, %5 : vector<256x1xi32>
    %c0_i32_2 = arith.constant 0 : i32
    %7 = vector.broadcast %c0_i32_2 : i32 to vector<256x1xi32>
    %8 = arith.cmpi ne, %6, %7 : vector<256x1xi32>
    %c0_i32_3 = arith.constant 0 : i32
    %9 = vector.broadcast %c0_i32_3 : i32 to vector<256x1xi32>
    %10 = arith.cmpi slt, %6, %9 : vector<256x1xi32>
    %c0_i32_4 = arith.constant 0 : i32
    %11 = arith.cmpi slt, %4, %c0_i32_4 : i32
    %12 = vector.broadcast %11 : i1 to vector<256x1xi1>
    %13 = vector.broadcast %12 : vector<256x1xi1> to vector<256x1xi1>
    %14 = arith.xori %10, %13 : vector<256x1xi1>
    %15 = arith.andi %14, %8 : vector<256x1xi1>
    %16 = vector.broadcast %4 : i32 to vector<256x1xi32>
    %17 = arith.addi %6, %16 : vector<256x1xi32>
    %18 = arith.select %15, %17, %6 : vector<256x1xi1>, vector<256x1xi32>
    %c16_i32_5 = arith.constant 16 : i32
    %19 = vector.broadcast %c16_i32_5 : i32 to vector<256x1xi32>
    %20 = arith.cmpi sge, %2, %19 : vector<256x1xi32>
    %c240_i32 = arith.constant 240 : i32
    %21 = vector.broadcast %c240_i32 : i32 to vector<256x1xi32>
    %22 = arith.cmpi slt, %2, %21 : vector<256x1xi32>
    %c1_i32_6 = arith.constant 1 : i32
    %23 = vector.broadcast %c1_i32_6 : i32 to vector<256x1xi32>
    %24 = arith.cmpi sge, %18, %23 : vector<256x1xi32>
    %c15_i32 = arith.constant 15 : i32
    %25 = vector.broadcast %c15_i32 : i32 to vector<256x1xi32>
    %26 = arith.cmpi slt, %18, %25 : vector<256x1xi32>
    %cst = arith.constant 0.000000e+00 : f32
    %27 = vector.broadcast %cst : f32 to vector<256x48xf32>
    %28 = vector.extract_strided_slice %1 {offsets = [0, 0], sizes = [256, 16], strides = [1, 1]} : vector<256x64xf32> to vector<256x16xf32>
    %c16_i32_7 = arith.constant 16 : i32
    %29 = tpu.dynamic_rotate %28 by %c16_i32_7 dim 0 : vector<256x16xf32>, i32 -> vector<256x16xf32>
    %cst_8 = arith.constant 0.000000e+00 : f32
    %30 = vector.shape_cast %20 : vector<256x1xi1> to vector<256x1xi1>
    %31 = vector.broadcast %30 : vector<256x1xi1> to vector<256x16xi1>
    %32 = vector.broadcast %cst_8 : f32 to vector<256x16xf32>
    %33 = arith.select %31, %29, %32 : vector<256x16xi1>, vector<256x16xf32>
    %c240_i32_9 = arith.constant 240 : i32
    %34 = tpu.dynamic_rotate %28 by %c240_i32_9 dim 0 : vector<256x16xf32>, i32 -> vector<256x16xf32>
    %cst_10 = arith.constant 0.000000e+00 : f32
    %35 = vector.shape_cast %22 : vector<256x1xi1> to vector<256x1xi1>
    %36 = vector.broadcast %35 : vector<256x1xi1> to vector<256x16xi1>
    %37 = vector.broadcast %cst_10 : f32 to vector<256x16xf32>
    %38 = arith.select %36, %34, %37 : vector<256x16xi1>, vector<256x16xf32>
    %39 = tpu.concatenate %33, %28, %38 in 1 : vector<256x16xf32>, vector<256x16xf32>, vector<256x16xf32> -> vector<256x48xf32>
    %c1_i32_11 = arith.constant 1 : i32
    %40 = tpu.dynamic_rotate %39 by %c1_i32_11 dim 0 : vector<256x48xf32>, i32 -> vector<256x48xf32>
    %cst_12 = arith.constant 0.000000e+00 : f32
    %41 = vector.shape_cast %24 : vector<256x1xi1> to vector<256x1xi1>
    %42 = vector.broadcast %41 : vector<256x1xi1> to vector<256x48xi1>
    %43 = vector.broadcast %cst_12 : f32 to vector<256x48xf32>
    %44 = arith.select %42, %40, %43 : vector<256x48xi1>, vector<256x48xf32>
    %c255_i32 = arith.constant 255 : i32
    %45 = tpu.dynamic_rotate %39 by %c255_i32 dim 0 : vector<256x48xf32>, i32 -> vector<256x48xf32>
    %cst_13 = arith.constant 0.000000e+00 : f32
    %46 = vector.shape_cast %26 : vector<256x1xi1> to vector<256x1xi1>
    %47 = vector.broadcast %46 : vector<256x1xi1> to vector<256x48xi1>
    %48 = vector.broadcast %cst_13 : f32 to vector<256x48xf32>
    %49 = arith.select %47, %45, %48 : vector<256x48xi1>, vector<256x48xf32>
    %50 = tpu.concatenate %1, %44, %39, %49, %27 in 1 : vector<256x64xf32>, vector<256x48xf32>, vector<256x48xf32>, vector<256x48xf32>, vector<256x48xf32> -> vector<256x256xf32>
    %51 = arith.truncf %50 : vector<256x256xf32> to vector<256x256xbf16>
    %c0_14 = arith.constant 0 : index
    %c0_15 = arith.constant 0 : index
    %c0_16 = arith.constant 0 : index
    %52 = vector.load %arg2[%c0_14, %c0_15, %c0_16] : memref<2x256x128xbf16, #tpu.memory_space<vmem>>, vector<1x256x128xbf16>
    %53 = vector.shape_cast %52 : vector<1x256x128xbf16> to vector<256x128xbf16>
    %cst_17 = arith.constant dense<0.000000e+00> : vector<256x128xf32>
    %54 = tpu.matmul %51, %53, %cst_17 {dimension_numbers = #tpu.dot_dimension_numbers<[1], [0], [0], [1], [0, 0, 1, 1], [], []>} : vector<256x256xbf16>, vector<256x128xbf16>, vector<256x128xf32> -> vector<256x128xf32>
    %c0_18 = arith.constant 0 : index
    %c0_19 = arith.constant 0 : index
    %c0_20 = arith.constant 0 : index
    %55 = vector.load %arg3[%c0_18, %c0_19, %c0_20] : memref<2x1x128xf32, #tpu.memory_space<vmem>>, vector<1x1x128xf32>
    %56 = vector.shape_cast %55 : vector<1x1x128xf32> to vector<1x128xf32>
    %57 = vector.broadcast %56 : vector<1x128xf32> to vector<256x128xf32>
    %58 = arith.addf %54, %57 : vector<256x128xf32>
    %cst_21 = arith.constant 0.000000e+00 : f32
    %59 = vector.broadcast %cst_21 : f32 to vector<256x128xf32>
    %60 = arith.maximumf %58, %59 : vector<256x128xf32>
    %61 = arith.truncf %60 : vector<256x128xf32> to vector<256x128xbf16>
    %c0_22 = arith.constant 0 : index
    %c0_23 = arith.constant 0 : index
    %c0_24 = arith.constant 0 : index
    %62 = vector.load %arg4[%c0_22, %c0_23, %c0_24] : memref<2x128x64xbf16, #tpu.memory_space<vmem>>, vector<1x128x64xbf16>
    %63 = vector.shape_cast %62 : vector<1x128x64xbf16> to vector<128x64xbf16>
    %cst_25 = arith.constant dense<0.000000e+00> : vector<256x64xf32>
    %64 = tpu.matmul %61, %63, %cst_25 {dimension_numbers = #tpu.dot_dimension_numbers<[1], [0], [0], [1], [0, 0, 1, 1], [], []>} : vector<256x128xbf16>, vector<128x64xbf16>, vector<256x64xf32> -> vector<256x64xf32>
    %65 = arith.addf %1, %64 : vector<256x64xf32>
    %66 = vector.extract_strided_slice %65 {offsets = [0, 0], sizes = [256, 16], strides = [1, 1]} : vector<256x64xf32> to vector<256x16xf32>
    %c16_i32_26 = arith.constant 16 : i32
    %67 = tpu.dynamic_rotate %66 by %c16_i32_26 dim 0 : vector<256x16xf32>, i32 -> vector<256x16xf32>
    %cst_27 = arith.constant 0.000000e+00 : f32
    %68 = vector.shape_cast %20 : vector<256x1xi1> to vector<256x1xi1>
    %69 = vector.broadcast %68 : vector<256x1xi1> to vector<256x16xi1>
    %70 = vector.broadcast %cst_27 : f32 to vector<256x16xf32>
    %71 = arith.select %69, %67, %70 : vector<256x16xi1>, vector<256x16xf32>
    %c240_i32_28 = arith.constant 240 : i32
    %72 = tpu.dynamic_rotate %66 by %c240_i32_28 dim 0 : vector<256x16xf32>, i32 -> vector<256x16xf32>
    %cst_29 = arith.constant 0.000000e+00 : f32
    %73 = vector.shape_cast %22 : vector<256x1xi1> to vector<256x1xi1>
    %74 = vector.broadcast %73 : vector<256x1xi1> to vector<256x16xi1>
    %75 = vector.broadcast %cst_29 : f32 to vector<256x16xf32>
    %76 = arith.select %74, %72, %75 : vector<256x16xi1>, vector<256x16xf32>
    %77 = tpu.concatenate %71, %66, %76 in 1 : vector<256x16xf32>, vector<256x16xf32>, vector<256x16xf32> -> vector<256x48xf32>
    %c1_i32_30 = arith.constant 1 : i32
    %78 = tpu.dynamic_rotate %77 by %c1_i32_30 dim 0 : vector<256x48xf32>, i32 -> vector<256x48xf32>
    %cst_31 = arith.constant 0.000000e+00 : f32
    %79 = vector.shape_cast %24 : vector<256x1xi1> to vector<256x1xi1>
    %80 = vector.broadcast %79 : vector<256x1xi1> to vector<256x48xi1>
    %81 = vector.broadcast %cst_31 : f32 to vector<256x48xf32>
    %82 = arith.select %80, %78, %81 : vector<256x48xi1>, vector<256x48xf32>
    %c255_i32_32 = arith.constant 255 : i32
    %83 = tpu.dynamic_rotate %77 by %c255_i32_32 dim 0 : vector<256x48xf32>, i32 -> vector<256x48xf32>
    %cst_33 = arith.constant 0.000000e+00 : f32
    %84 = vector.shape_cast %26 : vector<256x1xi1> to vector<256x1xi1>
    %85 = vector.broadcast %84 : vector<256x1xi1> to vector<256x48xi1>
    %86 = vector.broadcast %cst_33 : f32 to vector<256x48xf32>
    %87 = arith.select %85, %83, %86 : vector<256x48xi1>, vector<256x48xf32>
    %88 = tpu.concatenate %65, %82, %77, %87, %27 in 1 : vector<256x64xf32>, vector<256x48xf32>, vector<256x48xf32>, vector<256x48xf32>, vector<256x48xf32> -> vector<256x256xf32>
    %89 = arith.truncf %88 : vector<256x256xf32> to vector<256x256xbf16>
    %c1 = arith.constant 1 : index
    %c0_34 = arith.constant 0 : index
    %c0_35 = arith.constant 0 : index
    %90 = vector.load %arg2[%c1, %c0_34, %c0_35] : memref<2x256x128xbf16, #tpu.memory_space<vmem>>, vector<1x256x128xbf16>
    %91 = vector.shape_cast %90 : vector<1x256x128xbf16> to vector<256x128xbf16>
    %cst_36 = arith.constant dense<0.000000e+00> : vector<256x128xf32>
    %92 = tpu.matmul %89, %91, %cst_36 {dimension_numbers = #tpu.dot_dimension_numbers<[1], [0], [0], [1], [0, 0, 1, 1], [], []>} : vector<256x256xbf16>, vector<256x128xbf16>, vector<256x128xf32> -> vector<256x128xf32>
    %c1_37 = arith.constant 1 : index
    %c0_38 = arith.constant 0 : index
    %c0_39 = arith.constant 0 : index
    %93 = vector.load %arg3[%c1_37, %c0_38, %c0_39] : memref<2x1x128xf32, #tpu.memory_space<vmem>>, vector<1x1x128xf32>
    %94 = vector.shape_cast %93 : vector<1x1x128xf32> to vector<1x128xf32>
    %95 = vector.broadcast %94 : vector<1x128xf32> to vector<256x128xf32>
    %96 = arith.addf %92, %95 : vector<256x128xf32>
    %cst_40 = arith.constant 0.000000e+00 : f32
    %97 = vector.broadcast %cst_40 : f32 to vector<256x128xf32>
    %98 = arith.maximumf %96, %97 : vector<256x128xf32>
    %99 = arith.truncf %98 : vector<256x128xf32> to vector<256x128xbf16>
    %c1_41 = arith.constant 1 : index
    %c0_42 = arith.constant 0 : index
    %c0_43 = arith.constant 0 : index
    %100 = vector.load %arg4[%c1_41, %c0_42, %c0_43] : memref<2x128x64xbf16, #tpu.memory_space<vmem>>, vector<1x128x64xbf16>
    %101 = vector.shape_cast %100 : vector<1x128x64xbf16> to vector<128x64xbf16>
    %cst_44 = arith.constant dense<0.000000e+00> : vector<256x64xf32>
    %102 = tpu.matmul %99, %101, %cst_44 {dimension_numbers = #tpu.dot_dimension_numbers<[1], [0], [0], [1], [0, 0, 1, 1], [], []>} : vector<256x128xbf16>, vector<128x64xbf16>, vector<256x64xf32> -> vector<256x64xf32>
    %103 = arith.addf %65, %102 : vector<256x64xf32>
    %c0_45 = arith.constant 0 : index
    %c0_46 = arith.constant 0 : index
    %c0_47 = arith.constant 0 : index
    %104 = vector.load %arg5[%c0_45, %c0_46, %c0_47] : memref<1x256x64xf32, #tpu.memory_space<vmem>>, vector<1x256x64xf32>
    %105 = vector.shape_cast %104 : vector<1x256x64xf32> to vector<256x64xf32>
    %106 = vector.shape_cast %103 : vector<256x64xf32> to vector<1x256x64xf32>
    tpu.vector_store %arg5[%c0_45, %c0_46, %c0_47], %106 {strides = array<i32>} : memref<1x256x64xf32, #tpu.memory_space<vmem>>, vector<1x256x64xf32>,
    return
  }
  func.func @transform_0(%arg0: i32) -> (i32, i32, i32) {
    %c0_i32 = arith.constant 0 : i32
    %c0_i32_0 = arith.constant 0 : i32
    %c0_i32_1 = arith.constant 0 : i32
    return %arg0, %c0_i32, %c0_i32_0 : i32, i32, i32
  }
  func.func @transform_1(%arg0: i32) -> (i32, i32, i32) {
    %c0_i32 = arith.constant 0 : i32
    %c0_i32_0 = arith.constant 0 : i32
    %c0_i32_1 = arith.constant 0 : i32
    %c0_i32_2 = arith.constant 0 : i32
    return %c0_i32, %c0_i32_0, %c0_i32_1 : i32, i32, i32
  }
  func.func @transform_2(%arg0: i32) -> (i32, i32, i32) {
    %c0_i32 = arith.constant 0 : i32
    %c0_i32_0 = arith.constant 0 : i32
    %c0_i32_1 = arith.constant 0 : i32
    %c0_i32_2 = arith.constant 0 : i32
    return %c0_i32, %c0_i32_0, %c0_i32_1 : i32, i32, i32
  }
  func.func @transform_3(%arg0: i32) -> (i32, i32, i32) {
    %c0_i32 = arith.constant 0 : i32
    %c0_i32_0 = arith.constant 0 : i32
    %c0_i32_1 = arith.constant 0 : i32
    %c0_i32_2 = arith.constant 0 : i32
    return %c0_i32, %c0_i32_0, %c0_i32_1 : i32, i32, i32
  }
  func.func @transform_4(%arg0: i32) -> (i32, i32, i32) {
    %c0_i32 = arith.constant 0 : i32
    %c0_i32_0 = arith.constant 0 : i32
    %c0_i32_1 = arith.constant 0 : i32
    return %arg0, %c0_i32, %c0_i32_0 : i32, i32, i32
  }
}

</mosaic_0001>

<llo_original>
// kernel: basic_stage.1
$region0: #{basic_stage.1}
  #allocation0 [shape = 'u32[]', space=smem, size = 0x4, offset = 0x4, fixed_abs, tag = 'smem constant byte address 0x4 - core index']
  #allocation1 [shape = 'u32[144,128]{1,0:T(1,128)}', space=vmem, size = 0x12000, scoped, tag = 'internal scratch']
  %s0 = inlined_call_operand.hbm [shape: f32[2,256,64], index: 0, kind: input, shape index: {}]
  %s1 = inlined_call_operand.hbm [shape: bf16[2,256,128], index: 1, kind: input, shape index: {}]
  %s2 = inlined_call_operand.vmem [shape: f32[2,1,128], index: 2, kind: input, shape index: {}]
  %s3 = inlined_call_operand.hbm [shape: bf16[2,128,64], index: 3, kind: input, shape index: {}]
  %s4 = inlined_call_operand.hbm [shape: f32[2,256,64], index: 4, kind: output, shape index: {}]
  %s5 = sld [smem:[#allocation0]]
  $region61: #{basic_stage.1} parent=0
    _
  %s7 = ssub.s32 1, %s5
  %s8 = scalar_select 0, %s7, %s5
  $region1: #{basic_stage.1} parent=0
    #allocation2 [shape = 'u8[262144]{0}', space=vmem, size = 0x40000, scoped, tag = 'input window, operand 0']
    #allocation3 [shape = 's32[2]{0}', space=sflag, size = 0x8, scoped, tag = 'scoped memory for basic_stage.1']
    #allocation4 [shape = 's32[2]{0}', space=sflag, size = 0x8, scoped, tag = 'scoped memory for basic_stage.1']
    #allocation5 [shape = 'u8[131072]{0}', space=vmem, size = 0x20000, scoped, tag = 'input window, operand 1, single buffered']
    #allocation6 [shape = 's32[1]{0}', space=sflag, size = 0x4, scoped, tag = 'scoped memory for basic_stage.1']
    #allocation7 [shape = 'u8[65536]{0}', space=vmem, size = 0x10000, scoped, tag = 'input window, operand 3, single buffered']
    #allocation8 [shape = 'u8[262144]{0}', space=vmem, size = 0x40000, scoped, tag = 'output window, operand 0']
    %9 = vsyncpa [#allocation3], 0
    %s10 = scalar_lea.sflag [#allocation3], 1
    %11 = vsyncpa %s10, 0
    %12 = vsyncpa [#allocation6], 0
    %13 = vsyncpa [#allocation4], 0
    %s14 = scalar_lea.sflag [#allocation4], 1
    %15 = vsyncpa %s14, 0
    loop: start=0, step=1, limit=4
    $region2: #{basic_stage.1} parent=1 // loop_pre_header
      _
    $region3: #{basic_stage.1} parent=1 // loop_header
      %s17 = sphi 0, %s21
      %p18 = scmp.ge.s32.totalorder %s17, 4
      %s27 = sphi 0, %s29
      %s30 = sphi 0, %s27
      %s31 = sphi 0, %s30
      %s47 = sphi 0, %s31
      %s51 = sphi 0, %s51
      %s53 = sphi 0, %s51
      %s54 = sphi 0, %s53
      %s68 = sphi 0, %s54
      %s72 = sphi 0, %s72
      %s74 = sphi 0, %s72
      %s75 = sphi 0, %s74
      %s89 = sphi 0, %s75
      %s93 = sphi 0, %s93
      %s95 = sphi 0, %s93
      %s96 = sphi 0, %s95
      %s110 = sphi 0, %s96
      %s116 = sphi 0, %s118
      %s119 = sphi 0, %s116
      %s120 = sphi 0, %s119
      %s136 = sphi 0, %s120
    $region4: #{basic_stage.1} parent=1 // loop_header_branch
      %20 = sbr.rel (%p18) target = $region8
    $region5: #{basic_stage.1} parent=1 // loop_body
      %s22 = ssub.s32 %s17, 1
      %s23 = ssub.s32 %s17, 2
      %s24 = sadd.s32 %s17, 1
      %s25 = ssub.s32 %s17, %s24
      %p26 = scmp.eq.s32.totalorder %s25, 0
      %s28 = sadd.s32 %s27, 1
      %s29 = scalar_select %p26, %s27, %s28
      %p32 = pneg %p26
      %p33 = scmp.eq.s32.totalorder %s17, 1
      %p34 = por %p32, %p33
      %p35 = scmp.ne.s32.totalorder %s27, %s30
      %p36 = scmp.eq.s32.totalorder %s17, 0
      %p37 = por %p35, %p36
      %p38 = scmp.ne.s32.totalorder %s27, %s30
      %p39 = scmp.eq.s32.totalorder %s22, 1
      %p40 = por %p38, %p39
      %p41 = scmp.ne.s32.totalorder %s30, %s31
      %p42 = scmp.eq.s32.totalorder %s22, 0
      %p43 = por %p41, %p42
      %p44 = scmp.ne.s32.totalorder %s30, %s31
      %p45 = scmp.eq.s32.totalorder %s23, 1
      %p46 = por %p44, %p45
      %p48 = scmp.ne.s32.totalorder %s31, %s47
      %p49 = scmp.eq.s32.totalorder %s23, 0
      %p50 = por %p48, %p49
      %s52 = sadd.s32 %s51, 1
      %p55 = scmp.eq.s32.totalorder %s17, 1
      %p56 = scmp.ne.s32.totalorder %s51, %s53
      %p57 = scmp.eq.s32.totalorder %s17, 0
      %p58 = por %p56, %p57
      %p59 = scmp.ne.s32.totalorder %s51, %s53
      %p60 = scmp.eq.s32.totalorder %s22, 1
      %p61 = por %p59, %p60
      %p62 = scmp.ne.s32.totalorder %s53, %s54
      %p63 = scmp.eq.s32.totalorder %s22, 0
      %p64 = por %p62, %p63
      %p65 = scmp.ne.s32.totalorder %s53, %s54
      %p66 = scmp.eq.s32.totalorder %s23, 1
      %p67 = por %p65, %p66
      %p69 = scmp.ne.s32.totalorder %s54, %s68
      %p70 = scmp.eq.s32.totalorder %s23, 0
      %p71 = por %p69, %p70
      %s73 = sadd.s32 %s72, 1
      %p76 = scmp.eq.s32.totalorder %s17, 1
      %p77 = scmp.ne.s32.totalorder %s72, %s74
      %p78 = scmp.eq.s32.totalorder %s17, 0
      %p79 = por %p77, %p78
      %p80 = scmp.ne.s32.totalorder %s72, %s74
      %p81 = scmp.eq.s32.totalorder %s22, 1
      %p82 = por %p80, %p81
      %p83 = scmp.ne.s32.totalorder %s74, %s75
      %p84 = scmp.eq.s32.totalorder %s22, 0
      %p85 = por %p83, %p84
      %p86 = scmp.ne.s32.totalorder %s74, %s75
      %p87 = scmp.eq.s32.totalorder %s23, 1
      %p88 = por %p86, %p87
      %p90 = scmp.ne.s32.totalorder %s75, %s89
      %p91 = scmp.eq.s32.totalorder %s23, 0
      %p92 = por %p90, %p91
      %s94 = sadd.s32 %s93, 1
      %p97 = scmp.eq.s32.totalorder %s17, 1
      %p98 = scmp.ne.s32.totalorder %s93, %s95
      %p99 = scmp.eq.s32.totalorder %s17, 0
      %p100 = por %p98, %p99
      %p101 = scmp.ne.s32.totalorder %s93, %s95
      %p102 = scmp.eq.s32.totalorder %s22, 1
      %p103 = por %p101, %p102
      %p104 = scmp.ne.s32.totalorder %s95, %s96
      %p105 = scmp.eq.s32.totalorder %s22, 0
      %p106 = por %p104, %p105
      %p107 = scmp.ne.s32.totalorder %s95, %s96
      %p108 = scmp.eq.s32.totalorder %s23, 1
      %p109 = por %p107, %p108
      %p111 = scmp.ne.s32.totalorder %s96, %s110
      %p112 = scmp.eq.s32.totalorder %s23, 0
      %p113 = por %p111, %p112
      %s114 = ssub.s32 %s17, %s24
      %p115 = scmp.eq.s32.totalorder %s114, 0
      %s117 = sadd.s32 %s116, 1
      %s118 = scalar_select %p115, %s116, %s117
      %p121 = pneg %p115
      %p122 = scmp.eq.s32.totalorder %s17, 1
      %p123 = por %p121, %p122
      %p124 = scmp.ne.s32.totalorder %s116, %s119
      %p125 = scmp.eq.s32.totalorder %s17, 0
      %p126 = por %p124, %p125
      %p127 = scmp.ne.s32.totalorder %s116, %s119
      %p128 = scmp.eq.s32.totalorder %s22, 1
      %p129 = por %p127, %p128
      %p130 = scmp.ne.s32.totalorder %s119, %s120
      %p131 = scmp.eq.s32.totalorder %s22, 0
      %p132 = por %p130, %p131
      %p133 = scmp.ne.s32.totalorder %s119, %s120
      %p134 = scmp.eq.s32.totalorder %s23, 1
      %p135 = por %p133, %p134
      %p137 = scmp.ne.s32.totalorder %s120, %s136
      %p138 = scmp.eq.s32.totalorder %s23, 0
      %p139 = por %p137, %p138
      %p140 = scmp.le.s32.totalorder 1, %s17
      %p141 = scmp.lt.s32.totalorder %s17, 3
      %p142 = pnand %p140, %p141
      %p143 = pneg %p142
      // Predicated region
      $region9: #{basic_stage.1} parent=5 // pred_check
        _
      $region10: #{basic_stage.1} parent=5 // pred_check_branch
        %145 = sbr.rel (%p142) target = $region12
      $region11: #{basic_stage.1} parent=5 // pred_region
        %s146 = ssub.s32 %s17, 1
        // Predicated region
        $region13: #{basic_stage.1} parent=11 // pred_check
          %p147 = pneg %p64
        $region14: #{basic_stage.1} parent=11 // pred_check_branch
          %149 = sbr.rel (%p147) target = $region16
        $region15: #{basic_stage.1} parent=11 // pred_region
          %s151 = ssub.s32 4096, 4096
          %152 = vsyncadd [#allocation6], %s151
          %s153 = sshll.u32 [#allocation5], 4
          %s154 = int_to_ptr.vmem [resolvable:$true] %s153
          %159 = dma.hbm_to_vmem [thread:$0]  %s1, 4096, %s154, [#allocation6], 64, 64, 4
        $region16: #{basic_stage.1} parent=11 // pred_fallthru
          _
        // Predicated region
        $region17: #{basic_stage.1} parent=11 // pred_check
          %p160 = pneg %p85
        $region18: #{basic_stage.1} parent=11 // pred_check_branch
          %162 = sbr.rel (%p160) target = $region20
        $region19: #{basic_stage.1} parent=11 // pred_region
          _
        $region20: #{basic_stage.1} parent=11 // pred_fallthru
          _
        // Predicated region
        $region21: #{basic_stage.1} parent=11 // pred_check
          %p163 = pneg %p106
        $region22: #{basic_stage.1} parent=11 // pred_check_branch
          %165 = sbr.rel (%p163) target = $region24
        $region23: #{basic_stage.1} parent=11 // pred_region
          %s167 = ssub.s32 2048, 2048
          %168 = vsyncadd [#allocation6], %s167
          %s169 = sshll.u32 [#allocation7], 4
          %s170 = int_to_ptr.vmem [resolvable:$true] %s169
          %175 = dma.hbm_to_vmem [thread:$0]  %s3, 2048, %s170, [#allocation6], 64, 64, 4
        $region24: #{basic_stage.1} parent=11 // pred_fallthru
          _
      $region12: #{basic_stage.1} parent=5 // pred_fallthru
        _
      %p176 = scmp.lt.s32.totalorder %s17, 2
      // Predicated region
      $region25: #{basic_stage.1} parent=5 // pred_check
        %p177 = pneg %p176
      $region26: #{basic_stage.1} parent=5 // pred_check_branch
        %179 = sbr.rel (%p177) target = $region28
      $region27: #{basic_stage.1} parent=5 // pred_region
        // Predicated region
        $region29: #{basic_stage.1} parent=27 // pred_check
          %p180 = pneg %p37
        $region30: #{basic_stage.1} parent=27 // pred_check_branch
          %182 = sbr.rel (%p180) target = $region32
        $region31: #{basic_stage.1} parent=27 // pred_region
          %s183 = sand.u32 %s27, 1
          %s184 = scalar_lea.sflag [#allocation3], %s183
          %s185 = sand.u32 %s27, 1
          %s186 = smul.addr %s185, 256
          %s187 = scalar_lea.vmem [#allocation2], %s186
          %s189 = ssub.s32 4096, 4096
          %190 = vsyncadd %s184, %s189
          %s191 = smul.addr %s17, 32
          %s192 = smul.addr %s191, 128
          %s193 = scalar_lea.hbm %s0, %s192
          %s194 = sshll.u32 %s187, 4
          %s195 = int_to_ptr.vmem [resolvable:$true] %s194
          %200 = dma.hbm_to_vmem [thread:$0]  %s193, 4096, %s195, %s184, 128, 128, 8
        $region32: #{basic_stage.1} parent=27 // pred_fallthru
          _
      $region28: #{basic_stage.1} parent=5 // pred_fallthru
        _
      %p201 = scmp.le.s32.totalorder 1, %s17
      %p202 = scmp.lt.s32.totalorder %s17, 3
      %p203 = pnand %p201, %p202
      %p204 = pneg %p203
      // Predicated region
      $region33: #{basic_stage.1} parent=5 // pred_check
        _
      $region34: #{basic_stage.1} parent=5 // pred_check_branch
        %206 = sbr.rel (%p203) target = $region36
      $region35: #{basic_stage.1} parent=5 // pred_region
        %s207 = ssub.s32 %s17, 1
        %s208 = sand.u32 %s30, 1
        %s209 = scalar_lea.sflag [#allocation3], %s208
        %s210 = sand.u32 %s30, 1
        %s211 = smul.addr %s210, 256
        %s212 = scalar_lea.vmem [#allocation2], %s211
        // Predicated region
        $region37: #{basic_stage.1} parent=35 // pred_check
          %p213 = pneg %p43
        $region38: #{basic_stage.1} parent=35 // pred_check_branch
          %215 = sbr.rel (%p213) target = $region40
        $region39: #{basic_stage.1} parent=35 // pred_region
          %216 = dma.done %s209, 4096
        $region40: #{basic_stage.1} parent=35 // pred_fallthru
          _
        // Predicated region
        $region41: #{basic_stage.1} parent=35 // pred_check
          %p217 = pneg %p64
        $region42: #{basic_stage.1} parent=35 // pred_check_branch
          %219 = sbr.rel (%p217) target = $region44
        $region43: #{basic_stage.1} parent=35 // pred_region
          %220 = dma.done [#allocation6], 4096
        $region44: #{basic_stage.1} parent=35 // pred_fallthru
          _
        // Predicated region
        $region45: #{basic_stage.1} parent=35 // pred_check
          %p221 = pneg %p106
        $region46: #{basic_stage.1} parent=35 // pred_check_branch
          %223 = sbr.rel (%p221) target = $region48
        $region47: #{basic_stage.1} parent=35 // pred_region
          %224 = dma.done [#allocation6], 2048
        $region48: #{basic_stage.1} parent=35 // pred_fallthru
          _
        %s225 = sand.u32 %s30, 1
        %s226 = scalar_lea.sflag [#allocation3], %s225
        %s227 = sand.u32 %s30, 1
        %s228 = smul.addr %s227, 256
        %s229 = scalar_lea.vmem [#allocation2], %s228
        %p230 = pneg %p43
        %p231 = pneg %p40
        %p232 = pneg %p64
        %p233 = pneg %p61
        %p234 = pneg %p85
        %p235 = pneg %p82
        %p236 = pneg %p106
        %p237 = pneg %p103
        %p238 = pneg %p132
        %p239 = pneg %p129
        %s240 = sand.u32 %s119, 1
        %s241 = scalar_lea.sflag [#allocation4], %s240
        %s242 = sand.u32 %s119, 1
        %s243 = smul.addr %s242, 256
        %s244 = scalar_lea.vmem [#allocation8], %s243
        %v246 = vld [vmem:[%s212] sm:$0xff]
        %v247 = vld [vmem:[%s212 + $0x8] sm:$0xff]
        %v248 = vld [vmem:[%s212 + $0x10] sm:$0xff]
        %v249 = vld [vmem:[%s212 + $0x18] sm:$0xff]
        %v250 = vld [vmem:[%s212 + $0x20] sm:$0xff]
        %v251 = vld [vmem:[%s212 + $0x28] sm:$0xff]
        %v252 = vld [vmem:[%s212 + $0x30] sm:$0xff]
        %v253 = vld [vmem:[%s212 + $0x38] sm:$0xff]
        %v254 = vld [vmem:[%s212 + $0x40] sm:$0xff]
        %v255 = vld [vmem:[%s212 + $0x48] sm:$0xff]
        %v256 = vld [vmem:[%s212 + $0x50] sm:$0xff]
        %v257 = vld [vmem:[%s212 + $0x58] sm:$0xff]
        %v258 = vld [vmem:[%s212 + $0x60] sm:$0xff]
        %v259 = vld [vmem:[%s212 + $0x68] sm:$0xff]
        %v260 = vld [vmem:[%s212 + $0x70] sm:$0xff]
        %v261 = vld [vmem:[%s212 + $0x78] sm:$0xff]
        %v262 = vld [vmem:[%s212 + $0x80] sm:$0xff]
        %v263 = vld [vmem:[%s212 + $0x88] sm:$0xff]
        %v264 = vld [vmem:[%s212 + $0x90] sm:$0xff]
        %v265 = vld [vmem:[%s212 + $0x98] sm:$0xff]
        %v266 = vld [vmem:[%s212 + $0xa0] sm:$0xff]
        %v267 = vld [vmem:[%s212 + $0xa8] sm:$0xff]
        %v268 = vld [vmem:[%s212 + $0xb0] sm:$0xff]
        %v269 = vld [vmem:[%s212 + $0xb8] sm:$0xff]
        %v270 = vld [vmem:[%s212 + $0xc0] sm:$0xff]
        %v271 = vld [vmem:[%s212 + $0xc8] sm:$0xff]
        %v272 = vld [vmem:[%s212 + $0xd0] sm:$0xff]
        %v273 = vld [vmem:[%s212 + $0xd8] sm:$0xff]
        %v274 = vld [vmem:[%s212 + $0xe0] sm:$0xff]
        %v275 = vld [vmem:[%s212 + $0xe8] sm:$0xff]
        %v276 = vld [vmem:[%s212 + $0xf0] sm:$0xff]
        %v277 = vld [vmem:[%s212 + $0xf8] sm:$0xff]
        %v278 = vlaneseq
        %v279 = vshrl.u32 %v278, 7
        %v280 = vadd.s32 %v279, 8
        %v281 = vadd.s32 %v279, 16
        %v282 = vadd.s32 %v279, 24
        %v283 = vadd.s32 %v279, 32
        %v284 = vadd.s32 %v279, 40
        %v285 = vadd.s32 %v279, 48
        %v286 = vadd.s32 %v279, 56
        %v287 = vadd.s32 %v279, 64
        %v288 = vadd.s32 %v279, 72
        %v289 = vadd.s32 %v279, 80
        %v290 = vadd.s32 %v279, 88
        %v291 = vadd.s32 %v279, 96
        %v292 = vadd.s32 %v279, 104
        %v293 = vadd.s32 %v279, 112
        %v294 = vadd.s32 %v279, 120
        %v295 = vadd.s32 %v279, 128
        %v296 = vadd.s32 %v279, 136
        %v297 = vadd.s32 %v279, 144
        %v298 = vadd.s32 %v279, 152
        %v299 = vadd.s32 %v279, 160
        %v300 = vadd.s32 %v279, 168
        %v301 = vadd.s32 %v279, 176
        %v302 = vadd.s32 %v279, 184
        %v303 = vadd.s32 %v279, 192
        %v304 = vadd.s32 %v279, 200
        %v305 = vadd.s32 %v279, 208
        %v306 = vadd.s32 %v279, 216
        %v307 = vadd.s32 %v279, 224
        %v308 = vadd.s32 %v279, 232
        %v309 = vadd.s32 %v279, 240
        %v310 = vadd.s32 %v279, 248
        %vm311 = vcmp.lt.s32.totalorder %v279, 0
        %v312 = vsub.s32 0, %v279
        %v313 = vsel %vm311, %v312, %v279
        %v314 = vshrl.u32 %v313, 4
        %v315 = vand.u32 %v313, 15
        %v316 = vsub.s32 0, %v315
        %v317 = vsel %vm311, %v316, %v315
        %vm318 = vcmp.lt.s32.totalorder %v280, 0
        %v319 = vsub.s32 0, %v280
        %v320 = vsel %vm318, %v319, %v280
        %v321 = vshrl.u32 %v320, 4
        %v322 = vand.u32 %v320, 15
        %v323 = vsub.s32 0, %v322
        %v324 = vsel %vm318, %v323, %v322
        %vm325 = vcmp.lt.s32.totalorder %v281, 0
        %v326 = vsub.s32 0, %v281
        %v327 = vsel %vm325, %v326, %v281
        %v328 = vshrl.u32 %v327, 4
        %v329 = vand.u32 %v327, 15
        %v330 = vsub.s32 0, %v329
        %v331 = vsel %vm325, %v330, %v329
        %vm332 = vcmp.lt.s32.totalorder %v282, 0
        %v333 = vsub.s32 0, %v282
        %v334 = vsel %vm332, %v333, %v282
        %v335 = vshrl.u32 %v334, 4
        %v336 = vand.u32 %v334, 15
        %v337 = vsub.s32 0, %v336
        %v338 = vsel %vm332, %v337, %v336
        %vm339 = vcmp.lt.s32.totalorder %v283, 0
        %v340 = vsub.s32 0, %v283
        %v341 = vsel %vm339, %v340, %v283
        %v342 = vshrl.u32 %v341, 4
        %v343 = vand.u32 %v341, 15
        %v344 = vsub.s32 0, %v343
        %v345 = vsel %vm339, %v344, %v343
        %vm346 = vcmp.lt.s32.totalorder %v284, 0
        %v347 = vsub.s32 0, %v284
        %v348 = vsel %vm346, %v347, %v284
        %v349 = vshrl.u32 %v348, 4
        %v350 = vand.u32 %v348, 15
        %v351 = vsub.s32 0, %v350
        %v352 = vsel %vm346, %v351, %v350
        %vm353 = vcmp.lt.s32.totalorder %v285, 0
        %v354 = vsub.s32 0, %v285
        %v355 = vsel %vm353, %v354, %v285
        %v356 = vshrl.u32 %v355, 4
        %v357 = vand.u32 %v355, 15
        %v358 = vsub.s32 0, %v357
        %v359 = vsel %vm353, %v358, %v357
        %vm360 = vcmp.lt.s32.totalorder %v286, 0
        %v361 = vsub.s32 0, %v286
        %v362 = vsel %vm360, %v361, %v286
        %v363 = vshrl.u32 %v362, 4
        %v364 = vand.u32 %v362, 15
        %v365 = vsub.s32 0, %v364
        %v366 = vsel %vm360, %v365, %v364
        %vm367 = vcmp.lt.s32.totalorder %v287, 0
        %v368 = vsub.s32 0, %v287
        %v369 = vsel %vm367, %v368, %v287
        %v370 = vshrl.u32 %v369, 4
        %v371 = vand.u32 %v369, 15
        %v372 = vsub.s32 0, %v371
        %v373 = vsel %vm367, %v372, %v371
        %vm374 = vcmp.lt.s32.totalorder %v288, 0
        %v375 = vsub.s32 0, %v288
        %v376 = vsel %vm374, %v375, %v288
        %v377 = vshrl.u32 %v376, 4
        %v378 = vand.u32 %v376, 15
        %v379 = vsub.s32 0, %v378
        %v380 = vsel %vm374, %v379, %v378
        %vm381 = vcmp.lt.s32.totalorder %v289, 0
        %v382 = vsub.s32 0, %v289
        %v383 = vsel %vm381, %v382, %v289
        %v384 = vshrl.u32 %v383, 4
        %v385 = vand.u32 %v383, 15
        %v386 = vsub.s32 0, %v385
        %v387 = vsel %vm381, %v386, %v385
        %vm388 = vcmp.lt.s32.totalorder %v290, 0
        %v389 = vsub.s32 0, %v290
        %v390 = vsel %vm388, %v389, %v290
        %v391 = vshrl.u32 %v390, 4
        %v392 = vand.u32 %v390, 15
        %v393 = vsub.s32 0, %v392
        %v394 = vsel %vm388, %v393, %v392
        %vm395 = vcmp.lt.s32.totalorder %v291, 0
        %v396 = vsub.s32 0, %v291
        %v397 = vsel %vm395, %v396, %v291
        %v398 = vshrl.u32 %v397, 4
        %v399 = vand.u32 %v397, 15
        %v400 = vsub.s32 0, %v399
        %v401 = vsel %vm395, %v400, %v399
        %vm402 = vcmp.lt.s32.totalorder %v292, 0
        %v403 = vsub.s32 0, %v292
        %v404 = vsel %vm402, %v403, %v292
        %v405 = vshrl.u32 %v404, 4
        %v406 = vand.u32 %v404, 15
        %v407 = vsub.s32 0, %v406
        %v408 = vsel %vm402, %v407, %v406
        %vm409 = vcmp.lt.s32.totalorder %v293, 0
        %v410 = vsub.s32 0, %v293
        %v411 = vsel %vm409, %v410, %v293
        %v412 = vshrl.u32 %v411, 4
        %v413 = vand.u32 %v411, 15
        %v414 = vsub.s32 0, %v413
        %v415 = vsel %vm409, %v414, %v413
        %vm416 = vcmp.lt.s32.totalorder %v294, 0
        %v417 = vsub.s32 0, %v294
        %v418 = vsel %vm416, %v417, %v294
        %v419 = vshrl.u32 %v418, 4
        %v420 = vand.u32 %v418, 15
        %v421 = vsub.s32 0, %v420
        %v422 = vsel %vm416, %v421, %v420
        %vm423 = vcmp.lt.s32.totalorder %v295, 0
        %v424 = vsub.s32 0, %v295
        %v425 = vsel %vm423, %v424, %v295
        %v426 = vshrl.u32 %v425, 4
        %v427 = vand.u32 %v425, 15
        %v428 = vsub.s32 0, %v427
        %v429 = vsel %vm423, %v428, %v427
        %vm430 = vcmp.lt.s32.totalorder %v296, 0
        %v431 = vsub.s32 0, %v296
        %v432 = vsel %vm430, %v431, %v296
        %v433 = vshrl.u32 %v432, 4
        %v434 = vand.u32 %v432, 15
        %v435 = vsub.s32 0, %v434
        %v436 = vsel %vm430, %v435, %v434
        %vm437 = vcmp.lt.s32.totalorder %v297, 0
        %v438 = vsub.s32 0, %v297
        %v439 = vsel %vm437, %v438, %v297
        %v440 = vshrl.u32 %v439, 4
        %v441 = vand.u32 %v439, 15
        %v442 = vsub.s32 0, %v441
        %v443 = vsel %vm437, %v442, %v441
        %vm444 = vcmp.lt.s32.totalorder %v298, 0
        %v445 = vsub.s32 0, %v298
        %v446 = vsel %vm444, %v445, %v298
        %v447 = vshrl.u32 %v446, 4
        %v448 = vand.u32 %v446, 15
        %v449 = vsub.s32 0, %v448
        %v450 = vsel %vm444, %v449, %v448
        %vm451 = vcmp.lt.s32.totalorder %v299, 0
        %v452 = vsub.s32 0, %v299
        %v453 = vsel %vm451, %v452, %v299
        %v454 = vshrl.u32 %v453, 4
        %v455 = vand.u32 %v453, 15
        %v456 = vsub.s32 0, %v455
        %v457 = vsel %vm451, %v456, %v455
        %vm458 = vcmp.lt.s32.totalorder %v300, 0
        %v459 = vsub.s32 0, %v300
        %v460 = vsel %vm458, %v459, %v300
        %v461 = vshrl.u32 %v460, 4
        %v462 = vand.u32 %v460, 15
        %v463 = vsub.s32 0, %v462
        %v464 = vsel %vm458, %v463, %v462
        %vm465 = vcmp.lt.s32.totalorder %v301, 0
        %v466 = vsub.s32 0, %v301
        %v467 = vsel %vm465, %v466, %v301
        %v468 = vshrl.u32 %v467, 4
        %v469 = vand.u32 %v467, 15
        %v470 = vsub.s32 0, %v469
        %v471 = vsel %vm465, %v470, %v469
        %vm472 = vcmp.lt.s32.totalorder %v302, 0
        %v473 = vsub.s32 0, %v302
        %v474 = vsel %vm472, %v473, %v302
        %v475 = vshrl.u32 %v474, 4
        %v476 = vand.u32 %v474, 15
        %v477 = vsub.s32 0, %v476
        %v478 = vsel %vm472, %v477, %v476
        %vm479 = vcmp.lt.s32.totalorder %v303, 0
        %v480 = vsub.s32 0, %v303
        %v481 = vsel %vm479, %v480, %v303
        %v482 = vshrl.u32 %v481, 4
        %v483 = vand.u32 %v481, 15
        %v484 = vsub.s32 0, %v483
        %v485 = vsel %vm479, %v484, %v483
        %vm486 = vcmp.lt.s32.totalorder %v304, 0
        %v487 = vsub.s32 0, %v304
        %v488 = vsel %vm486, %v487, %v304
        %v489 = vshrl.u32 %v488, 4
        %v490 = vand.u32 %v488, 15
        %v491 = vsub.s32 0, %v490
        %v492 = vsel %vm486, %v491, %v490
        %vm493 = vcmp.lt.s32.totalorder %v305, 0
        %v494 = vsub.s32 0, %v305
        %v495 = vsel %vm493, %v494, %v305
        %v496 = vshrl.u32 %v495, 4
        %v497 = vand.u32 %v495, 15
        %v498 = vsub.s32 0, %v497
        %v499 = vsel %vm493, %v498, %v497
        %vm500 = vcmp.lt.s32.totalorder %v306, 0
        %v501 = vsub.s32 0, %v306
        %v502 = vsel %vm500, %v501, %v306
        %v503 = vshrl.u32 %v502, 4
        %v504 = vand.u32 %v502, 15
        %v505 = vsub.s32 0, %v504
        %v506 = vsel %vm500, %v505, %v504
        %vm507 = vcmp.lt.s32.totalorder %v307, 0
        %v508 = vsub.s32 0, %v307
        %v509 = vsel %vm507, %v508, %v307
        %v510 = vshrl.u32 %v509, 4
        %v511 = vand.u32 %v509, 15
        %v512 = vsub.s32 0, %v511
        %v513 = vsel %vm507, %v512, %v511
        %vm514 = vcmp.lt.s32.totalorder %v308, 0
        %v515 = vsub.s32 0, %v308
        %v516 = vsel %vm514, %v515, %v308
        %v517 = vshrl.u32 %v516, 4
        %v518 = vand.u32 %v516, 15
        %v519 = vsub.s32 0, %v518
        %v520 = vsel %vm514, %v519, %v518
        %vm521 = vcmp.lt.s32.totalorder %v309, 0
        %v522 = vsub.s32 0, %v309
        %v523 = vsel %vm521, %v522, %v309
        %v524 = vshrl.u32 %v523, 4
        %v525 = vand.u32 %v523, 15
        %v526 = vsub.s32 0, %v525
        %v527 = vsel %vm521, %v526, %v525
        %vm528 = vcmp.lt.s32.totalorder %v310, 0
        %v529 = vsub.s32 0, %v310
        %v530 = vsel %vm528, %v529, %v310
        %v531 = vshrl.u32 %v530, 4
        %v532 = vand.u32 %v530, 15
        %v533 = vsub.s32 0, %v532
        %v534 = vsel %vm528, %v533, %v532
        %vm535 = vcmp.ne.s32.totalorder %v317, 0
        %vm536 = vcmp.ne.s32.totalorder %v324, 0
        %vm537 = vcmp.ne.s32.totalorder %v331, 0
        %vm538 = vcmp.ne.s32.totalorder %v338, 0
        %vm539 = vcmp.ne.s32.totalorder %v345, 0
        %vm540 = vcmp.ne.s32.totalorder %v352, 0
        %vm541 = vcmp.ne.s32.totalorder %v359, 0
        %vm542 = vcmp.ne.s32.totalorder %v366, 0
        %vm543 = vcmp.ne.s32.totalorder %v373, 0
        %vm544 = vcmp.ne.s32.totalorder %v380, 0
        %vm545 = vcmp.ne.s32.totalorder %v387, 0
        %vm546 = vcmp.ne.s32.totalorder %v394, 0
        %vm547 = vcmp.ne.s32.totalorder %v401, 0
        %vm548 = vcmp.ne.s32.totalorder %v408, 0
        %vm549 = vcmp.ne.s32.totalorder %v415, 0
        %vm550 = vcmp.ne.s32.totalorder %v422, 0
        %vm551 = vcmp.ne.s32.totalorder %v429, 0
        %vm552 = vcmp.ne.s32.totalorder %v436, 0
        %vm553 = vcmp.ne.s32.totalorder %v443, 0
        %vm554 = vcmp.ne.s32.totalorder %v450, 0
        %vm555 = vcmp.ne.s32.totalorder %v457, 0
        %vm556 = vcmp.ne.s32.totalorder %v464, 0
        %vm557 = vcmp.ne.s32.totalorder %v471, 0
        %vm558 = vcmp.ne.s32.totalorder %v478, 0
        %vm559 = vcmp.ne.s32.totalorder %v485, 0
        %vm560 = vcmp.ne.s32.totalorder %v492, 0
        %vm561 = vcmp.ne.s32.totalorder %v499, 0
        %vm562 = vcmp.ne.s32.totalorder %v506, 0
        %vm563 = vcmp.ne.s32.totalorder %v513, 0
        %vm564 = vcmp.ne.s32.totalorder %v520, 0
        %vm565 = vcmp.ne.s32.totalorder %v527, 0
        %vm566 = vcmp.ne.s32.totalorder %v534, 0
        %vm567 = vcmp.lt.s32.totalorder %v317, 0
        %vm568 = vcmp.lt.s32.totalorder %v324, 0
        %vm569 = vcmp.lt.s32.totalorder %v331, 0
        %vm570 = vcmp.lt.s32.totalorder %v338, 0
        %vm571 = vcmp.lt.s32.totalorder %v345, 0
        %vm572 = vcmp.lt.s32.totalorder %v352, 0
        %vm573 = vcmp.lt.s32.totalorder %v359, 0
        %vm574 = vcmp.lt.s32.totalorder %v366, 0
        %vm575 = vcmp.lt.s32.totalorder %v373, 0
        %vm576 = vcmp.lt.s32.totalorder %v380, 0
        %vm577 = vcmp.lt.s32.totalorder %v387, 0
        %vm578 = vcmp.lt.s32.totalorder %v394, 0
        %vm579 = vcmp.lt.s32.totalorder %v401, 0
        %vm580 = vcmp.lt.s32.totalorder %v408, 0
        %vm581 = vcmp.lt.s32.totalorder %v415, 0
        %vm582 = vcmp.lt.s32.totalorder %v422, 0
        %vm583 = vcmp.lt.s32.totalorder %v429, 0
        %vm584 = vcmp.lt.s32.totalorder %v436, 0
        %vm585 = vcmp.lt.s32.totalorder %v443, 0
        %vm586 = vcmp.lt.s32.totalorder %v450, 0
        %vm587 = vcmp.lt.s32.totalorder %v457, 0
        %vm588 = vcmp.lt.s32.totalorder %v464, 0
        %vm589 = vcmp.lt.s32.totalorder %v471, 0
        %vm590 = vcmp.lt.s32.totalorder %v478, 0
        %vm591 = vcmp.lt.s32.totalorder %v485, 0
        %vm592 = vcmp.lt.s32.totalorder %v492, 0
        %vm593 = vcmp.lt.s32.totalorder %v499, 0
        %vm594 = vcmp.lt.s32.totalorder %v506, 0
        %vm595 = vcmp.lt.s32.totalorder %v513, 0
        %vm596 = vcmp.lt.s32.totalorder %v520, 0
        %vm597 = vcmp.lt.s32.totalorder %v527, 0
        %vm598 = vcmp.lt.s32.totalorder %v534, 0
        %vm599 = vmand %vm567, %vm535
        %vm600 = vmand %vm568, %vm536
        %vm601 = vmand %vm569, %vm537
        %vm602 = vmand %vm570, %vm538
        %vm603 = vmand %vm571, %vm539
        %vm604 = vmand %vm572, %vm540
        %vm605 = vmand %vm573, %vm541
        %vm606 = vmand %vm574, %vm542
        %vm607 = vmand %vm575, %vm543
        %vm608 = vmand %vm576, %vm544
        %vm609 = vmand %vm577, %vm545
        %vm610 = vmand %vm578, %vm546
        %vm611 = vmand %vm579, %vm547
        %vm612 = vmand %vm580, %vm548
        %vm613 = vmand %vm581, %vm549
        %vm614 = vmand %vm582, %vm550
        %vm615 = vmand %vm583, %vm551
        %vm616 = vmand %vm584, %vm552
        %vm617 = vmand %vm585, %vm553
        %vm618 = vmand %vm586, %vm554
        %vm619 = vmand %vm587, %vm555
        %vm620 = vmand %vm588, %vm556
        %vm621 = vmand %vm589, %vm557
        %vm622 = vmand %vm590, %vm558
        %vm623 = vmand %vm591, %vm559
        %vm624 = vmand %vm592, %vm560
        %vm625 = vmand %vm593, %vm561
        %vm626 = vmand %vm594, %vm562
        %vm627 = vmand %vm595, %vm563
        %vm628 = vmand %vm596, %vm564
        %vm629 = vmand %vm597, %vm565
        %vm630 = vmand %vm598, %vm566
        %v631 = vadd.s32 %v317, 16
        %v632 = vadd.s32 %v324, 16
        %v633 = vadd.s32 %v331, 16
        %v634 = vadd.s32 %v338, 16
        %v635 = vadd.s32 %v345, 16
        %v636 = vadd.s32 %v352, 16
        %v637 = vadd.s32 %v359, 16
        %v638 = vadd.s32 %v366, 16
        %v639 = vadd.s32 %v373, 16
        %v640 = vadd.s32 %v380, 16
        %v641 = vadd.s32 %v387, 16
        %v642 = vadd.s32 %v394, 16
        %v643 = vadd.s32 %v401, 16
        %v644 = vadd.s32 %v408, 16
        %v645 = vadd.s32 %v415, 16
        %v646 = vadd.s32 %v422, 16
        %v647 = vadd.s32 %v429, 16
        %v648 = vadd.s32 %v436, 16
        %v649 = vadd.s32 %v443, 16
        %v650 = vadd.s32 %v450, 16
        %v651 = vadd.s32 %v457, 16
        %v652 = vadd.s32 %v464, 16
        %v653 = vadd.s32 %v471, 16
        %v654 = vadd.s32 %v478, 16
        %v655 = vadd.s32 %v485, 16
        %v656 = vadd.s32 %v492, 16
        %v657 = vadd.s32 %v499, 16
        %v658 = vadd.s32 %v506, 16
        %v659 = vadd.s32 %v513, 16
        %v660 = vadd.s32 %v520, 16
        %v661 = vadd.s32 %v527, 16
        %v662 = vadd.s32 %v534, 16
        %v663 = vsel %vm599, %v631, %v317
        %v664 = vsel %vm600, %v632, %v324
        %v665 = vsel %vm601, %v633, %v331
        %v666 = vsel %vm602, %v634, %v338
        %v667 = vsel %vm603, %v635, %v345
        %v668 = vsel %vm604, %v636, %v352
        %v669 = vsel %vm605, %v637, %v359
        %v670 = vsel %vm606, %v638, %v366
        %v671 = vsel %vm607, %v639, %v373
        %v672 = vsel %vm608, %v640, %v380
        %v673 = vsel %vm609, %v641, %v387
        %v674 = vsel %vm610, %v642, %v394
        %v675 = vsel %vm611, %v643, %v401
        %v676 = vsel %vm612, %v644, %v408
        %v677 = vsel %vm613, %v645, %v415
        %v678 = vsel %vm614, %v646, %v422
        %v679 = vsel %vm615, %v647, %v429
        %v680 = vsel %vm616, %v648, %v436
        %v681 = vsel %vm617, %v649, %v443
        %v682 = vsel %vm618, %v650, %v450
        %v683 = vsel %vm619, %v651, %v457
        %v684 = vsel %vm620, %v652, %v464
        %v685 = vsel %vm621, %v653, %v471
        %v686 = vsel %vm622, %v654, %v478
        %v687 = vsel %vm623, %v655, %v485
        %v688 = vsel %vm624, %v656, %v492
        %v689 = vsel %vm625, %v657, %v499
        %v690 = vsel %vm626, %v658, %v506
        %v691 = vsel %vm627, %v659, %v513
        %v692 = vsel %vm628, %v660, %v520
        %v693 = vsel %vm629, %v661, %v527
        %v694 = vsel %vm630, %v662, %v534
        %vm695 = vcmp.ge.s32.totalorder %v279, 16
        %vm696 = vcmp.ge.s32.totalorder %v280, 16
        %vm697 = vcmp.ge.s32.totalorder %v281, 16
        %vm698 = vcmp.ge.s32.totalorder %v282, 16
        %vm699 = vcmp.ge.s32.totalorder %v283, 16
        %vm700 = vcmp.ge.s32.totalorder %v284, 16
        %vm701 = vcmp.ge.s32.totalorder %v285, 16
        %vm702 = vcmp.ge.s32.totalorder %v286, 16
        %vm703 = vcmp.ge.s32.totalorder %v287, 16
        %vm704 = vcmp.ge.s32.totalorder %v288, 16
        %vm705 = vcmp.ge.s32.totalorder %v289, 16
        %vm706 = vcmp.ge.s32.totalorder %v290, 16
        %vm707 = vcmp.ge.s32.totalorder %v291, 16
        %vm708 = vcmp.ge.s32.totalorder %v292, 16
        %vm709 = vcmp.ge.s32.totalorder %v293, 16
        %vm710 = vcmp.ge.s32.totalorder %v294, 16
        %vm711 = vcmp.ge.s32.totalorder %v295, 16
        %vm712 = vcmp.ge.s32.totalorder %v296, 16
        %vm713 = vcmp.ge.s32.totalorder %v297, 16
        %vm714 = vcmp.ge.s32.totalorder %v298, 16
        %vm715 = vcmp.ge.s32.totalorder %v299, 16
        %vm716 = vcmp.ge.s32.totalorder %v300, 16
        %vm717 = vcmp.ge.s32.totalorder %v301, 16
        %vm718 = vcmp.ge.s32.totalorder %v302, 16
        %vm719 = vcmp.ge.s32.totalorder %v303, 16
        %vm720 = vcmp.ge.s32.totalorder %v304, 16
        %vm721 = vcmp.ge.s32.totalorder %v305, 16
        %vm722 = vcmp.ge.s32.totalorder %v306, 16
        %vm723 = vcmp.ge.s32.totalorder %v307, 16
        %vm724 = vcmp.ge.s32.totalorder %v308, 16
        %vm725 = vcmp.ge.s32.totalorder %v309, 16
        %vm726 = vcmp.ge.s32.totalorder %v310, 16
        %vm727 = vcmp.lt.s32.totalorder %v279, 240
        %vm728 = vcmp.lt.s32.totalorder %v280, 240
        %vm729 = vcmp.lt.s32.totalorder %v281, 240
        %vm730 = vcmp.lt.s32.totalorder %v282, 240
        %vm731 = vcmp.lt.s32.totalorder %v283, 240
        %vm732 = vcmp.lt.s32.totalorder %v284, 240
        %vm733 = vcmp.lt.s32.totalorder %v285, 240
        %vm734 = vcmp.lt.s32.totalorder %v286, 240
        %vm735 = vcmp.lt.s32.totalorder %v287, 240
        %vm736 = vcmp.lt.s32.totalorder %v288, 240
        %vm737 = vcmp.lt.s32.totalorder %v289, 240
        %vm738 = vcmp.lt.s32.totalorder %v290, 240
        %vm739 = vcmp.lt.s32.totalorder %v291, 240
        %vm740 = vcmp.lt.s32.totalorder %v292, 240
        %vm741 = vcmp.lt.s32.totalorder %v293, 240
        %vm742 = vcmp.lt.s32.totalorder %v294, 240
        %vm743 = vcmp.lt.s32.totalorder %v295, 240
        %vm744 = vcmp.lt.s32.totalorder %v296, 240
        %vm745 = vcmp.lt.s32.totalorder %v297, 240
        %vm746 = vcmp.lt.s32.totalorder %v298, 240
        %vm747 = vcmp.lt.s32.totalorder %v299, 240
        %vm748 = vcmp.lt.s32.totalorder %v300, 240
        %vm749 = vcmp.lt.s32.totalorder %v301, 240
        %vm750 = vcmp.lt.s32.totalorder %v302, 240
        %vm751 = vcmp.lt.s32.totalorder %v303, 240
        %vm752 = vcmp.lt.s32.totalorder %v304, 240
        %vm753 = vcmp.lt.s32.totalorder %v305, 240
        %vm754 = vcmp.lt.s32.totalorder %v306, 240
        %vm755 = vcmp.lt.s32.totalorder %v307, 240
        %vm756 = vcmp.lt.s32.totalorder %v308, 240
        %vm757 = vcmp.lt.s32.totalorder %v309, 240
        %vm758 = vcmp.lt.s32.totalorder %v310, 240
        %vm759 = vcmp.ge.s32.totalorder %v663, 1
        %vm760 = vcmp.ge.s32.totalorder %v664, 1
        %vm761 = vcmp.ge.s32.totalorder %v665, 1
        %vm762 = vcmp.ge.s32.totalorder %v666, 1
        %vm763 = vcmp.ge.s32.totalorder %v667, 1
        %vm764 = vcmp.ge.s32.totalorder %v668, 1
        %vm765 = vcmp.ge.s32.totalorder %v669, 1
        %vm766 = vcmp.ge.s32.totalorder %v670, 1
        %vm767 = vcmp.ge.s32.totalorder %v671, 1
        %vm768 = vcmp.ge.s32.totalorder %v672, 1
        %vm769 = vcmp.ge.s32.totalorder %v673, 1
        %vm770 = vcmp.ge.s32.totalorder %v674, 1
        %vm771 = vcmp.ge.s32.totalorder %v675, 1
        %vm772 = vcmp.ge.s32.totalorder %v676, 1
        %vm773 = vcmp.ge.s32.totalorder %v677, 1
        %vm774 = vcmp.ge.s32.totalorder %v678, 1
        %vm775 = vcmp.ge.s32.totalorder %v679, 1
        %vm776 = vcmp.ge.s32.totalorder %v680, 1
        %vm777 = vcmp.ge.s32.totalorder %v681, 1
        %vm778 = vcmp.ge.s32.totalorder %v682, 1
        %vm779 = vcmp.ge.s32.totalorder %v683, 1
        %vm780 = vcmp.ge.s32.totalorder %v684, 1
        %vm781 = vcmp.ge.s32.totalorder %v685, 1
        %vm782 = vcmp.ge.s32.totalorder %v686, 1
        %vm783 = vcmp.ge.s32.totalorder %v687, 1
        %vm784 = vcmp.ge.s32.totalorder %v688, 1
        %vm785 = vcmp.ge.s32.totalorder %v689, 1
        %vm786 = vcmp.ge.s32.totalorder %v690, 1
        %vm787 = vcmp.ge.s32.totalorder %v691, 1
        %vm788 = vcmp.ge.s32.totalorder %v692, 1
        %vm789 = vcmp.ge.s32.totalorder %v693, 1
        %vm790 = vcmp.ge.s32.totalorder %v694, 1
        %vm791 = vcmp.lt.s32.totalorder %v663, 15
        %vm792 = vcmp.lt.s32.totalorder %v664, 15
        %vm793 = vcmp.lt.s32.totalorder %v665, 15
        %vm794 = vcmp.lt.s32.totalorder %v666, 15
        %vm795 = vcmp.lt.s32.totalorder %v667, 15
        %vm796 = vcmp.lt.s32.totalorder %v668, 15
        %vm797 = vcmp.lt.s32.totalorder %v669, 15
        %vm798 = vcmp.lt.s32.totalorder %v670, 15
        %vm799 = vcmp.lt.s32.totalorder %v671, 15
        %vm800 = vcmp.lt.s32.totalorder %v672, 15
        %vm801 = vcmp.lt.s32.totalorder %v673, 15
        %vm802 = vcmp.lt.s32.totalorder %v674, 15
        %vm803 = vcmp.lt.s32.totalorder %v675, 15
        %vm804 = vcmp.lt.s32.totalorder %v676, 15
        %vm805 = vcmp.lt.s32.totalorder %v677, 15
        %vm806 = vcmp.lt.s32.totalorder %v678, 15
        %vm807 = vcmp.lt.s32.totalorder %v679, 15
        %vm808 = vcmp.lt.s32.totalorder %v680, 15
        %vm809 = vcmp.lt.s32.totalorder %v681, 15
        %vm810 = vcmp.lt.s32.totalorder %v682, 15
        %vm811 = vcmp.lt.s32.totalorder %v683, 15
        %vm812 = vcmp.lt.s32.totalorder %v684, 15
        %vm813 = vcmp.lt.s32.totalorder %v685, 15
        %vm814 = vcmp.lt.s32.totalorder %v686, 15
        %vm815 = vcmp.lt.s32.totalorder %v687, 15
        %vm816 = vcmp.lt.s32.totalorder %v688, 15
        %vm817 = vcmp.lt.s32.totalorder %v689, 15
        %vm818 = vcmp.lt.s32.totalorder %v690, 15
        %vm819 = vcmp.lt.s32.totalorder %v691, 15
        %vm820 = vcmp.lt.s32.totalorder %v692, 15
        %vm821 = vcmp.lt.s32.totalorder %v693, 15
        %vm822 = vcmp.lt.s32.totalorder %v694, 15
        %v823 = vsel %vm695, 1, 0
        %v824 = vsel %vm696, 1, 0
        %v825 = vsel %vm697, 1, 0
        %v826 = vsel %vm698, 1, 0
        %v827 = vsel %vm699, 1, 0
        %v828 = vsel %vm700, 1, 0
        %v829 = vsel %vm701, 1, 0
        %v830 = vsel %vm702, 1, 0
        %v831 = vsel %vm703, 1, 0
        %v832 = vsel %vm704, 1, 0
        %v833 = vsel %vm705, 1, 0
        %v834 = vsel %vm706, 1, 0
        %v835 = vsel %vm707, 1, 0
        %v836 = vsel %vm708, 1, 0
        %v837 = vsel %vm709, 1, 0
        %v838 = vsel %vm710, 1, 0
        %v839 = vsel %vm711, 1, 0
        %v840 = vsel %vm712, 1, 0
        %v841 = vsel %vm713, 1, 0
        %v842 = vsel %vm714, 1, 0
        %v843 = vsel %vm715, 1, 0
        %v844 = vsel %vm716, 1, 0
        %v845 = vsel %vm717, 1, 0
        %v846 = vsel %vm718, 1, 0
        %v847 = vsel %vm719, 1, 0
        %v848 = vsel %vm720, 1, 0
        %v849 = vsel %vm721, 1, 0
        %v850 = vsel %vm722, 1, 0
        %v851 = vsel %vm723, 1, 0
        %v852 = vsel %vm724, 1, 0
        %v853 = vsel %vm725, 1, 0
        %v854 = vsel %vm726, 1, 0
        %vm855 = vcmp.eq.s32.totalorder %v823, 1
        %vm856 = vcmp.eq.s32.totalorder %v824, 1
        %vm857 = vcmp.eq.s32.totalorder %v825, 1
        %vm858 = vcmp.eq.s32.totalorder %v826, 1
        %vm859 = vcmp.eq.s32.totalorder %v827, 1
        %vm860 = vcmp.eq.s32.totalorder %v828, 1
        %vm861 = vcmp.eq.s32.totalorder %v829, 1
        %vm862 = vcmp.eq.s32.totalorder %v830, 1
        %vm863 = vcmp.eq.s32.totalorder %v831, 1
        %vm864 = vcmp.eq.s32.totalorder %v832, 1
        %vm865 = vcmp.eq.s32.totalorder %v833, 1
        %vm866 = vcmp.eq.s32.totalorder %v834, 1
        %vm867 = vcmp.eq.s32.totalorder %v835, 1
        %vm868 = vcmp.eq.s32.totalorder %v836, 1
        %vm869 = vcmp.eq.s32.totalorder %v837, 1
        %vm870 = vcmp.eq.s32.totalorder %v838, 1
        %vm871 = vcmp.eq.s32.totalorder %v839, 1
        %vm872 = vcmp.eq.s32.totalorder %v840, 1
        %vm873 = vcmp.eq.s32.totalorder %v841, 1
        %vm874 = vcmp.eq.s32.totalorder %v842, 1
        %vm875 = vcmp.eq.s32.totalorder %v843, 1
        %vm876 = vcmp.eq.s32.totalorder %v844, 1
        %vm877 = vcmp.eq.s32.totalorder %v845, 1
        %vm878 = vcmp.eq.s32.totalorder %v846, 1
        %vm879 = vcmp.eq.s32.totalorder %v847, 1
        %vm880 = vcmp.eq.s32.totalorder %v848, 1
        %vm881 = vcmp.eq.s32.totalorder %v849, 1
        %vm882 = vcmp.eq.s32.totalorder %v850, 1
        %vm883 = vcmp.eq.s32.totalorder %v851, 1
        %vm884 = vcmp.eq.s32.totalorder %v852, 1
        %vm885 = vcmp.eq.s32.totalorder %v853, 1
        %vm886 = vcmp.eq.s32.totalorder %v854, 1
        %v887 = vsel %vm855, %v276, 0.0
        %v888 = vsel %vm856, %v277, 0.0
        %v889 = vsel %vm857, %v246, 0.0
        %v890 = vsel %vm858, %v247, 0.0
        %v891 = vsel %vm859, %v248, 0.0
        %v892 = vsel %vm860, %v249, 0.0
        %v893 = vsel %vm861, %v250, 0.0
        %v894 = vsel %vm862, %v251, 0.0
        %v895 = vsel %vm863, %v252, 0.0
        %v896 = vsel %vm864, %v253, 0.0
        %v897 = vsel %vm865, %v254, 0.0
        %v898 = vsel %vm866, %v255, 0.0
        %v899 = vsel %vm867, %v256, 0.0
        %v900 = vsel %vm868, %v257, 0.0
        %v901 = vsel %vm869, %v258, 0.0
        %v902 = vsel %vm870, %v259, 0.0
        %v903 = vsel %vm871, %v260, 0.0
        %v904 = vsel %vm872, %v261, 0.0
        %v905 = vsel %vm873, %v262, 0.0
        %v906 = vsel %vm874, %v263, 0.0
        %v907 = vsel %vm875, %v264, 0.0
        %v908 = vsel %vm876, %v265, 0.0
        %v909 = vsel %vm877, %v266, 0.0
        %v910 = vsel %vm878, %v267, 0.0
        %v911 = vsel %vm879, %v268, 0.0
        %v912 = vsel %vm880, %v269, 0.0
        %v913 = vsel %vm881, %v270, 0.0
        %v914 = vsel %vm882, %v271, 0.0
        %v915 = vsel %vm883, %v272, 0.0
        %v916 = vsel %vm884, %v273, 0.0
        %v917 = vsel %vm885, %v274, 0.0
        %v918 = vsel %vm886, %v275, 0.0
        %v919 = vsel %vm727, 1, 0
        %v920 = vsel %vm728, 1, 0
        %v921 = vsel %vm729, 1, 0
        %v922 = vsel %vm730, 1, 0
        %v923 = vsel %vm731, 1, 0
        %v924 = vsel %vm732, 1, 0
        %v925 = vsel %vm733, 1, 0
        %v926 = vsel %vm734, 1, 0
        %v927 = vsel %vm735, 1, 0
        %v928 = vsel %vm736, 1, 0
        %v929 = vsel %vm737, 1, 0
        %v930 = vsel %vm738, 1, 0
        %v931 = vsel %vm739, 1, 0
        %v932 = vsel %vm740, 1, 0
        %v933 = vsel %vm741, 1, 0
        %v934 = vsel %vm742, 1, 0
        %v935 = vsel %vm743, 1, 0
        %v936 = vsel %vm744, 1, 0
        %v937 = vsel %vm745, 1, 0
        %v938 = vsel %vm746, 1, 0
        %v939 = vsel %vm747, 1, 0
        %v940 = vsel %vm748, 1, 0
        %v941 = vsel %vm749, 1, 0
        %v942 = vsel %vm750, 1, 0
        %v943 = vsel %vm751, 1, 0
        %v944 = vsel %vm752, 1, 0
        %v945 = vsel %vm753, 1, 0
        %v946 = vsel %vm754, 1, 0
        %v947 = vsel %vm755, 1, 0
        %v948 = vsel %vm756, 1, 0
        %v949 = vsel %vm757, 1, 0
        %v950 = vsel %vm758, 1, 0
        %vm951 = vcmp.eq.s32.totalorder %v919, 1
        %vm952 = vcmp.eq.s32.totalorder %v920, 1
        %vm953 = vcmp.eq.s32.totalorder %v921, 1
        %vm954 = vcmp.eq.s32.totalorder %v922, 1
        %vm955 = vcmp.eq.s32.totalorder %v923, 1
        %vm956 = vcmp.eq.s32.totalorder %v924, 1
        %vm957 = vcmp.eq.s32.totalorder %v925, 1
        %vm958 = vcmp.eq.s32.totalorder %v926, 1
        %vm959 = vcmp.eq.s32.totalorder %v927, 1
        %vm960 = vcmp.eq.s32.totalorder %v928, 1
        %vm961 = vcmp.eq.s32.totalorder %v929, 1
        %vm962 = vcmp.eq.s32.totalorder %v930, 1
        %vm963 = vcmp.eq.s32.totalorder %v931, 1
        %vm964 = vcmp.eq.s32.totalorder %v932, 1
        %vm965 = vcmp.eq.s32.totalorder %v933, 1
        %vm966 = vcmp.eq.s32.totalorder %v934, 1
        %vm967 = vcmp.eq.s32.totalorder %v935, 1
        %vm968 = vcmp.eq.s32.totalorder %v936, 1
        %vm969 = vcmp.eq.s32.totalorder %v937, 1
        %vm970 = vcmp.eq.s32.totalorder %v938, 1
        %vm971 = vcmp.eq.s32.totalorder %v939, 1
        %vm972 = vcmp.eq.s32.totalorder %v940, 1
        %vm973 = vcmp.eq.s32.totalorder %v941, 1
        %vm974 = vcmp.eq.s32.totalorder %v942, 1
        %vm975 = vcmp.eq.s32.totalorder %v943, 1
        %vm976 = vcmp.eq.s32.totalorder %v944, 1
        %vm977 = vcmp.eq.s32.totalorder %v945, 1
        %vm978 = vcmp.eq.s32.totalorder %v946, 1
        %vm979 = vcmp.eq.s32.totalorder %v947, 1
        %vm980 = vcmp.eq.s32.totalorder %v948, 1
        %vm981 = vcmp.eq.s32.totalorder %v949, 1
        %vm982 = vcmp.eq.s32.totalorder %v950, 1
        %v983 = vsel %vm951, %v248, 0.0
        %v984 = vsel %vm952, %v249, 0.0
        %v985 = vsel %vm953, %v250, 0.0
        %v986 = vsel %vm954, %v251, 0.0
        %v987 = vsel %vm955, %v252, 0.0
        %v988 = vsel %vm956, %v253, 0.0
        %v989 = vsel %vm957, %v254, 0.0
        %v990 = vsel %vm958, %v255, 0.0
        %v991 = vsel %vm959, %v256, 0.0
        %v992 = vsel %vm960, %v257, 0.0
        %v993 = vsel %vm961, %v258, 0.0
        %v994 = vsel %vm962, %v259, 0.0
        %v995 = vsel %vm963, %v260, 0.0
        %v996 = vsel %vm964, %v261, 0.0
        %v997 = vsel %vm965, %v262, 0.0
        %v998 = vsel %vm966, %v263, 0.0
        %v999 = vsel %vm967, %v264, 0.0
        %v1000 = vsel %vm968, %v265, 0.0
        %v1001 = vsel %vm969, %v266, 0.0
        %v1002 = vsel %vm970, %v267, 0.0
        %v1003 = vsel %vm971, %v268, 0.0
        %v1004 = vsel %vm972, %v269, 0.0
        %v1005 = vsel %vm973, %v270, 0.0
        %v1006 = vsel %vm974, %v271, 0.0
        %v1007 = vsel %vm975, %v272, 0.0
        %v1008 = vsel %vm976, %v273, 0.0
        %v1009 = vsel %vm977, %v274, 0.0
        %v1010 = vsel %vm978, %v275, 0.0
        %v1011 = vsel %vm979, %v276, 0.0
        %v1012 = vsel %vm980, %v277, 0.0
        %v1013 = vsel %vm981, %v246, 0.0
        %v1014 = vsel %vm982, %v247, 0.0
        %1047 = vrot.lane.b32.xlu0 %v246, 16
        %v1048 = vpop.permute.xlu0 %1047
        %1049 = vrot.lane.b32.xlu0 %v247, 16
        %v1050 = vpop.permute.xlu0 %1049
        %1051 = vrot.lane.b32.xlu0 %v248, 16
        %v1052 = vpop.permute.xlu0 %1051
        %1053 = vrot.lane.b32.xlu0 %v249, 16
        %v1054 = vpop.permute.xlu0 %1053
        %1055 = vrot.lane.b32.xlu0 %v250, 16
        %v1056 = vpop.permute.xlu0 %1055
        %1057 = vrot.lane.b32.xlu0 %v251, 16
        %v1058 = vpop.permute.xlu0 %1057
        %1059 = vrot.lane.b32.xlu0 %v252, 16
        %v1060 = vpop.permute.xlu0 %1059
        %1061 = vrot.lane.b32.xlu0 %v253, 16
        %v1062 = vpop.permute.xlu0 %1061
        %1063 = vrot.lane.b32.xlu0 %v254, 16
        %v1064 = vpop.permute.xlu0 %1063
        %1065 = vrot.lane.b32.xlu0 %v255, 16
        %v1066 = vpop.permute.xlu0 %1065
        %1067 = vrot.lane.b32.xlu0 %v256, 16
        %v1068 = vpop.permute.xlu0 %1067
        %1069 = vrot.lane.b32.xlu0 %v257, 16
        %v1070 = vpop.permute.xlu0 %1069
        %1071 = vrot.lane.b32.xlu0 %v258, 16
        %v1072 = vpop.permute.xlu0 %1071
        %1073 = vrot.lane.b32.xlu0 %v259, 16
        %v1074 = vpop.permute.xlu0 %1073
        %1075 = vrot.lane.b32.xlu0 %v260, 16
        %v1076 = vpop.permute.xlu0 %1075
        %1077 = vrot.lane.b32.xlu0 %v261, 16
        %v1078 = vpop.permute.xlu0 %1077
        %1079 = vrot.lane.b32.xlu0 %v262, 16
        %v1080 = vpop.permute.xlu0 %1079
        %1081 = vrot.lane.b32.xlu0 %v263, 16
        %v1082 = vpop.permute.xlu0 %1081
        %1083 = vrot.lane.b32.xlu0 %v264, 16
        %v1084 = vpop.permute.xlu0 %1083
        %1085 = vrot.lane.b32.xlu0 %v265, 16
        %v1086 = vpop.permute.xlu0 %1085
        %1087 = vrot.lane.b32.xlu0 %v266, 16
        %v1088 = vpop.permute.xlu0 %1087
        %1089 = vrot.lane.b32.xlu0 %v267, 16
        %v1090 = vpop.permute.xlu0 %1089
        %1091 = vrot.lane.b32.xlu0 %v268, 16
        %v1092 = vpop.permute.xlu0 %1091
        %1093 = vrot.lane.b32.xlu0 %v269, 16
        %v1094 = vpop.permute.xlu0 %1093
        %1095 = vrot.lane.b32.xlu0 %v270, 16
        %v1096 = vpop.permute.xlu0 %1095
        %1097 = vrot.lane.b32.xlu0 %v271, 16
        %v1098 = vpop.permute.xlu0 %1097
        %1099 = vrot.lane.b32.xlu0 %v272, 16
        %v1100 = vpop.permute.xlu0 %1099
        %1101 = vrot.lane.b32.xlu0 %v273, 16
        %v1102 = vpop.permute.xlu0 %1101
        %1103 = vrot.lane.b32.xlu0 %v274, 16
        %v1104 = vpop.permute.xlu0 %1103
        %1105 = vrot.lane.b32.xlu0 %v275, 16
        %v1106 = vpop.permute.xlu0 %1105
        %1107 = vrot.lane.b32.xlu0 %v276, 16
        %v1108 = vpop.permute.xlu0 %1107
        %1109 = vrot.lane.b32.xlu0 %v277, 16
        %v1110 = vpop.permute.xlu0 %1109
        %1175 = vrot.lane.b32.xlu0 %v983, 32
        %v1176 = vpop.permute.xlu0 %1175
        %1177 = vrot.lane.b32.xlu0 %v984, 32
        %v1178 = vpop.permute.xlu0 %1177
        %1179 = vrot.lane.b32.xlu0 %v985, 32
        %v1180 = vpop.permute.xlu0 %1179
        %1181 = vrot.lane.b32.xlu0 %v986, 32
        %v1182 = vpop.permute.xlu0 %1181
        %1183 = vrot.lane.b32.xlu0 %v987, 32
        %v1184 = vpop.permute.xlu0 %1183
        %1185 = vrot.lane.b32.xlu0 %v988, 32
        %v1186 = vpop.permute.xlu0 %1185
        %1187 = vrot.lane.b32.xlu0 %v989, 32
        %v1188 = vpop.permute.xlu0 %1187
        %1189 = vrot.lane.b32.xlu0 %v990, 32
        %v1190 = vpop.permute.xlu0 %1189
        %1191 = vrot.lane.b32.xlu0 %v991, 32
        %v1192 = vpop.permute.xlu0 %1191
        %1193 = vrot.lane.b32.xlu0 %v992, 32
        %v1194 = vpop.permute.xlu0 %1193
        %1195 = vrot.lane.b32.xlu0 %v993, 32
        %v1196 = vpop.permute.xlu0 %1195
        %1197 = vrot.lane.b32.xlu0 %v994, 32
        %v1198 = vpop.permute.xlu0 %1197
        %1199 = vrot.lane.b32.xlu0 %v995, 32
        %v1200 = vpop.permute.xlu0 %1199
        %1201 = vrot.lane.b32.xlu0 %v996, 32
        %v1202 = vpop.permute.xlu0 %1201
        %1203 = vrot.lane.b32.xlu0 %v997, 32
        %v1204 = vpop.permute.xlu0 %1203
        %1205 = vrot.lane.b32.xlu0 %v998, 32
        %v1206 = vpop.permute.xlu0 %1205
        %1207 = vrot.lane.b32.xlu0 %v999, 32
        %v1208 = vpop.permute.xlu0 %1207
        %1209 = vrot.lane.b32.xlu0 %v1000, 32
        %v1210 = vpop.permute.xlu0 %1209
        %1211 = vrot.lane.b32.xlu0 %v1001, 32
        %v1212 = vpop.permute.xlu0 %1211
        %1213 = vrot.lane.b32.xlu0 %v1002, 32
        %v1214 = vpop.permute.xlu0 %1213
        %1215 = vrot.lane.b32.xlu0 %v1003, 32
        %v1216 = vpop.permute.xlu0 %1215
        %1217 = vrot.lane.b32.xlu0 %v1004, 32
        %v1218 = vpop.permute.xlu0 %1217
        %1219 = vrot.lane.b32.xlu0 %v1005, 32
        %v1220 = vpop.permute.xlu0 %1219
        %1221 = vrot.lane.b32.xlu0 %v1006, 32
        %v1222 = vpop.permute.xlu0 %1221
        %1223 = vrot.lane.b32.xlu0 %v1007, 32
        %v1224 = vpop.permute.xlu0 %1223
        %1225 = vrot.lane.b32.xlu0 %v1008, 32
        %v1226 = vpop.permute.xlu0 %1225
        %1227 = vrot.lane.b32.xlu0 %v1009, 32
        %v1228 = vpop.permute.xlu0 %1227
        %1229 = vrot.lane.b32.xlu0 %v1010, 32
        %v1230 = vpop.permute.xlu0 %1229
        %1231 = vrot.lane.b32.xlu0 %v1011, 32
        %v1232 = vpop.permute.xlu0 %1231
        %1233 = vrot.lane.b32.xlu0 %v1012, 32
        %v1234 = vpop.permute.xlu0 %1233
        %1235 = vrot.lane.b32.xlu0 %v1013, 32
        %v1236 = vpop.permute.xlu0 %1235
        %1237 = vrot.lane.b32.xlu0 %v1014, 32
        %v1238 = vpop.permute.xlu0 %1237
        %vm1271 = vcmask 130048
        %v1272 = vsel %vm1271, %v887, %v1048
        %v1273 = vsel %vm1271, %v888, %v1050
        %v1274 = vsel %vm1271, %v889, %v1052
        %v1275 = vsel %vm1271, %v890, %v1054
        %v1276 = vsel %vm1271, %v891, %v1056
        %v1277 = vsel %vm1271, %v892, %v1058
        %v1278 = vsel %vm1271, %v893, %v1060
        %v1279 = vsel %vm1271, %v894, %v1062
        %v1280 = vsel %vm1271, %v895, %v1064
        %v1281 = vsel %vm1271, %v896, %v1066
        %v1282 = vsel %vm1271, %v897, %v1068
        %v1283 = vsel %vm1271, %v898, %v1070
        %v1284 = vsel %vm1271, %v899, %v1072
        %v1285 = vsel %vm1271, %v900, %v1074
        %v1286 = vsel %vm1271, %v901, %v1076
        %v1287 = vsel %vm1271, %v902, %v1078
        %v1288 = vsel %vm1271, %v903, %v1080
        %v1289 = vsel %vm1271, %v904, %v1082
        %v1290 = vsel %vm1271, %v905, %v1084
        %v1291 = vsel %vm1271, %v906, %v1086
        %v1292 = vsel %vm1271, %v907, %v1088
        %v1293 = vsel %vm1271, %v908, %v1090
        %v1294 = vsel %vm1271, %v909, %v1092
        %v1295 = vsel %vm1271, %v910, %v1094
        %v1296 = vsel %vm1271, %v911, %v1096
        %v1297 = vsel %vm1271, %v912, %v1098
        %v1298 = vsel %vm1271, %v913, %v1100
        %v1299 = vsel %vm1271, %v914, %v1102
        %v1300 = vsel %vm1271, %v915, %v1104
        %v1301 = vsel %vm1271, %v916, %v1106
        %v1302 = vsel %vm1271, %v917, %v1108
        %v1303 = vsel %vm1271, %v918, %v1110
        %vm1304 = vcmask 261120
        %v1305 = vsel %vm1304, %v1272, %v1176
        %v1306 = vsel %vm1304, %v1273, %v1178
        %v1307 = vsel %vm1304, %v1274, %v1180
        %v1308 = vsel %vm1304, %v1275, %v1182
        %v1309 = vsel %vm1304, %v1276, %v1184
        %v1310 = vsel %vm1304, %v1277, %v1186
        %v1311 = vsel %vm1304, %v1278, %v1188
        %v1312 = vsel %vm1304, %v1279, %v1190
        %v1313 = vsel %vm1304, %v1280, %v1192
        %v1314 = vsel %vm1304, %v1281, %v1194
        %v1315 = vsel %vm1304, %v1282, %v1196
        %v1316 = vsel %vm1304, %v1283, %v1198
        %v1317 = vsel %vm1304, %v1284, %v1200
        %v1318 = vsel %vm1304, %v1285, %v1202
        %v1319 = vsel %vm1304, %v1286, %v1204
        %v1320 = vsel %vm1304, %v1287, %v1206
        %v1321 = vsel %vm1304, %v1288, %v1208
        %v1322 = vsel %vm1304, %v1289, %v1210
        %v1323 = vsel %vm1304, %v1290, %v1212
        %v1324 = vsel %vm1304, %v1291, %v1214
        %v1325 = vsel %vm1304, %v1292, %v1216
        %v1326 = vsel %vm1304, %v1293, %v1218
        %v1327 = vsel %vm1304, %v1294, %v1220
        %v1328 = vsel %vm1304, %v1295, %v1222
        %v1329 = vsel %vm1304, %v1296, %v1224
        %v1330 = vsel %vm1304, %v1297, %v1226
        %v1331 = vsel %vm1304, %v1298, %v1228
        %v1332 = vsel %vm1304, %v1299, %v1230
        %v1333 = vsel %vm1304, %v1300, %v1232
        %v1334 = vsel %vm1304, %v1301, %v1234
        %v1335 = vsel %vm1304, %v1302, %v1236
        %v1336 = vsel %vm1304, %v1303, %v1238
        %v1337 = vrot.slane %v1305, 7
        %v1338 = vrot.slane %v1306, 7
        %v1339 = vrot.slane %v1307, 7
        %v1340 = vrot.slane %v1308, 7
        %v1341 = vrot.slane %v1309, 7
        %v1342 = vrot.slane %v1310, 7
        %v1343 = vrot.slane %v1311, 7
        %v1344 = vrot.slane %v1312, 7
        %v1345 = vrot.slane %v1313, 7
        %v1346 = vrot.slane %v1314, 7
        %v1347 = vrot.slane %v1315, 7
        %v1348 = vrot.slane %v1316, 7
        %v1349 = vrot.slane %v1317, 7
        %v1350 = vrot.slane %v1318, 7
        %v1351 = vrot.slane %v1319, 7
        %v1352 = vrot.slane %v1320, 7
        %v1353 = vrot.slane %v1321, 7
        %v1354 = vrot.slane %v1322, 7
        %v1355 = vrot.slane %v1323, 7
        %v1356 = vrot.slane %v1324, 7
        %v1357 = vrot.slane %v1325, 7
        %v1358 = vrot.slane %v1326, 7
        %v1359 = vrot.slane %v1327, 7
        %v1360 = vrot.slane %v1328, 7
        %v1361 = vrot.slane %v1329, 7
        %v1362 = vrot.slane %v1330, 7
        %v1363 = vrot.slane %v1331, 7
        %v1364 = vrot.slane %v1332, 7
        %v1365 = vrot.slane %v1333, 7
        %v1366 = vrot.slane %v1334, 7
        %v1367 = vrot.slane %v1335, 7
        %v1368 = vrot.slane %v1336, 7
        %vm1369 = vcmp.lt.s32.totalorder %v279, 1
        %v1370 = vsel %vm1369, %v1367, %v1368
        %v1371 = vsel %vm1369, %v1366, %v1367
        %v1372 = vsel %vm1369, %v1365, %v1366
        %v1373 = vsel %vm1369, %v1364, %v1365
        %v1374 = vsel %vm1369, %v1363, %v1364
        %v1375 = vsel %vm1369, %v1362, %v1363
        %v1376 = vsel %vm1369, %v1361, %v1362
        %v1377 = vsel %vm1369, %v1360, %v1361
        %v1378 = vsel %vm1369, %v1359, %v1360
        %v1379 = vsel %vm1369, %v1358, %v1359
        %v1380 = vsel %vm1369, %v1357, %v1358
        %v1381 = vsel %vm1369, %v1356, %v1357
        %v1382 = vsel %vm1369, %v1355, %v1356
        %v1383 = vsel %vm1369, %v1354, %v1355
        %v1384 = vsel %vm1369, %v1353, %v1354
        %v1385 = vsel %vm1369, %v1352, %v1353
        %v1386 = vsel %vm1369, %v1351, %v1352
        %v1387 = vsel %vm1369, %v1350, %v1351
        %v1388 = vsel %vm1369, %v1349, %v1350
        %v1389 = vsel %vm1369, %v1348, %v1349
        %v1390 = vsel %vm1369, %v1347, %v1348
        %v1391 = vsel %vm1369, %v1346, %v1347
        %v1392 = vsel %vm1369, %v1345, %v1346
        %v1393 = vsel %vm1369, %v1344, %v1345
        %v1394 = vsel %vm1369, %v1343, %v1344
        %v1395 = vsel %vm1369, %v1342, %v1343
        %v1396 = vsel %vm1369, %v1341, %v1342
        %v1397 = vsel %vm1369, %v1340, %v1341
        %v1398 = vsel %vm1369, %v1339, %v1340
        %v1399 = vsel %vm1369, %v1338, %v1339
        %v1400 = vsel %vm1369, %v1337, %v1338
        %v1401 = vsel %vm1369, %v1368, %v1337
        %v1402 = vsel %vm759, 1, 0
        %v1403 = vsel %vm760, 1, 0
        %v1404 = vsel %vm761, 1, 0
        %v1405 = vsel %vm762, 1, 0
        %v1406 = vsel %vm763, 1, 0
        %v1407 = vsel %vm764, 1, 0
        %v1408 = vsel %vm765, 1, 0
        %v1409 = vsel %vm766, 1, 0
        %v1410 = vsel %vm767, 1, 0
        %v1411 = vsel %vm768, 1, 0
        %v1412 = vsel %vm769, 1, 0
        %v1413 = vsel %vm770, 1, 0
        %v1414 = vsel %vm771, 1, 0
        %v1415 = vsel %vm772, 1, 0
        %v1416 = vsel %vm773, 1, 0
        %v1417 = vsel %vm774, 1, 0
        %v1418 = vsel %vm775, 1, 0
        %v1419 = vsel %vm776, 1, 0
        %v1420 = vsel %vm777, 1, 0
        %v1421 = vsel %vm778, 1, 0
        %v1422 = vsel %vm779, 1, 0
        %v1423 = vsel %vm780, 1, 0
        %v1424 = vsel %vm781, 1, 0
        %v1425 = vsel %vm782, 1, 0
        %v1426 = vsel %vm783, 1, 0
        %v1427 = vsel %vm784, 1, 0
        %v1428 = vsel %vm785, 1, 0
        %v1429 = vsel %vm786, 1, 0
        %v1430 = vsel %vm787, 1, 0
        %v1431 = vsel %vm788, 1, 0
        %v1432 = vsel %vm789, 1, 0
        %v1433 = vsel %vm790, 1, 0
        %vm1434 = vcmp.eq.s32.totalorder %v1402, 1
        %vm1435 = vcmp.eq.s32.totalorder %v1403, 1
        %vm1436 = vcmp.eq.s32.totalorder %v1404, 1
        %vm1437 = vcmp.eq.s32.totalorder %v1405, 1
        %vm1438 = vcmp.eq.s32.totalorder %v1406, 1
        %vm1439 = vcmp.eq.s32.totalorder %v1407, 1
        %vm1440 = vcmp.eq.s32.totalorder %v1408, 1
        %vm1441 = vcmp.eq.s32.totalorder %v1409, 1
        %vm1442 = vcmp.eq.s32.totalorder %v1410, 1
        %vm1443 = vcmp.eq.s32.totalorder %v1411, 1
        %vm1444 = vcmp.eq.s32.totalorder %v1412, 1
        %vm1445 = vcmp.eq.s32.totalorder %v1413, 1
        %vm1446 = vcmp.eq.s32.totalorder %v1414, 1
        %vm1447 = vcmp.eq.s32.totalorder %v1415, 1
        %vm1448 = vcmp.eq.s32.totalorder %v1416, 1
        %vm1449 = vcmp.eq.s32.totalorder %v1417, 1
        %vm1450 = vcmp.eq.s32.totalorder %v1418, 1
        %vm1451 = vcmp.eq.s32.totalorder %v1419, 1
        %vm1452 = vcmp.eq.s32.totalorder %v1420, 1
        %vm1453 = vcmp.eq.s32.totalorder %v1421, 1
        %vm1454 = vcmp.eq.s32.totalorder %v1422, 1
        %vm1455 = vcmp.eq.s32.totalorder %v1423, 1
        %vm1456 = vcmp.eq.s32.totalorder %v1424, 1
        %vm1457 = vcmp.eq.s32.totalorder %v1425, 1
        %vm1458 = vcmp.eq.s32.totalorder %v1426, 1
        %vm1459 = vcmp.eq.s32.totalorder %v1427, 1
        %vm1460 = vcmp.eq.s32.totalorder %v1428, 1
        %vm1461 = vcmp.eq.s32.totalorder %v1429, 1
        %vm1462 = vcmp.eq.s32.totalorder %v1430, 1
        %vm1463 = vcmp.eq.s32.totalorder %v1431, 1
        %vm1464 = vcmp.eq.s32.totalorder %v1432, 1
        %vm1465 = vcmp.eq.s32.totalorder %v1433, 1
        %v1466 = vsel %vm1434, %v1401, 0.0
        %v1467 = vsel %vm1435, %v1400, 0.0
        %v1468 = vsel %vm1436, %v1399, 0.0
        %v1469 = vsel %vm1437, %v1398, 0.0
        %v1470 = vsel %vm1438, %v1397, 0.0
        %v1471 = vsel %vm1439, %v1396, 0.0
        %v1472 = vsel %vm1440, %v1395, 0.0
        %v1473 = vsel %vm1441, %v1394, 0.0
        %v1474 = vsel %vm1442, %v1393, 0.0
        %v1475 = vsel %vm1443, %v1392, 0.0
        %v1476 = vsel %vm1444, %v1391, 0.0
        %v1477 = vsel %vm1445, %v1390, 0.0
        %v1478 = vsel %vm1446, %v1389, 0.0
        %v1479 = vsel %vm1447, %v1388, 0.0
        %v1480 = vsel %vm1448, %v1387, 0.0
        %v1481 = vsel %vm1449, %v1386, 0.0
        %v1482 = vsel %vm1450, %v1385, 0.0
        %v1483 = vsel %vm1451, %v1384, 0.0
        %v1484 = vsel %vm1452, %v1383, 0.0
        %v1485 = vsel %vm1453, %v1382, 0.0
        %v1486 = vsel %vm1454, %v1381, 0.0
        %v1487 = vsel %vm1455, %v1380, 0.0
        %v1488 = vsel %vm1456, %v1379, 0.0
        %v1489 = vsel %vm1457, %v1378, 0.0
        %v1490 = vsel %vm1458, %v1377, 0.0
        %v1491 = vsel %vm1459, %v1376, 0.0
        %v1492 = vsel %vm1460, %v1375, 0.0
        %v1493 = vsel %vm1461, %v1374, 0.0
        %v1494 = vsel %vm1462, %v1373, 0.0
        %v1495 = vsel %vm1463, %v1372, 0.0
        %v1496 = vsel %vm1464, %v1371, 0.0
        %v1497 = vsel %vm1465, %v1370, 0.0
        %v1498 = vrot.slane %v1305, 1
        %v1499 = vrot.slane %v1306, 1
        %v1500 = vrot.slane %v1307, 1
        %v1501 = vrot.slane %v1308, 1
        %v1502 = vrot.slane %v1309, 1
        %v1503 = vrot.slane %v1310, 1
        %v1504 = vrot.slane %v1311, 1
        %v1505 = vrot.slane %v1312, 1
        %v1506 = vrot.slane %v1313, 1
        %v1507 = vrot.slane %v1314, 1
        %v1508 = vrot.slane %v1315, 1
        %v1509 = vrot.slane %v1316, 1
        %v1510 = vrot.slane %v1317, 1
        %v1511 = vrot.slane %v1318, 1
        %v1512 = vrot.slane %v1319, 1
        %v1513 = vrot.slane %v1320, 1
        %v1514 = vrot.slane %v1321, 1
        %v1515 = vrot.slane %v1322, 1
        %v1516 = vrot.slane %v1323, 1
        %v1517 = vrot.slane %v1324, 1
        %v1518 = vrot.slane %v1325, 1
        %v1519 = vrot.slane %v1326, 1
        %v1520 = vrot.slane %v1327, 1
        %v1521 = vrot.slane %v1328, 1
        %v1522 = vrot.slane %v1329, 1
        %v1523 = vrot.slane %v1330, 1
        %v1524 = vrot.slane %v1331, 1
        %v1525 = vrot.slane %v1332, 1
        %v1526 = vrot.slane %v1333, 1
        %v1527 = vrot.slane %v1334, 1
        %v1528 = vrot.slane %v1335, 1
        %v1529 = vrot.slane %v1336, 1
        %vm1530 = vcmp.lt.s32.totalorder %v279, 7
        %v1531 = vsel %vm1530, %v1528, %v1529
        %v1532 = vsel %vm1530, %v1527, %v1528
        %v1533 = vsel %vm1530, %v1526, %v1527
        %v1534 = vsel %vm1530, %v1525, %v1526
        %v1535 = vsel %vm1530, %v1524, %v1525
        %v1536 = vsel %vm1530, %v1523, %v1524
        %v1537 = vsel %vm1530, %v1522, %v1523
        %v1538 = vsel %vm1530, %v1521, %v1522
        %v1539 = vsel %vm1530, %v1520, %v1521
        %v1540 = vsel %vm1530, %v1519, %v1520
        %v1541 = vsel %vm1530, %v1518, %v1519
        %v1542 = vsel %vm1530, %v1517, %v1518
        %v1543 = vsel %vm1530, %v1516, %v1517
        %v1544 = vsel %vm1530, %v1515, %v1516
        %v1545 = vsel %vm1530, %v1514, %v1515
        %v1546 = vsel %vm1530, %v1513, %v1514
        %v1547 = vsel %vm1530, %v1512, %v1513
        %v1548 = vsel %vm1530, %v1511, %v1512
        %v1549 = vsel %vm1530, %v1510, %v1511
        %v1550 = vsel %vm1530, %v1509, %v1510
        %v1551 = vsel %vm1530, %v1508, %v1509
        %v1552 = vsel %vm1530, %v1507, %v1508
        %v1553 = vsel %vm1530, %v1506, %v1507
        %v1554 = vsel %vm1530, %v1505, %v1506
        %v1555 = vsel %vm1530, %v1504, %v1505
        %v1556 = vsel %vm1530, %v1503, %v1504
        %v1557 = vsel %vm1530, %v1502, %v1503
        %v1558 = vsel %vm1530, %v1501, %v1502
        %v1559 = vsel %vm1530, %v1500, %v1501
        %v1560 = vsel %vm1530, %v1499, %v1500
        %v1561 = vsel %vm1530, %v1498, %v1499
        %v1562 = vsel %vm1530, %v1529, %v1498
        %v1563 = vsel %vm791, 1, 0
        %v1564 = vsel %vm792, 1, 0
        %v1565 = vsel %vm793, 1, 0
        %v1566 = vsel %vm794, 1, 0
        %v1567 = vsel %vm795, 1, 0
        %v1568 = vsel %vm796, 1, 0
        %v1569 = vsel %vm797, 1, 0
        %v1570 = vsel %vm798, 1, 0
        %v1571 = vsel %vm799, 1, 0
        %v1572 = vsel %vm800, 1, 0
        %v1573 = vsel %vm801, 1, 0
        %v1574 = vsel %vm802, 1, 0
        %v1575 = vsel %vm803, 1, 0
        %v1576 = vsel %vm804, 1, 0
        %v1577 = vsel %vm805, 1, 0
        %v1578 = vsel %vm806, 1, 0
        %v1579 = vsel %vm807, 1, 0
        %v1580 = vsel %vm808, 1, 0
        %v1581 = vsel %vm809, 1, 0
        %v1582 = vsel %vm810, 1, 0
        %v1583 = vsel %vm811, 1, 0
        %v1584 = vsel %vm812, 1, 0
        %v1585 = vsel %vm813, 1, 0
        %v1586 = vsel %vm814, 1, 0
        %v1587 = vsel %vm815, 1, 0
        %v1588 = vsel %vm816, 1, 0
        %v1589 = vsel %vm817, 1, 0
        %v1590 = vsel %vm818, 1, 0
        %v1591 = vsel %vm819, 1, 0
        %v1592 = vsel %vm820, 1, 0
        %v1593 = vsel %vm821, 1, 0
        %v1594 = vsel %vm822, 1, 0
        %vm1595 = vcmp.eq.s32.totalorder %v1563, 1
        %vm1596 = vcmp.eq.s32.totalorder %v1564, 1
        %vm1597 = vcmp.eq.s32.totalorder %v1565, 1
        %vm1598 = vcmp.eq.s32.totalorder %v1566, 1
        %vm1599 = vcmp.eq.s32.totalorder %v1567, 1
        %vm1600 = vcmp.eq.s32.totalorder %v1568, 1
        %vm1601 = vcmp.eq.s32.totalorder %v1569, 1
        %vm1602 = vcmp.eq.s32.totalorder %v1570, 1
        %vm1603 = vcmp.eq.s32.totalorder %v1571, 1
        %vm1604 = vcmp.eq.s32.totalorder %v1572, 1
        %vm1605 = vcmp.eq.s32.totalorder %v1573, 1
        %vm1606 = vcmp.eq.s32.totalorder %v1574, 1
        %vm1607 = vcmp.eq.s32.totalorder %v1575, 1
        %vm1608 = vcmp.eq.s32.totalorder %v1576, 1
        %vm1609 = vcmp.eq.s32.totalorder %v1577, 1
        %vm1610 = vcmp.eq.s32.totalorder %v1578, 1
        %vm1611 = vcmp.eq.s32.totalorder %v1579, 1
        %vm1612 = vcmp.eq.s32.totalorder %v1580, 1
        %vm1613 = vcmp.eq.s32.totalorder %v1581, 1
        %vm1614 = vcmp.eq.s32.totalorder %v1582, 1
        %vm1615 = vcmp.eq.s32.totalorder %v1583, 1
        %vm1616 = vcmp.eq.s32.totalorder %v1584, 1
        %vm1617 = vcmp.eq.s32.totalorder %v1585, 1
        %vm1618 = vcmp.eq.s32.totalorder %v1586, 1
        %vm1619 = vcmp.eq.s32.totalorder %v1587, 1
        %vm1620 = vcmp.eq.s32.totalorder %v1588, 1
        %vm1621 = vcmp.eq.s32.totalorder %v1589, 1
        %vm1622 = vcmp.eq.s32.totalorder %v1590, 1
        %vm1623 = vcmp.eq.s32.totalorder %v1591, 1
        %vm1624 = vcmp.eq.s32.totalorder %v1592, 1
        %vm1625 = vcmp.eq.s32.totalorder %v1593, 1
        %vm1626 = vcmp.eq.s32.totalorder %v1594, 1
        %v1627 = vsel %vm1595, %v1561, 0.0
        %v1628 = vsel %vm1596, %v1560, 0.0
        %v1629 = vsel %vm1597, %v1559, 0.0
        %v1630 = vsel %vm1598, %v1558, 0.0
        %v1631 = vsel %vm1599, %v1557, 0.0
        %v1632 = vsel %vm1600, %v1556, 0.0
        %v1633 = vsel %vm1601, %v1555, 0.0
        %v1634 = vsel %vm1602, %v1554, 0.0
        %v1635 = vsel %vm1603, %v1553, 0.0
        %v1636 = vsel %vm1604, %v1552, 0.0
        %v1637 = vsel %vm1605, %v1551, 0.0
        %v1638 = vsel %vm1606, %v1550, 0.0
        %v1639 = vsel %vm1607, %v1549, 0.0
        %v1640 = vsel %vm1608, %v1548, 0.0
        %v1641 = vsel %vm1609, %v1547, 0.0
        %v1642 = vsel %vm1610, %v1546, 0.0
        %v1643 = vsel %vm1611, %v1545, 0.0
        %v1644 = vsel %vm1612, %v1544, 0.0
        %v1645 = vsel %vm1613, %v1543, 0.0
        %v1646 = vsel %vm1614, %v1542, 0.0
        %v1647 = vsel %vm1615, %v1541, 0.0
        %v1648 = vsel %vm1616, %v1540, 0.0
        %v1649 = vsel %vm1617, %v1539, 0.0
        %v1650 = vsel %vm1618, %v1538, 0.0
        %v1651 = vsel %vm1619, %v1537, 0.0
        %v1652 = vsel %vm1620, %v1536, 0.0
        %v1653 = vsel %vm1621, %v1535, 0.0
        %v1654 = vsel %vm1622, %v1534, 0.0
        %v1655 = vsel %vm1623, %v1533, 0.0
        %v1656 = vsel %vm1624, %v1532, 0.0
        %v1657 = vsel %vm1625, %v1531, 0.0
        %v1658 = vsel %vm1626, %v1562, 0.0
        %1691 = vrot.lane.b32.xlu0 %v1466, 64
        %v1692 = vpop.permute.xlu0 %1691
        %1693 = vrot.lane.b32.xlu0 %v1467, 64
        %v1694 = vpop.permute.xlu0 %1693
        %1695 = vrot.lane.b32.xlu0 %v1468, 64
        %v1696 = vpop.permute.xlu0 %1695
        %1697 = vrot.lane.b32.xlu0 %v1469, 64
        %v1698 = vpop.permute.xlu0 %1697
        %1699 = vrot.lane.b32.xlu0 %v1470, 64
        %v1700 = vpop.permute.xlu0 %1699
        %1701 = vrot.lane.b32.xlu0 %v1471, 64
        %v1702 = vpop.permute.xlu0 %1701
        %1703 = vrot.lane.b32.xlu0 %v1472, 64
        %v1704 = vpop.permute.xlu0 %1703
        %1705 = vrot.lane.b32.xlu0 %v1473, 64
        %v1706 = vpop.permute.xlu0 %1705
        %1707 = vrot.lane.b32.xlu0 %v1474, 64
        %v1708 = vpop.permute.xlu0 %1707
        %1709 = vrot.lane.b32.xlu0 %v1475, 64
        %v1710 = vpop.permute.xlu0 %1709
        %1711 = vrot.lane.b32.xlu0 %v1476, 64
        %v1712 = vpop.permute.xlu0 %1711
        %1713 = vrot.lane.b32.xlu0 %v1477, 64
        %v1714 = vpop.permute.xlu0 %1713
        %1715 = vrot.lane.b32.xlu0 %v1478, 64
        %v1716 = vpop.permute.xlu0 %1715
        %1717 = vrot.lane.b32.xlu0 %v1479, 64
        %v1718 = vpop.permute.xlu0 %1717
        %1719 = vrot.lane.b32.xlu0 %v1480, 64
        %v1720 = vpop.permute.xlu0 %1719
        %1721 = vrot.lane.b32.xlu0 %v1481, 64
        %v1722 = vpop.permute.xlu0 %1721
        %1723 = vrot.lane.b32.xlu0 %v1482, 64
        %v1724 = vpop.permute.xlu0 %1723
        %1725 = vrot.lane.b32.xlu0 %v1483, 64
        %v1726 = vpop.permute.xlu0 %1725
        %1727 = vrot.lane.b32.xlu0 %v1484, 64
        %v1728 = vpop.permute.xlu0 %1727
        %1729 = vrot.lane.b32.xlu0 %v1485, 64
        %v1730 = vpop.permute.xlu0 %1729
        %1731 = vrot.lane.b32.xlu0 %v1486, 64
        %v1732 = vpop.permute.xlu0 %1731
        %1733 = vrot.lane.b32.xlu0 %v1487, 64
        %v1734 = vpop.permute.xlu0 %1733
        %1735 = vrot.lane.b32.xlu0 %v1488, 64
        %v1736 = vpop.permute.xlu0 %1735
        %1737 = vrot.lane.b32.xlu0 %v1489, 64
        %v1738 = vpop.permute.xlu0 %1737
        %1739 = vrot.lane.b32.xlu0 %v1490, 64
        %v1740 = vpop.permute.xlu0 %1739
        %1741 = vrot.lane.b32.xlu0 %v1491, 64
        %v1742 = vpop.permute.xlu0 %1741
        %1743 = vrot.lane.b32.xlu0 %v1492, 64
        %v1744 = vpop.permute.xlu0 %1743
        %1745 = vrot.lane.b32.xlu0 %v1493, 64
        %v1746 = vpop.permute.xlu0 %1745
        %1747 = vrot.lane.b32.xlu0 %v1494, 64
        %v1748 = vpop.permute.xlu0 %1747
        %1749 = vrot.lane.b32.xlu0 %v1495, 64
        %v1750 = vpop.permute.xlu0 %1749
        %1751 = vrot.lane.b32.xlu0 %v1496, 64
        %v1752 = vpop.permute.xlu0 %1751
        %1753 = vrot.lane.b32.xlu0 %v1497, 64
        %v1754 = vpop.permute.xlu0 %1753
        %1819 = vrot.lane.b32.xlu0 %v1305, 112
        %v1820 = vpop.permute.xlu0 %1819
        %1821 = vrot.lane.b32.xlu0 %v1306, 112
        %v1822 = vpop.permute.xlu0 %1821
        %1823 = vrot.lane.b32.xlu0 %v1307, 112
        %v1824 = vpop.permute.xlu0 %1823
        %1825 = vrot.lane.b32.xlu0 %v1308, 112
        %v1826 = vpop.permute.xlu0 %1825
        %1827 = vrot.lane.b32.xlu0 %v1309, 112
        %v1828 = vpop.permute.xlu0 %1827
        %1829 = vrot.lane.b32.xlu0 %v1310, 112
        %v1830 = vpop.permute.xlu0 %1829
        %1831 = vrot.lane.b32.xlu0 %v1311, 112
        %v1832 = vpop.permute.xlu0 %1831
        %1833 = vrot.lane.b32.xlu0 %v1312, 112
        %v1834 = vpop.permute.xlu0 %1833
        %1835 = vrot.lane.b32.xlu0 %v1313, 112
        %v1836 = vpop.permute.xlu0 %1835
        %1837 = vrot.lane.b32.xlu0 %v1314, 112
        %v1838 = vpop.permute.xlu0 %1837
        %1839 = vrot.lane.b32.xlu0 %v1315, 112
        %v1840 = vpop.permute.xlu0 %1839
        %1841 = vrot.lane.b32.xlu0 %v1316, 112
        %v1842 = vpop.permute.xlu0 %1841
        %1843 = vrot.lane.b32.xlu0 %v1317, 112
        %v1844 = vpop.permute.xlu0 %1843
        %1845 = vrot.lane.b32.xlu0 %v1318, 112
        %v1846 = vpop.permute.xlu0 %1845
        %1847 = vrot.lane.b32.xlu0 %v1319, 112
        %v1848 = vpop.permute.xlu0 %1847
        %1849 = vrot.lane.b32.xlu0 %v1320, 112
        %v1850 = vpop.permute.xlu0 %1849
        %1851 = vrot.lane.b32.xlu0 %v1321, 112
        %v1852 = vpop.permute.xlu0 %1851
        %1853 = vrot.lane.b32.xlu0 %v1322, 112
        %v1854 = vpop.permute.xlu0 %1853
        %1855 = vrot.lane.b32.xlu0 %v1323, 112
        %v1856 = vpop.permute.xlu0 %1855
        %1857 = vrot.lane.b32.xlu0 %v1324, 112
        %v1858 = vpop.permute.xlu0 %1857
        %1859 = vrot.lane.b32.xlu0 %v1325, 112
        %v1860 = vpop.permute.xlu0 %1859
        %1861 = vrot.lane.b32.xlu0 %v1326, 112
        %v1862 = vpop.permute.xlu0 %1861
        %1863 = vrot.lane.b32.xlu0 %v1327, 112
        %v1864 = vpop.permute.xlu0 %1863
        %1865 = vrot.lane.b32.xlu0 %v1328, 112
        %v1866 = vpop.permute.xlu0 %1865
        %1867 = vrot.lane.b32.xlu0 %v1329, 112
        %v1868 = vpop.permute.xlu0 %1867
        %1869 = vrot.lane.b32.xlu0 %v1330, 112
        %v1870 = vpop.permute.xlu0 %1869
        %1871 = vrot.lane.b32.xlu0 %v1331, 112
        %v1872 = vpop.permute.xlu0 %1871
        %1873 = vrot.lane.b32.xlu0 %v1332, 112
        %v1874 = vpop.permute.xlu0 %1873
        %1875 = vrot.lane.b32.xlu0 %v1333, 112
        %v1876 = vpop.permute.xlu0 %1875
        %1877 = vrot.lane.b32.xlu0 %v1334, 112
        %v1878 = vpop.permute.xlu0 %1877
        %1879 = vrot.lane.b32.xlu0 %v1335, 112
        %v1880 = vpop.permute.xlu0 %1879
        %1881 = vrot.lane.b32.xlu0 %v1336, 112
        %v1882 = vpop.permute.xlu0 %1881
        %1947 = vrot.lane.b32.xlu0 %v1627, 32
        %v1948 = vpop.permute.xlu0 %1947
        %1949 = vrot.lane.b32.xlu0 %v1628, 32
        %v1950 = vpop.permute.xlu0 %1949
        %1951 = vrot.lane.b32.xlu0 %v1629, 32
        %v1952 = vpop.permute.xlu0 %1951
        %1953 = vrot.lane.b32.xlu0 %v1630, 32
        %v1954 = vpop.permute.xlu0 %1953
        %1955 = vrot.lane.b32.xlu0 %v1631, 32
        %v1956 = vpop.permute.xlu0 %1955
        %1957 = vrot.lane.b32.xlu0 %v1632, 32
        %v1958 = vpop.permute.xlu0 %1957
        %1959 = vrot.lane.b32.xlu0 %v1633, 32
        %v1960 = vpop.permute.xlu0 %1959
        %1961 = vrot.lane.b32.xlu0 %v1634, 32
        %v1962 = vpop.permute.xlu0 %1961
        %1963 = vrot.lane.b32.xlu0 %v1635, 32
        %v1964 = vpop.permute.xlu0 %1963
        %1965 = vrot.lane.b32.xlu0 %v1636, 32
        %v1966 = vpop.permute.xlu0 %1965
        %1967 = vrot.lane.b32.xlu0 %v1637, 32
        %v1968 = vpop.permute.xlu0 %1967
        %1969 = vrot.lane.b32.xlu0 %v1638, 32
        %v1970 = vpop.permute.xlu0 %1969
        %1971 = vrot.lane.b32.xlu0 %v1639, 32
        %v1972 = vpop.permute.xlu0 %1971
        %1973 = vrot.lane.b32.xlu0 %v1640, 32
        %v1974 = vpop.permute.xlu0 %1973
        %1975 = vrot.lane.b32.xlu0 %v1641, 32
        %v1976 = vpop.permute.xlu0 %1975
        %1977 = vrot.lane.b32.xlu0 %v1642, 32
        %v1978 = vpop.permute.xlu0 %1977
        %1979 = vrot.lane.b32.xlu0 %v1643, 32
        %v1980 = vpop.permute.xlu0 %1979
        %1981 = vrot.lane.b32.xlu0 %v1644, 32
        %v1982 = vpop.permute.xlu0 %1981
        %1983 = vrot.lane.b32.xlu0 %v1645, 32
        %v1984 = vpop.permute.xlu0 %1983
        %1985 = vrot.lane.b32.xlu0 %v1646, 32
        %v1986 = vpop.permute.xlu0 %1985
        %1987 = vrot.lane.b32.xlu0 %v1647, 32
        %v1988 = vpop.permute.xlu0 %1987
        %1989 = vrot.lane.b32.xlu0 %v1648, 32
        %v1990 = vpop.permute.xlu0 %1989
        %1991 = vrot.lane.b32.xlu0 %v1649, 32
        %v1992 = vpop.permute.xlu0 %1991
        %1993 = vrot.lane.b32.xlu0 %v1650, 32
        %v1994 = vpop.permute.xlu0 %1993
        %1995 = vrot.lane.b32.xlu0 %v1651, 32
        %v1996 = vpop.permute.xlu0 %1995
        %1997 = vrot.lane.b32.xlu0 %v1652, 32
        %v1998 = vpop.permute.xlu0 %1997
        %1999 = vrot.lane.b32.xlu0 %v1653, 32
        %v2000 = vpop.permute.xlu0 %1999
        %2001 = vrot.lane.b32.xlu0 %v1654, 32
        %v2002 = vpop.permute.xlu0 %2001
        %2003 = vrot.lane.b32.xlu0 %v1655, 32
        %v2004 = vpop.permute.xlu0 %2003
        %2005 = vrot.lane.b32.xlu0 %v1656, 32
        %v2006 = vpop.permute.xlu0 %2005
        %2007 = vrot.lane.b32.xlu0 %v1657, 32
        %v2008 = vpop.permute.xlu0 %2007
        %2009 = vrot.lane.b32.xlu0 %v1658, 32
        %v2010 = vpop.permute.xlu0 %2009
        %vm2043 = vcmask 523264
        %v2044 = vsel %vm2043, %v246, %v1692
        %v2045 = vsel %vm2043, %v247, %v1694
        %v2046 = vsel %vm2043, %v248, %v1696
        %v2047 = vsel %vm2043, %v249, %v1698
        %v2048 = vsel %vm2043, %v250, %v1700
        %v2049 = vsel %vm2043, %v251, %v1702
        %v2050 = vsel %vm2043, %v252, %v1704
        %v2051 = vsel %vm2043, %v253, %v1706
        %v2052 = vsel %vm2043, %v254, %v1708
        %v2053 = vsel %vm2043, %v255, %v1710
        %v2054 = vsel %vm2043, %v256, %v1712
        %v2055 = vsel %vm2043, %v257, %v1714
        %v2056 = vsel %vm2043, %v258, %v1716
        %v2057 = vsel %vm2043, %v259, %v1718
        %v2058 = vsel %vm2043, %v260, %v1720
        %v2059 = vsel %vm2043, %v261, %v1722
        %v2060 = vsel %vm2043, %v262, %v1724
        %v2061 = vsel %vm2043, %v263, %v1726
        %v2062 = vsel %vm2043, %v264, %v1728
        %v2063 = vsel %vm2043, %v265, %v1730
        %v2064 = vsel %vm2043, %v266, %v1732
        %v2065 = vsel %vm2043, %v267, %v1734
        %v2066 = vsel %vm2043, %v268, %v1736
        %v2067 = vsel %vm2043, %v269, %v1738
        %v2068 = vsel %vm2043, %v270, %v1740
        %v2069 = vsel %vm2043, %v271, %v1742
        %v2070 = vsel %vm2043, %v272, %v1744
        %v2071 = vsel %vm2043, %v273, %v1746
        %v2072 = vsel %vm2043, %v274, %v1748
        %v2073 = vsel %vm2043, %v275, %v1750
        %v2074 = vsel %vm2043, %v276, %v1752
        %v2075 = vsel %vm2043, %v277, %v1754
        %vm2076 = vcmask 916480
        %v2077 = vsel %vm2076, %v2044, %v1820
        %v2078 = vsel %vm2076, %v2045, %v1822
        %v2079 = vsel %vm2076, %v2046, %v1824
        %v2080 = vsel %vm2076, %v2047, %v1826
        %v2081 = vsel %vm2076, %v2048, %v1828
        %v2082 = vsel %vm2076, %v2049, %v1830
        %v2083 = vsel %vm2076, %v2050, %v1832
        %v2084 = vsel %vm2076, %v2051, %v1834
        %v2085 = vsel %vm2076, %v2052, %v1836
        %v2086 = vsel %vm2076, %v2053, %v1838
        %v2087 = vsel %vm2076, %v2054, %v1840
        %v2088 = vsel %vm2076, %v2055, %v1842
        %v2089 = vsel %vm2076, %v2056, %v1844
        %v2090 = vsel %vm2076, %v2057, %v1846
        %v2091 = vsel %vm2076, %v2058, %v1848
        %v2092 = vsel %vm2076, %v2059, %v1850
        %v2093 = vsel %vm2076, %v2060, %v1852
        %v2094 = vsel %vm2076, %v2061, %v1854
        %v2095 = vsel %vm2076, %v2062, %v1856
        %v2096 = vsel %vm2076, %v2063, %v1858
        %v2097 = vsel %vm2076, %v2064, %v1860
        %v2098 = vsel %vm2076, %v2065, %v1862
        %v2099 = vsel %vm2076, %v2066, %v1864
        %v2100 = vsel %vm2076, %v2067, %v1866
        %v2101 = vsel %vm2076, %v2068, %v1868
        %v2102 = vsel %vm2076, %v2069, %v1870
        %v2103 = vsel %vm2076, %v2070, %v1872
        %v2104 = vsel %vm2076, %v2071, %v1874
        %v2105 = vsel %vm2076, %v2072, %v1876
        %v2106 = vsel %vm2076, %v2073, %v1878
        %v2107 = vsel %vm2076, %v2074, %v1880
        %v2108 = vsel %vm2076, %v2075, %v1882
        %v2109 = vsel %vm1304, %v1820, %v1948
        %v2110 = vsel %vm1304, %v1822, %v1950
        %v2111 = vsel %vm1304, %v1824, %v1952
        %v2112 = vsel %vm1304, %v1826, %v1954
        %v2113 = vsel %vm1304, %v1828, %v1956
        %v2114 = vsel %vm1304, %v1830, %v1958
        %v2115 = vsel %vm1304, %v1832, %v1960
        %v2116 = vsel %vm1304, %v1834, %v1962
        %v2117 = vsel %vm1304, %v1836, %v1964
        %v2118 = vsel %vm1304, %v1838, %v1966
        %v2119 = vsel %vm1304, %v1840, %v1968
        %v2120 = vsel %vm1304, %v1842, %v1970
        %v2121 = vsel %vm1304, %v1844, %v1972
        %v2122 = vsel %vm1304, %v1846, %v1974
        %v2123 = vsel %vm1304, %v1848, %v1976
        %v2124 = vsel %vm1304, %v1850, %v1978
        %v2125 = vsel %vm1304, %v1852, %v1980
        %v2126 = vsel %vm1304, %v1854, %v1982
        %v2127 = vsel %vm1304, %v1856, %v1984
        %v2128 = vsel %vm1304, %v1858, %v1986
        %v2129 = vsel %vm1304, %v1860, %v1988
        %v2130 = vsel %vm1304, %v1862, %v1990
        %v2131 = vsel %vm1304, %v1864, %v1992
        %v2132 = vsel %vm1304, %v1866, %v1994
        %v2133 = vsel %vm1304, %v1868, %v1996
        %v2134 = vsel %vm1304, %v1870, %v1998
        %v2135 = vsel %vm1304, %v1872, %v2000
        %v2136 = vsel %vm1304, %v1874, %v2002
        %v2137 = vsel %vm1304, %v1876, %v2004
        %v2138 = vsel %vm1304, %v1878, %v2006
        %v2139 = vsel %vm1304, %v1880, %v2008
        %v2140 = vsel %vm1304, %v1882, %v2010
        %vm2141 = vcmask 654336
        %v2142 = vsel %vm2141, %v2109, 0.0
        %v2143 = vsel %vm2141, %v2110, 0.0
        %v2144 = vsel %vm2141, %v2111, 0.0
        %v2145 = vsel %vm2141, %v2112, 0.0
        %v2146 = vsel %vm2141, %v2113, 0.0
        %v2147 = vsel %vm2141, %v2114, 0.0
        %v2148 = vsel %vm2141, %v2115, 0.0
        %v2149 = vsel %vm2141, %v2116, 0.0
        %v2150 = vsel %vm2141, %v2117, 0.0
        %v2151 = vsel %vm2141, %v2118, 0.0
        %v2152 = vsel %vm2141, %v2119, 0.0
        %v2153 = vsel %vm2141, %v2120, 0.0
        %v2154 = vsel %vm2141, %v2121, 0.0
        %v2155 = vsel %vm2141, %v2122, 0.0
        %v2156 = vsel %vm2141, %v2123, 0.0
        %v2157 = vsel %vm2141, %v2124, 0.0
        %v2158 = vsel %vm2141, %v2125, 0.0
        %v2159 = vsel %vm2141, %v2126, 0.0
        %v2160 = vsel %vm2141, %v2127, 0.0
        %v2161 = vsel %vm2141, %v2128, 0.0
        %v2162 = vsel %vm2141, %v2129, 0.0
        %v2163 = vsel %vm2141, %v2130, 0.0
        %v2164 = vsel %vm2141, %v2131, 0.0
        %v2165 = vsel %vm2141, %v2132, 0.0
        %v2166 = vsel %vm2141, %v2133, 0.0
        %v2167 = vsel %vm2141, %v2134, 0.0
        %v2168 = vsel %vm2141, %v2135, 0.0
        %v2169 = vsel %vm2141, %v2136, 0.0
        %v2170 = vsel %vm2141, %v2137, 0.0
        %v2171 = vsel %vm2141, %v2138, 0.0
        %v2172 = vsel %vm2141, %v2139, 0.0
        %v2173 = vsel %vm2141, %v2140, 0.0
        %v2174 = vpack.c.bf16 %v2078, %v2077
        %v2175 = vpack.c.bf16 %v2143, %v2142
        %v2176 = vpack.c.bf16 %v2080, %v2079
        %v2177 = vpack.c.bf16 %v2145, %v2144
        %v2178 = vpack.c.bf16 %v2082, %v2081
        %v2179 = vpack.c.bf16 %v2147, %v2146
        %v2180 = vpack.c.bf16 %v2084, %v2083
        %v2181 = vpack.c.bf16 %v2149, %v2148
        %v2182 = vpack.c.bf16 %v2086, %v2085
        %v2183 = vpack.c.bf16 %v2151, %v2150
        %v2184 = vpack.c.bf16 %v2088, %v2087
        %v2185 = vpack.c.bf16 %v2153, %v2152
        %v2186 = vpack.c.bf16 %v2090, %v2089
        %v2187 = vpack.c.bf16 %v2155, %v2154
        %v2188 = vpack.c.bf16 %v2092, %v2091
        %v2189 = vpack.c.bf16 %v2157, %v2156
        %v2190 = vpack.c.bf16 %v2094, %v2093
        %v2191 = vpack.c.bf16 %v2159, %v2158
        %v2192 = vpack.c.bf16 %v2096, %v2095
        %v2193 = vpack.c.bf16 %v2161, %v2160
        %v2194 = vpack.c.bf16 %v2098, %v2097
        %v2195 = vpack.c.bf16 %v2163, %v2162
        %v2196 = vpack.c.bf16 %v2100, %v2099
        %v2197 = vpack.c.bf16 %v2165, %v2164
        %v2198 = vpack.c.bf16 %v2102, %v2101
        %v2199 = vpack.c.bf16 %v2167, %v2166
        %v2200 = vpack.c.bf16 %v2104, %v2103
        %v2201 = vpack.c.bf16 %v2169, %v2168
        %v2202 = vpack.c.bf16 %v2106, %v2105
        %v2203 = vpack.c.bf16 %v2171, %v2170
        %v2204 = vpack.c.bf16 %v2108, %v2107
        %v2205 = vpack.c.bf16 %v2173, %v2172
        %v2206 = vld [vmem:[#allocation5] sm:$0xf]
        %v2207 = vld [vmem:[#allocation5 + $0x4] sm:$0xf]
        %v2208 = vld [vmem:[#allocation5 + $0x8] sm:$0xf]
        %v2209 = vld [vmem:[#allocation5 + $0xc] sm:$0xf]
        %v2210 = vld [vmem:[#allocation5 + $0x10] sm:$0xf]
        %v2211 = vld [vmem:[#allocation5 + $0x14] sm:$0xf]
        %v2212 = vld [vmem:[#allocation5 + $0x18] sm:$0xf]
        %v2213 = vld [vmem:[#allocation5 + $0x1c] sm:$0xf]
        %v2214 = vld [vmem:[#allocation5 + $0x20] sm:$0xf]
        %v2215 = vld [vmem:[#allocation5 + $0x24] sm:$0xf]
        %v2216 = vld [vmem:[#allocation5 + $0x28] sm:$0xf]
        %v2217 = vld [vmem:[#allocation5 + $0x2c] sm:$0xf]
        %v2218 = vld [vmem:[#allocation5 + $0x30] sm:$0xf]
        %v2219 = vld [vmem:[#allocation5 + $0x34] sm:$0xf]
        %v2220 = vld [vmem:[#allocation5 + $0x38] sm:$0xf]
        %v2221 = vld [vmem:[#allocation5 + $0x3c] sm:$0xf]
        %v2222 = vld [vmem:[#allocation5 + $0x40] sm:$0xf]
        %v2223 = vld [vmem:[#allocation5 + $0x44] sm:$0xf]
        %v2224 = vld [vmem:[#allocation5 + $0x48] sm:$0xf]
        %v2225 = vld [vmem:[#allocation5 + $0x4c] sm:$0xf]
        %v2226 = vld [vmem:[#allocation5 + $0x50] sm:$0xf]
        %v2227 = vld [vmem:[#allocation5 + $0x54] sm:$0xf]
        %v2228 = vld [vmem:[#allocation5 + $0x58] sm:$0xf]
        %v2229 = vld [vmem:[#allocation5 + $0x5c] sm:$0xf]
        %v2230 = vld [vmem:[#allocation5 + $0x60] sm:$0xf]
        %v2231 = vld [vmem:[#allocation5 + $0x64] sm:$0xf]
        %v2232 = vld [vmem:[#allocation5 + $0x68] sm:$0xf]
        %v2233 = vld [vmem:[#allocation5 + $0x6c] sm:$0xf]
        %v2234 = vld [vmem:[#allocation5 + $0x70] sm:$0xf]
        %v2235 = vld [vmem:[#allocation5 + $0x74] sm:$0xf]
        %v2236 = vld [vmem:[#allocation5 + $0x78] sm:$0xf]
        %v2237 = vld [vmem:[#allocation5 + $0x7c] sm:$0xf]
        %v2238 = vld [vmem:[%s2] sm:$0x1]
        %v2240 = vlaneseq
        %v2241 = vshrl.u32 %v2240, 7
        %v2242 = vsub.s32 0, %v2241
        %v2243 = vrot.slane %v2238, %v2242
        %v2277 = vunpack.c.l.b16 %v2206
        %v2278 = vunpack.c.l.b16 %v2207
        %v2279 = vunpack.c.l.b16 %v2208
        %v2280 = vunpack.c.l.b16 %v2209
        %v2281 = vunpack.c.l.b16 %v2210
        %v2282 = vunpack.c.l.b16 %v2211
        %v2283 = vunpack.c.l.b16 %v2212
        %v2284 = vunpack.c.l.b16 %v2213
        %v2285 = vunpack.c.l.b16 %v2214
        %v2286 = vunpack.c.l.b16 %v2215
        %v2287 = vunpack.c.l.b16 %v2216
        %v2288 = vunpack.c.l.b16 %v2217
        %v2289 = vunpack.c.l.b16 %v2218
        %v2290 = vunpack.c.l.b16 %v2219
        %v2291 = vunpack.c.l.b16 %v2220
        %v2292 = vunpack.c.l.b16 %v2221
        %v2293 = vunpack.c.l.b16 %v2222
        %v2294 = vunpack.c.l.b16 %v2223
        %v2295 = vunpack.c.l.b16 %v2224
        %v2296 = vunpack.c.l.b16 %v2225
        %v2297 = vunpack.c.l.b16 %v2226
        %v2298 = vunpack.c.l.b16 %v2227
        %v2299 = vunpack.c.l.b16 %v2228
        %v2300 = vunpack.c.l.b16 %v2229
        %v2301 = vunpack.c.l.b16 %v2230
        %v2302 = vunpack.c.l.b16 %v2231
        %v2303 = vunpack.c.l.b16 %v2232
        %v2304 = vunpack.c.l.b16 %v2233
        %v2305 = vunpack.c.l.b16 %v2234
        %v2306 = vunpack.c.l.b16 %v2235
        %v2307 = vunpack.c.l.b16 %v2236
        %v2308 = vunpack.c.l.b16 %v2237
        %v2309 = vpack.c.b16 %v2278, %v2277
        %v2310 = vpack.c.b16 %v2280, %v2279
        %v2311 = vpack.c.b16 %v2282, %v2281
        %v2312 = vpack.c.b16 %v2284, %v2283
        %v2313 = vpack.c.b16 %v2286, %v2285
        %v2314 = vpack.c.b16 %v2288, %v2287
        %v2315 = vpack.c.b16 %v2290, %v2289
        %v2316 = vpack.c.b16 %v2292, %v2291
        %v2317 = vpack.c.b16 %v2294, %v2293
        %v2318 = vpack.c.b16 %v2296, %v2295
        %v2319 = vpack.c.b16 %v2298, %v2297
        %v2320 = vpack.c.b16 %v2300, %v2299
        %v2321 = vpack.c.b16 %v2302, %v2301
        %v2322 = vpack.c.b16 %v2304, %v2303
        %v2323 = vpack.c.b16 %v2306, %v2305
        %v2324 = vpack.c.b16 %v2308, %v2307
        %2341 = vmatprep.subr.bf16.mxu0 0
        %2342 = vmatpush1.bf16.msra.mxu0 %v2316
        %2343 = vmatprep.subr.bf16.mxu0 0
        %2344 = vmatpush1.bf16.msra.mxu0 %v2315
        %2345 = vmatprep.subr.bf16.mxu0 0
        %2346 = vmatpush1.bf16.msra.mxu0 %v2314
        %2347 = vmatprep.subr.bf16.mxu0 0
        %2348 = vmatpush1.bf16.msra.mxu0 %v2313
        %2349 = vmatprep.subr.bf16.mxu0 0
        %2350 = vmatpush1.bf16.msra.mxu0 %v2312
        %2351 = vmatprep.subr.bf16.mxu0 0
        %2352 = vmatpush1.bf16.msra.mxu0 %v2311
        %2353 = vmatprep.subr.bf16.mxu0 0
        %2354 = vmatpush1.bf16.msra.mxu0 %v2310
        %2355 = vmatprep.subr.bf16.mxu0 0
        %2356 = vmatpush1.bf16.msra.mxu0 %v2309
        %2357 = vmatprep.subr.bf16.mxu0 0
        %2358 = vmatpush2.bf16.msra.mxu0 %v2324
        %2359 = vmatprep.subr.bf16.mxu0 0
        %2360 = vmatpush2.bf16.msra.mxu0 %v2323
        %2361 = vmatprep.subr.bf16.mxu0 0
        %2362 = vmatpush2.bf16.msra.mxu0 %v2322
        %2363 = vmatprep.subr.bf16.mxu0 0
        %2364 = vmatpush2.bf16.msra.mxu0 %v2321
        %2365 = vmatprep.subr.bf16.mxu0 0
        %2366 = vmatpush2.bf16.msra.mxu0 %v2320
        %2367 = vmatprep.subr.bf16.mxu0 0
        %2368 = vmatpush2.bf16.msra.mxu0 %v2319
        %2369 = vmatprep.subr.bf16.mxu0 0
        %2370 = vmatpush2.bf16.msra.mxu0 %v2318
        %2371 = vmatprep.subr.bf16.mxu0 0
        %2372 = vmatpush2.bf16.msra.mxu0 %v2317
        %2373 = vmatprep.mubr.bf16.mxu0 %v2175
        %2374 = vmatmul.mubr.bf16.gmra.mxu0 %v2174
        %v2375 = vpop.f32.mrf.mxu0
        %v2376 = vadd.f32 %v2243, %v2375
        %v2377 = vpop.f32.mrf.mxu0
        %v2378 = vpop.f32.mrf.mxu0
        %v2379 = vadd.f32 %v2243, %v2378
        %v2380 = vpop.f32.mrf.mxu0
        %2381 = vmatprep.mubr.bf16.mxu0 %v2177
        %2382 = vmatmul.mubr.bf16.gmra.mxu0 %v2176
        %v2383 = vpop.f32.mrf.mxu0
        %v2384 = vadd.f32 %v2243, %v2383
        %v2385 = vpop.f32.mrf.mxu0
        %v2386 = vpop.f32.mrf.mxu0
        %v2387 = vadd.f32 %v2243, %v2386
        %v2388 = vpop.f32.mrf.mxu0
        %2389 = vmatprep.mubr.bf16.mxu0 %v2179
        %2390 = vmatmul.mubr.bf16.gmra.mxu0 %v2178
        %v2391 = vpop.f32.mrf.mxu0
        %v2392 = vadd.f32 %v2243, %v2391
        %v2393 = vpop.f32.mrf.mxu0
        %v2394 = vpop.f32.mrf.mxu0
        %v2395 = vadd.f32 %v2243, %v2394
        %v2396 = vpop.f32.mrf.mxu0
        %2397 = vmatprep.mubr.bf16.mxu0 %v2181
        %2398 = vmatmul.mubr.bf16.gmra.mxu0 %v2180
        %v2399 = vpop.f32.mrf.mxu0
        %v2400 = vadd.f32 %v2243, %v2399
        %v2401 = vpop.f32.mrf.mxu0
        %v2402 = vpop.f32.mrf.mxu0
        %v2403 = vadd.f32 %v2243, %v2402
        %v2404 = vpop.f32.mrf.mxu0
        %2405 = vmatprep.mubr.bf16.mxu0 %v2183
        %2406 = vmatmul.mubr.bf16.gmra.mxu0 %v2182
        %v2407 = vpop.f32.mrf.mxu0
        %v2408 = vadd.f32 %v2243, %v2407
        %v2409 = vpop.f32.mrf.mxu0
        %v2410 = vpop.f32.mrf.mxu0
        %v2411 = vadd.f32 %v2243, %v2410
        %v2412 = vpop.f32.mrf.mxu0
        %2413 = vmatprep.mubr.bf16.mxu0 %v2185
        %2414 = vmatmul.mubr.bf16.gmra.mxu0 %v2184
        %v2415 = vpop.f32.mrf.mxu0
        %v2416 = vadd.f32 %v2243, %v2415
        %v2417 = vpop.f32.mrf.mxu0
        %v2418 = vpop.f32.mrf.mxu0
        %v2419 = vadd.f32 %v2243, %v2418
        %v2420 = vpop.f32.mrf.mxu0
        %2421 = vmatprep.mubr.bf16.mxu0 %v2187
        %2422 = vmatmul.mubr.bf16.gmra.mxu0 %v2186
        %v2423 = vpop.f32.mrf.mxu0
        %v2424 = vadd.f32 %v2243, %v2423
        %v2425 = vpop.f32.mrf.mxu0
        %v2426 = vpop.f32.mrf.mxu0
        %v2427 = vadd.f32 %v2243, %v2426
        %v2428 = vpop.f32.mrf.mxu0
        %2429 = vmatprep.mubr.bf16.mxu0 %v2189
        %2430 = vmatmul.mubr.bf16.gmra.mxu0 %v2188
        %v2431 = vpop.f32.mrf.mxu0
        %v2432 = vadd.f32 %v2243, %v2431
        %v2433 = vpop.f32.mrf.mxu0
        %v2434 = vpop.f32.mrf.mxu0
        %v2435 = vadd.f32 %v2243, %v2434
        %v2436 = vpop.f32.mrf.mxu0
        %2437 = vmatprep.mubr.bf16.mxu0 %v2191
        %2438 = vmatmul.mubr.bf16.gmra.mxu0 %v2190
        %v2439 = vpop.f32.mrf.mxu0
        %v2440 = vadd.f32 %v2243, %v2439
        %v2441 = vpop.f32.mrf.mxu0
        %v2442 = vpop.f32.mrf.mxu0
        %v2443 = vadd.f32 %v2243, %v2442
        %v2444 = vpop.f32.mrf.mxu0
        %2445 = vmatprep.mubr.bf16.mxu0 %v2193
        %2446 = vmatmul.mubr.bf16.gmra.mxu0 %v2192
        %v2447 = vpop.f32.mrf.mxu0
        %v2448 = vadd.f32 %v2243, %v2447
        %v2449 = vpop.f32.mrf.mxu0
        %v2450 = vpop.f32.mrf.mxu0
        %v2451 = vadd.f32 %v2243, %v2450
        %v2452 = vpop.f32.mrf.mxu0
        %2453 = vmatprep.mubr.bf16.mxu0 %v2195
        %2454 = vmatmul.mubr.bf16.gmra.mxu0 %v2194
        %v2455 = vpop.f32.mrf.mxu0
        %v2456 = vadd.f32 %v2243, %v2455
        %v2457 = vpop.f32.mrf.mxu0
        %v2458 = vpop.f32.mrf.mxu0
        %v2459 = vadd.f32 %v2243, %v2458
        %v2460 = vpop.f32.mrf.mxu0
        %2461 = vmatprep.mubr.bf16.mxu0 %v2197
        %2462 = vmatmul.mubr.bf16.gmra.mxu0 %v2196
        %v2463 = vpop.f32.mrf.mxu0
        %v2464 = vadd.f32 %v2243, %v2463
        %v2465 = vpop.f32.mrf.mxu0
        %v2466 = vpop.f32.mrf.mxu0
        %v2467 = vadd.f32 %v2243, %v2466
        %v2468 = vpop.f32.mrf.mxu0
        %2469 = vmatprep.mubr.bf16.mxu0 %v2199
        %2470 = vmatmul.mubr.bf16.gmra.mxu0 %v2198
        %v2471 = vpop.f32.mrf.mxu0
        %v2472 = vadd.f32 %v2243, %v2471
        %v2473 = vpop.f32.mrf.mxu0
        %v2474 = vpop.f32.mrf.mxu0
        %v2475 = vadd.f32 %v2243, %v2474
        %v2476 = vpop.f32.mrf.mxu0
        %2477 = vmatprep.mubr.bf16.mxu0 %v2201
        %2478 = vmatmul.mubr.bf16.gmra.mxu0 %v2200
        %v2479 = vpop.f32.mrf.mxu0
        %v2480 = vadd.f32 %v2243, %v2479
        %v2481 = vpop.f32.mrf.mxu0
        %v2482 = vpop.f32.mrf.mxu0
        %v2483 = vadd.f32 %v2243, %v2482
        %v2484 = vpop.f32.mrf.mxu0
        %2485 = vmatprep.mubr.bf16.mxu0 %v2203
        %2486 = vmatmul.mubr.bf16.gmra.mxu0 %v2202
        %v2487 = vpop.f32.mrf.mxu0
        %v2488 = vadd.f32 %v2243, %v2487
        %v2489 = vpop.f32.mrf.mxu0
        %v2490 = vpop.f32.mrf.mxu0
        %v2491 = vadd.f32 %v2243, %v2490
        %v2492 = vpop.f32.mrf.mxu0
        %2493 = vmatprep.mubr.bf16.mxu0 %v2205
        %2494 = vmatmul.mubr.bf16.gmra.mxu0 %v2204
        %v2495 = vpop.f32.mrf.mxu0
        %v2496 = vadd.f32 %v2243, %v2495
        %v2497 = vpop.f32.mrf.mxu0
        %v2498 = vpop.f32.mrf.mxu0
        %v2499 = vadd.f32 %v2243, %v2498
        %v2500 = vpop.f32.mrf.mxu0
        %2501 = vdwg.mxu0
        %v2502 = vmax.f32 %v2376, 0.0
        %v2503 = vmax.f32 %v2379, 0.0
        %v2504 = vmax.f32 %v2384, 0.0
        %v2505 = vmax.f32 %v2387, 0.0
        %v2506 = vmax.f32 %v2392, 0.0
        %v2507 = vmax.f32 %v2395, 0.0
        %v2508 = vmax.f32 %v2400, 0.0
        %v2509 = vmax.f32 %v2403, 0.0
        %v2510 = vmax.f32 %v2408, 0.0
        %v2511 = vmax.f32 %v2411, 0.0
        %v2512 = vmax.f32 %v2416, 0.0
        %v2513 = vmax.f32 %v2419, 0.0
        %v2514 = vmax.f32 %v2424, 0.0
        %v2515 = vmax.f32 %v2427, 0.0
        %v2516 = vmax.f32 %v2432, 0.0
        %v2517 = vmax.f32 %v2435, 0.0
        %v2518 = vmax.f32 %v2440, 0.0
        %v2519 = vmax.f32 %v2443, 0.0
        %v2520 = vmax.f32 %v2448, 0.0
        %v2521 = vmax.f32 %v2451, 0.0
        %v2522 = vmax.f32 %v2456, 0.0
        %v2523 = vmax.f32 %v2459, 0.0
        %v2524 = vmax.f32 %v2464, 0.0
        %v2525 = vmax.f32 %v2467, 0.0
        %v2526 = vmax.f32 %v2472, 0.0
        %v2527 = vmax.f32 %v2475, 0.0
        %v2528 = vmax.f32 %v2480, 0.0
        %v2529 = vmax.f32 %v2483, 0.0
        %v2530 = vmax.f32 %v2488, 0.0
        %v2531 = vmax.f32 %v2491, 0.0
        %v2532 = vmax.f32 %v2496, 0.0
        %v2533 = vmax.f32 %v2499, 0.0
        %v2534 = vpack.c.bf16 %v2503, %v2502
        %v2535 = vpack.c.bf16 %v2505, %v2504
        %v2536 = vpack.c.bf16 %v2507, %v2506
        %v2537 = vpack.c.bf16 %v2509, %v2508
        %v2538 = vpack.c.bf16 %v2511, %v2510
        %v2539 = vpack.c.bf16 %v2513, %v2512
        %v2540 = vpack.c.bf16 %v2515, %v2514
        %v2541 = vpack.c.bf16 %v2517, %v2516
        %v2542 = vpack.c.bf16 %v2519, %v2518
        %v2543 = vpack.c.bf16 %v2521, %v2520
        %v2544 = vpack.c.bf16 %v2523, %v2522
        %v2545 = vpack.c.bf16 %v2525, %v2524
        %v2546 = vpack.c.bf16 %v2527, %v2526
        %v2547 = vpack.c.bf16 %v2529, %v2528
        %v2548 = vpack.c.bf16 %v2531, %v2530
        %v2549 = vpack.c.bf16 %v2533, %v2532
        %v2550 = vld [vmem:[#allocation7] sm:$0xf]
        %v2551 = vld [vmem:[#allocation7 + $0x4] sm:$0xf]
        %v2552 = vld [vmem:[#allocation7 + $0x8] sm:$0xf]
        %v2553 = vld [vmem:[#allocation7 + $0xc] sm:$0xf]
        %v2554 = vld [vmem:[#allocation7 + $0x10] sm:$0xf]
        %v2555 = vld [vmem:[#allocation7 + $0x14] sm:$0xf]
        %v2556 = vld [vmem:[#allocation7 + $0x18] sm:$0xf]
        %v2557 = vld [vmem:[#allocation7 + $0x1c] sm:$0xf]
        %v2558 = vld [vmem:[#allocation7 + $0x20] sm:$0xf]
        %v2559 = vld [vmem:[#allocation7 + $0x24] sm:$0xf]
        %v2560 = vld [vmem:[#allocation7 + $0x28] sm:$0xf]
        %v2561 = vld [vmem:[#allocation7 + $0x2c] sm:$0xf]
        %v2562 = vld [vmem:[#allocation7 + $0x30] sm:$0xf]
        %v2563 = vld [vmem:[#allocation7 + $0x34] sm:$0xf]
        %v2564 = vld [vmem:[#allocation7 + $0x38] sm:$0xf]
        %v2565 = vld [vmem:[#allocation7 + $0x3c] sm:$0xf]
        %v2582 = vunpack.c.l.b16 %v2550
        %v2583 = vunpack.c.l.b16 %v2551
        %v2584 = vunpack.c.l.b16 %v2552
        %v2585 = vunpack.c.l.b16 %v2553
        %v2586 = vunpack.c.l.b16 %v2554
        %v2587 = vunpack.c.l.b16 %v2555
        %v2588 = vunpack.c.l.b16 %v2556
        %v2589 = vunpack.c.l.b16 %v2557
        %v2590 = vunpack.c.l.b16 %v2558
        %v2591 = vunpack.c.l.b16 %v2559
        %v2592 = vunpack.c.l.b16 %v2560
        %v2593 = vunpack.c.l.b16 %v2561
        %v2594 = vunpack.c.l.b16 %v2562
        %v2595 = vunpack.c.l.b16 %v2563
        %v2596 = vunpack.c.l.b16 %v2564
        %v2597 = vunpack.c.l.b16 %v2565
        %v2598 = vpack.c.b16 %v2583, %v2582
        %v2599 = vpack.c.b16 %v2585, %v2584
        %v2600 = vpack.c.b16 %v2587, %v2586
        %v2601 = vpack.c.b16 %v2589, %v2588
        %v2602 = vpack.c.b16 %v2591, %v2590
        %v2603 = vpack.c.b16 %v2593, %v2592
        %v2604 = vpack.c.b16 %v2595, %v2594
        %v2605 = vpack.c.b16 %v2597, %v2596
        %2614 = vmatprep.subr.bf16.mxu0 0
        %2615 = vmatpush1.bf16.msra.mxu0 %v2605
        %2616 = vmatprep.subr.bf16.mxu0 0
        %2617 = vmatpush1.bf16.msra.mxu0 %v2604
        %2618 = vmatprep.subr.bf16.mxu0 0
        %2619 = vmatpush1.bf16.msra.mxu0 %v2603
        %2620 = vmatprep.subr.bf16.mxu0 0
        %2621 = vmatpush1.bf16.msra.mxu0 %v2602
        %2622 = vmatprep.subr.bf16.mxu0 0
        %2623 = vmatpush1.bf16.msra.mxu0 %v2601
        %2624 = vmatprep.subr.bf16.mxu0 0
        %2625 = vmatpush1.bf16.msra.mxu0 %v2600
        %2626 = vmatprep.subr.bf16.mxu0 0
        %2627 = vmatpush1.bf16.msra.mxu0 %v2599
        %2628 = vmatprep.subr.bf16.mxu0 0
        %2629 = vmatpush1.bf16.msra.mxu0 %v2598
        %2630 = vmatprep.subr.bf16.mxu0 0
        %2631 = vmatpush2.bf16.msra.mxu0 0
        %2632 = vmatprep.subr.bf16.mxu0 0
        %2633 = vmatpush2.bf16.msra.mxu0 0
        %2634 = vmatprep.subr.bf16.mxu0 0
        %2635 = vmatpush2.bf16.msra.mxu0 0
        %2636 = vmatprep.subr.bf16.mxu0 0
        %2637 = vmatpush2.bf16.msra.mxu0 0
        %2638 = vmatprep.subr.bf16.mxu0 0
        %2639 = vmatpush2.bf16.msra.mxu0 0
        %2640 = vmatprep.subr.bf16.mxu0 0
        %2641 = vmatpush2.bf16.msra.mxu0 0
        %2642 = vmatprep.subr.bf16.mxu0 0
        %2643 = vmatpush2.bf16.msra.mxu0 0
        %2644 = vmatprep.subr.bf16.mxu0 0
        %2645 = vmatpush2.bf16.msra.mxu0 0
        %2646 = vmatprep.mubr.bf16.mxu0 0
        %2647 = vmatmul.mubr.bf16.gmra.mxu0 %v2534
        %v2648 = vpop.f32.mrf.mxu0
        %v2649 = vadd.f32 0.0, %v2648
        %v2650 = vpop.f32.mrf.mxu0
        %v2651 = vpop.f32.mrf.mxu0
        %v2652 = vadd.f32 0.0, %v2651
        %v2653 = vpop.f32.mrf.mxu0
        %2654 = vmatprep.mubr.bf16.mxu0 0
        %2655 = vmatmul.mubr.bf16.gmra.mxu0 %v2535
        %v2656 = vpop.f32.mrf.mxu0
        %v2657 = vadd.f32 0.0, %v2656
        %v2658 = vpop.f32.mrf.mxu0
        %v2659 = vpop.f32.mrf.mxu0
        %v2660 = vadd.f32 0.0, %v2659
        %v2661 = vpop.f32.mrf.mxu0
        %2662 = vmatprep.mubr.bf16.mxu0 0
        %2663 = vmatmul.mubr.bf16.gmra.mxu0 %v2536
        %v2664 = vpop.f32.mrf.mxu0
        %v2665 = vadd.f32 0.0, %v2664
        %v2666 = vpop.f32.mrf.mxu0
        %v2667 = vpop.f32.mrf.mxu0
        %v2668 = vadd.f32 0.0, %v2667
        %v2669 = vpop.f32.mrf.mxu0
        %2670 = vmatprep.mubr.bf16.mxu0 0
        %2671 = vmatmul.mubr.bf16.gmra.mxu0 %v2537
        %v2672 = vpop.f32.mrf.mxu0
        %v2673 = vadd.f32 0.0, %v2672
        %v2674 = vpop.f32.mrf.mxu0
        %v2675 = vpop.f32.mrf.mxu0
        %v2676 = vadd.f32 0.0, %v2675
        %v2677 = vpop.f32.mrf.mxu0
        %2678 = vmatprep.mubr.bf16.mxu0 0
        %2679 = vmatmul.mubr.bf16.gmra.mxu0 %v2538
        %v2680 = vpop.f32.mrf.mxu0
        %v2681 = vadd.f32 0.0, %v2680
        %v2682 = vpop.f32.mrf.mxu0
        %v2683 = vpop.f32.mrf.mxu0
        %v2684 = vadd.f32 0.0, %v2683
        %v2685 = vpop.f32.mrf.mxu0
        %2686 = vmatprep.mubr.bf16.mxu0 0
        %2687 = vmatmul.mubr.bf16.gmra.mxu0 %v2539
        %v2688 = vpop.f32.mrf.mxu0
        %v2689 = vadd.f32 0.0, %v2688
        %v2690 = vpop.f32.mrf.mxu0
        %v2691 = vpop.f32.mrf.mxu0
        %v2692 = vadd.f32 0.0, %v2691
        %v2693 = vpop.f32.mrf.mxu0
        %2694 = vmatprep.mubr.bf16.mxu0 0
        %2695 = vmatmul.mubr.bf16.gmra.mxu0 %v2540
        %v2696 = vpop.f32.mrf.mxu0
        %v2697 = vadd.f32 0.0, %v2696
        %v2698 = vpop.f32.mrf.mxu0
        %v2699 = vpop.f32.mrf.mxu0
        %v2700 = vadd.f32 0.0, %v2699
        %v2701 = vpop.f32.mrf.mxu0
        %2702 = vmatprep.mubr.bf16.mxu0 0
        %2703 = vmatmul.mubr.bf16.gmra.mxu0 %v2541
        %v2704 = vpop.f32.mrf.mxu0
        %v2705 = vadd.f32 0.0, %v2704
        %v2706 = vpop.f32.mrf.mxu0
        %v2707 = vpop.f32.mrf.mxu0
        %v2708 = vadd.f32 0.0, %v2707
        %v2709 = vpop.f32.mrf.mxu0
        %2710 = vmatprep.mubr.bf16.mxu0 0
        %2711 = vmatmul.mubr.bf16.gmra.mxu0 %v2542
        %v2712 = vpop.f32.mrf.mxu0
        %v2713 = vadd.f32 0.0, %v2712
        %v2714 = vpop.f32.mrf.mxu0
        %v2715 = vpop.f32.mrf.mxu0
        %v2716 = vadd.f32 0.0, %v2715
        %v2717 = vpop.f32.mrf.mxu0
        %2718 = vmatprep.mubr.bf16.mxu0 0
        %2719 = vmatmul.mubr.bf16.gmra.mxu0 %v2543
        %v2720 = vpop.f32.mrf.mxu0
        %v2721 = vadd.f32 0.0, %v2720
        %v2722 = vpop.f32.mrf.mxu0
        %v2723 = vpop.f32.mrf.mxu0
        %v2724 = vadd.f32 0.0, %v2723
        %v2725 = vpop.f32.mrf.mxu0
        %2726 = vmatprep.mubr.bf16.mxu0 0
        %2727 = vmatmul.mubr.bf16.gmra.mxu0 %v2544
        %v2728 = vpop.f32.mrf.mxu0
        %v2729 = vadd.f32 0.0, %v2728
        %v2730 = vpop.f32.mrf.mxu0
        %v2731 = vpop.f32.mrf.mxu0
        %v2732 = vadd.f32 0.0, %v2731
        %v2733 = vpop.f32.mrf.mxu0
        %2734 = vmatprep.mubr.bf16.mxu0 0
        %2735 = vmatmul.mubr.bf16.gmra.mxu0 %v2545
        %v2736 = vpop.f32.mrf.mxu0
        %v2737 = vadd.f32 0.0, %v2736
        %v2738 = vpop.f32.mrf.mxu0
        %v2739 = vpop.f32.mrf.mxu0
        %v2740 = vadd.f32 0.0, %v2739
        %v2741 = vpop.f32.mrf.mxu0
        %2742 = vmatprep.mubr.bf16.mxu0 0
        %2743 = vmatmul.mubr.bf16.gmra.mxu0 %v2546
        %v2744 = vpop.f32.mrf.mxu0
        %v2745 = vadd.f32 0.0, %v2744
        %v2746 = vpop.f32.mrf.mxu0
        %v2747 = vpop.f32.mrf.mxu0
        %v2748 = vadd.f32 0.0, %v2747
        %v2749 = vpop.f32.mrf.mxu0
        %2750 = vmatprep.mubr.bf16.mxu0 0
        %2751 = vmatmul.mubr.bf16.gmra.mxu0 %v2547
        %v2752 = vpop.f32.mrf.mxu0
        %v2753 = vadd.f32 0.0, %v2752
        %v2754 = vpop.f32.mrf.mxu0
        %v2755 = vpop.f32.mrf.mxu0
        %v2756 = vadd.f32 0.0, %v2755
        %v2757 = vpop.f32.mrf.mxu0
        %2758 = vmatprep.mubr.bf16.mxu0 0
        %2759 = vmatmul.mubr.bf16.gmra.mxu0 %v2548
        %v2760 = vpop.f32.mrf.mxu0
        %v2761 = vadd.f32 0.0, %v2760
        %v2762 = vpop.f32.mrf.mxu0
        %v2763 = vpop.f32.mrf.mxu0
        %v2764 = vadd.f32 0.0, %v2763
        %v2765 = vpop.f32.mrf.mxu0
        %2766 = vmatprep.mubr.bf16.mxu0 0
        %2767 = vmatmul.mubr.bf16.gmra.mxu0 %v2549
        %v2768 = vpop.f32.mrf.mxu0
        %v2769 = vadd.f32 0.0, %v2768
        %v2770 = vpop.f32.mrf.mxu0
        %v2771 = vpop.f32.mrf.mxu0
        %v2772 = vadd.f32 0.0, %v2771
        %v2773 = vpop.f32.mrf.mxu0
        %2774 = vdwg.mxu0
        %v2775 = vadd.f32 %v246, %v2649
        %v2776 = vadd.f32 %v247, %v2652
        %v2777 = vadd.f32 %v248, %v2657
        %v2778 = vadd.f32 %v249, %v2660
        %v2779 = vadd.f32 %v250, %v2665
        %v2780 = vadd.f32 %v251, %v2668
        %v2781 = vadd.f32 %v252, %v2673
        %v2782 = vadd.f32 %v253, %v2676
        %v2783 = vadd.f32 %v254, %v2681
        %v2784 = vadd.f32 %v255, %v2684
        %v2785 = vadd.f32 %v256, %v2689
        %v2786 = vadd.f32 %v257, %v2692
        %v2787 = vadd.f32 %v258, %v2697
        %v2788 = vadd.f32 %v259, %v2700
        %v2789 = vadd.f32 %v260, %v2705
        %v2790 = vadd.f32 %v261, %v2708
        %v2791 = vadd.f32 %v262, %v2713
        %v2792 = vadd.f32 %v263, %v2716
        %v2793 = vadd.f32 %v264, %v2721
        %v2794 = vadd.f32 %v265, %v2724
        %v2795 = vadd.f32 %v266, %v2729
        %v2796 = vadd.f32 %v267, %v2732
        %v2797 = vadd.f32 %v268, %v2737
        %v2798 = vadd.f32 %v269, %v2740
        %v2799 = vadd.f32 %v270, %v2745
        %v2800 = vadd.f32 %v271, %v2748
        %v2801 = vadd.f32 %v272, %v2753
        %v2802 = vadd.f32 %v273, %v2756
        %v2803 = vadd.f32 %v274, %v2761
        %v2804 = vadd.f32 %v275, %v2764
        %v2805 = vadd.f32 %v276, %v2769
        %v2806 = vadd.f32 %v277, %v2772
        %v2807 = vsel %vm855, %v2805, 0.0
        %v2808 = vsel %vm856, %v2806, 0.0
        %v2809 = vsel %vm857, %v2775, 0.0
        %v2810 = vsel %vm858, %v2776, 0.0
        %v2811 = vsel %vm859, %v2777, 0.0
        %v2812 = vsel %vm860, %v2778, 0.0
        %v2813 = vsel %vm861, %v2779, 0.0
        %v2814 = vsel %vm862, %v2780, 0.0
        %v2815 = vsel %vm863, %v2781, 0.0
        %v2816 = vsel %vm864, %v2782, 0.0
        %v2817 = vsel %vm865, %v2783, 0.0
        %v2818 = vsel %vm866, %v2784, 0.0
        %v2819 = vsel %vm867, %v2785, 0.0
        %v2820 = vsel %vm868, %v2786, 0.0
        %v2821 = vsel %vm869, %v2787, 0.0
        %v2822 = vsel %vm870, %v2788, 0.0
        %v2823 = vsel %vm871, %v2789, 0.0
        %v2824 = vsel %vm872, %v2790, 0.0
        %v2825 = vsel %vm873, %v2791, 0.0
        %v2826 = vsel %vm874, %v2792, 0.0
        %v2827 = vsel %vm875, %v2793, 0.0
        %v2828 = vsel %vm876, %v2794, 0.0
        %v2829 = vsel %vm877, %v2795, 0.0
        %v2830 = vsel %vm878, %v2796, 0.0
        %v2831 = vsel %vm879, %v2797, 0.0
        %v2832 = vsel %vm880, %v2798, 0.0
        %v2833 = vsel %vm881, %v2799, 0.0
        %v2834 = vsel %vm882, %v2800, 0.0
        %v2835 = vsel %vm883, %v2801, 0.0
        %v2836 = vsel %vm884, %v2802, 0.0
        %v2837 = vsel %vm885, %v2803, 0.0
        %v2838 = vsel %vm886, %v2804, 0.0
        %v2839 = vsel %vm951, %v2777, 0.0
        %v2840 = vsel %vm952, %v2778, 0.0
        %v2841 = vsel %vm953, %v2779, 0.0
        %v2842 = vsel %vm954, %v2780, 0.0
        %v2843 = vsel %vm955, %v2781, 0.0
        %v2844 = vsel %vm956, %v2782, 0.0
        %v2845 = vsel %vm957, %v2783, 0.0
        %v2846 = vsel %vm958, %v2784, 0.0
        %v2847 = vsel %vm959, %v2785, 0.0
        %v2848 = vsel %vm960, %v2786, 0.0
        %v2849 = vsel %vm961, %v2787, 0.0
        %v2850 = vsel %vm962, %v2788, 0.0
        %v2851 = vsel %vm963, %v2789, 0.0
        %v2852 = vsel %vm964, %v2790, 0.0
        %v2853 = vsel %vm965, %v2791, 0.0
        %v2854 = vsel %vm966, %v2792, 0.0
        %v2855 = vsel %vm967, %v2793, 0.0
        %v2856 = vsel %vm968, %v2794, 0.0
        %v2857 = vsel %vm969, %v2795, 0.0
        %v2858 = vsel %vm970, %v2796, 0.0
        %v2859 = vsel %vm971, %v2797, 0.0
        %v2860 = vsel %vm972, %v2798, 0.0
        %v2861 = vsel %vm973, %v2799, 0.0
        %v2862 = vsel %vm974, %v2800, 0.0
        %v2863 = vsel %vm975, %v2801, 0.0
        %v2864 = vsel %vm976, %v2802, 0.0
        %v2865 = vsel %vm977, %v2803, 0.0
        %v2866 = vsel %vm978, %v2804, 0.0
        %v2867 = vsel %vm979, %v2805, 0.0
        %v2868 = vsel %vm980, %v2806, 0.0
        %v2869 = vsel %vm981, %v2775, 0.0
        %v2870 = vsel %vm982, %v2776, 0.0
        %2903 = vrot.lane.b32.xlu0 %v2775, 16
        %v2904 = vpop.permute.xlu0 %2903
        %2905 = vrot.lane.b32.xlu0 %v2776, 16
        %v2906 = vpop.permute.xlu0 %2905
        %2907 = vrot.lane.b32.xlu0 %v2777, 16
        %v2908 = vpop.permute.xlu0 %2907
        %2909 = vrot.lane.b32.xlu0 %v2778, 16
        %v2910 = vpop.permute.xlu0 %2909
        %2911 = vrot.lane.b32.xlu0 %v2779, 16
        %v2912 = vpop.permute.xlu0 %2911
        %2913 = vrot.lane.b32.xlu0 %v2780, 16
        %v2914 = vpop.permute.xlu0 %2913
        %2915 = vrot.lane.b32.xlu0 %v2781, 16
        %v2916 = vpop.permute.xlu0 %2915
        %2917 = vrot.lane.b32.xlu0 %v2782, 16
        %v2918 = vpop.permute.xlu0 %2917
        %2919 = vrot.lane.b32.xlu0 %v2783, 16
        %v2920 = vpop.permute.xlu0 %2919
        %2921 = vrot.lane.b32.xlu0 %v2784, 16
        %v2922 = vpop.permute.xlu0 %2921
        %2923 = vrot.lane.b32.xlu0 %v2785, 16
        %v2924 = vpop.permute.xlu0 %2923
        %2925 = vrot.lane.b32.xlu0 %v2786, 16
        %v2926 = vpop.permute.xlu0 %2925
        %2927 = vrot.lane.b32.xlu0 %v2787, 16
        %v2928 = vpop.permute.xlu0 %2927
        %2929 = vrot.lane.b32.xlu0 %v2788, 16
        %v2930 = vpop.permute.xlu0 %2929
        %2931 = vrot.lane.b32.xlu0 %v2789, 16
        %v2932 = vpop.permute.xlu0 %2931
        %2933 = vrot.lane.b32.xlu0 %v2790, 16
        %v2934 = vpop.permute.xlu0 %2933
        %2935 = vrot.lane.b32.xlu0 %v2791, 16
        %v2936 = vpop.permute.xlu0 %2935
        %2937 = vrot.lane.b32.xlu0 %v2792, 16
        %v2938 = vpop.permute.xlu0 %2937
        %2939 = vrot.lane.b32.xlu0 %v2793, 16
        %v2940 = vpop.permute.xlu0 %2939
        %2941 = vrot.lane.b32.xlu0 %v2794, 16
        %v2942 = vpop.permute.xlu0 %2941
        %2943 = vrot.lane.b32.xlu0 %v2795, 16
        %v2944 = vpop.permute.xlu0 %2943
        %2945 = vrot.lane.b32.xlu0 %v2796, 16
        %v2946 = vpop.permute.xlu0 %2945
        %2947 = vrot.lane.b32.xlu0 %v2797, 16
        %v2948 = vpop.permute.xlu0 %2947
        %2949 = vrot.lane.b32.xlu0 %v2798, 16
        %v2950 = vpop.permute.xlu0 %2949
        %2951 = vrot.lane.b32.xlu0 %v2799, 16
        %v2952 = vpop.permute.xlu0 %2951
        %2953 = vrot.lane.b32.xlu0 %v2800, 16
        %v2954 = vpop.permute.xlu0 %2953
        %2955 = vrot.lane.b32.xlu0 %v2801, 16
        %v2956 = vpop.permute.xlu0 %2955
        %2957 = vrot.lane.b32.xlu0 %v2802, 16
        %v2958 = vpop.permute.xlu0 %2957
        %2959 = vrot.lane.b32.xlu0 %v2803, 16
        %v2960 = vpop.permute.xlu0 %2959
        %2961 = vrot.lane.b32.xlu0 %v2804, 16
        %v2962 = vpop.permute.xlu0 %2961
        %2963 = vrot.lane.b32.xlu0 %v2805, 16
        %v2964 = vpop.permute.xlu0 %2963
        %2965 = vrot.lane.b32.xlu0 %v2806, 16
        %v2966 = vpop.permute.xlu0 %2965
        %3031 = vrot.lane.b32.xlu0 %v2839, 32
        %v3032 = vpop.permute.xlu0 %3031
        %3033 = vrot.lane.b32.xlu0 %v2840, 32
        %v3034 = vpop.permute.xlu0 %3033
        %3035 = vrot.lane.b32.xlu0 %v2841, 32
        %v3036 = vpop.permute.xlu0 %3035
        %3037 = vrot.lane.b32.xlu0 %v2842, 32
        %v3038 = vpop.permute.xlu0 %3037
        %3039 = vrot.lane.b32.xlu0 %v2843, 32
        %v3040 = vpop.permute.xlu0 %3039
        %3041 = vrot.lane.b32.xlu0 %v2844, 32
        %v3042 = vpop.permute.xlu0 %3041
        %3043 = vrot.lane.b32.xlu0 %v2845, 32
        %v3044 = vpop.permute.xlu0 %3043
        %3045 = vrot.lane.b32.xlu0 %v2846, 32
        %v3046 = vpop.permute.xlu0 %3045
        %3047 = vrot.lane.b32.xlu0 %v2847, 32
        %v3048 = vpop.permute.xlu0 %3047
        %3049 = vrot.lane.b32.xlu0 %v2848, 32
        %v3050 = vpop.permute.xlu0 %3049
        %3051 = vrot.lane.b32.xlu0 %v2849, 32
        %v3052 = vpop.permute.xlu0 %3051
        %3053 = vrot.lane.b32.xlu0 %v2850, 32
        %v3054 = vpop.permute.xlu0 %3053
        %3055 = vrot.lane.b32.xlu0 %v2851, 32
        %v3056 = vpop.permute.xlu0 %3055
        %3057 = vrot.lane.b32.xlu0 %v2852, 32
        %v3058 = vpop.permute.xlu0 %3057
        %3059 = vrot.lane.b32.xlu0 %v2853, 32
        %v3060 = vpop.permute.xlu0 %3059
        %3061 = vrot.lane.b32.xlu0 %v2854, 32
        %v3062 = vpop.permute.xlu0 %3061
        %3063 = vrot.lane.b32.xlu0 %v2855, 32
        %v3064 = vpop.permute.xlu0 %3063
        %3065 = vrot.lane.b32.xlu0 %v2856, 32
        %v3066 = vpop.permute.xlu0 %3065
        %3067 = vrot.lane.b32.xlu0 %v2857, 32
        %v3068 = vpop.permute.xlu0 %3067
        %3069 = vrot.lane.b32.xlu0 %v2858, 32
        %v3070 = vpop.permute.xlu0 %3069
        %3071 = vrot.lane.b32.xlu0 %v2859, 32
        %v3072 = vpop.permute.xlu0 %3071
        %3073 = vrot.lane.b32.xlu0 %v2860, 32
        %v3074 = vpop.permute.xlu0 %3073
        %3075 = vrot.lane.b32.xlu0 %v2861, 32
        %v3076 = vpop.permute.xlu0 %3075
        %3077 = vrot.lane.b32.xlu0 %v2862, 32
        %v3078 = vpop.permute.xlu0 %3077
        %3079 = vrot.lane.b32.xlu0 %v2863, 32
        %v3080 = vpop.permute.xlu0 %3079
        %3081 = vrot.lane.b32.xlu0 %v2864, 32
        %v3082 = vpop.permute.xlu0 %3081
        %3083 = vrot.lane.b32.xlu0 %v2865, 32
        %v3084 = vpop.permute.xlu0 %3083
        %3085 = vrot.lane.b32.xlu0 %v2866, 32
        %v3086 = vpop.permute.xlu0 %3085
        %3087 = vrot.lane.b32.xlu0 %v2867, 32
        %v3088 = vpop.permute.xlu0 %3087
        %3089 = vrot.lane.b32.xlu0 %v2868, 32
        %v3090 = vpop.permute.xlu0 %3089
        %3091 = vrot.lane.b32.xlu0 %v2869, 32
        %v3092 = vpop.permute.xlu0 %3091
        %3093 = vrot.lane.b32.xlu0 %v2870, 32
        %v3094 = vpop.permute.xlu0 %3093
        %v3127 = vsel %vm1271, %v2807, %v2904
        %v3128 = vsel %vm1271, %v2808, %v2906
        %v3129 = vsel %vm1271, %v2809, %v2908
        %v3130 = vsel %vm1271, %v2810, %v2910
        %v3131 = vsel %vm1271, %v2811, %v2912
        %v3132 = vsel %vm1271, %v2812, %v2914
        %v3133 = vsel %vm1271, %v2813, %v2916
        %v3134 = vsel %vm1271, %v2814, %v2918
        %v3135 = vsel %vm1271, %v2815, %v2920
        %v3136 = vsel %vm1271, %v2816, %v2922
        %v3137 = vsel %vm1271, %v2817, %v2924
        %v3138 = vsel %vm1271, %v2818, %v2926
        %v3139 = vsel %vm1271, %v2819, %v2928
        %v3140 = vsel %vm1271, %v2820, %v2930
        %v3141 = vsel %vm1271, %v2821, %v2932
        %v3142 = vsel %vm1271, %v2822, %v2934
        %v3143 = vsel %vm1271, %v2823, %v2936
        %v3144 = vsel %vm1271, %v2824, %v2938
        %v3145 = vsel %vm1271, %v2825, %v2940
        %v3146 = vsel %vm1271, %v2826, %v2942
        %v3147 = vsel %vm1271, %v2827, %v2944
        %v3148 = vsel %vm1271, %v2828, %v2946
        %v3149 = vsel %vm1271, %v2829, %v2948
        %v3150 = vsel %vm1271, %v2830, %v2950
        %v3151 = vsel %vm1271, %v2831, %v2952
        %v3152 = vsel %vm1271, %v2832, %v2954
        %v3153 = vsel %vm1271, %v2833, %v2956
        %v3154 = vsel %vm1271, %v2834, %v2958
        %v3155 = vsel %vm1271, %v2835, %v2960
        %v3156 = vsel %vm1271, %v2836, %v2962
        %v3157 = vsel %vm1271, %v2837, %v2964
        %v3158 = vsel %vm1271, %v2838, %v2966
        %v3159 = vsel %vm1304, %v3127, %v3032
        %v3160 = vsel %vm1304, %v3128, %v3034
        %v3161 = vsel %vm1304, %v3129, %v3036
        %v3162 = vsel %vm1304, %v3130, %v3038
        %v3163 = vsel %vm1304, %v3131, %v3040
        %v3164 = vsel %vm1304, %v3132, %v3042
        %v3165 = vsel %vm1304, %v3133, %v3044
        %v3166 = vsel %vm1304, %v3134, %v3046
        %v3167 = vsel %vm1304, %v3135, %v3048
        %v3168 = vsel %vm1304, %v3136, %v3050
        %v3169 = vsel %vm1304, %v3137, %v3052
        %v3170 = vsel %vm1304, %v3138, %v3054
        %v3171 = vsel %vm1304, %v3139, %v3056
        %v3172 = vsel %vm1304, %v3140, %v3058
        %v3173 = vsel %vm1304, %v3141, %v3060
        %v3174 = vsel %vm1304, %v3142, %v3062
        %v3175 = vsel %vm1304, %v3143, %v3064
        %v3176 = vsel %vm1304, %v3144, %v3066
        %v3177 = vsel %vm1304, %v3145, %v3068
        %v3178 = vsel %vm1304, %v3146, %v3070
        %v3179 = vsel %vm1304, %v3147, %v3072
        %v3180 = vsel %vm1304, %v3148, %v3074
        %v3181 = vsel %vm1304, %v3149, %v3076
        %v3182 = vsel %vm1304, %v3150, %v3078
        %v3183 = vsel %vm1304, %v3151, %v3080
        %v3184 = vsel %vm1304, %v3152, %v3082
        %v3185 = vsel %vm1304, %v3153, %v3084
        %v3186 = vsel %vm1304, %v3154, %v3086
        %v3187 = vsel %vm1304, %v3155, %v3088
        %v3188 = vsel %vm1304, %v3156, %v3090
        %v3189 = vsel %vm1304, %v3157, %v3092
        %v3190 = vsel %vm1304, %v3158, %v3094
        %v3191 = vrot.slane %v3159, 7
        %v3192 = vrot.slane %v3160, 7
        %v3193 = vrot.slane %v3161, 7
        %v3194 = vrot.slane %v3162, 7
        %v3195 = vrot.slane %v3163, 7
        %v3196 = vrot.slane %v3164, 7
        %v3197 = vrot.slane %v3165, 7
        %v3198 = vrot.slane %v3166, 7
        %v3199 = vrot.slane %v3167, 7
        %v3200 = vrot.slane %v3168, 7
        %v3201 = vrot.slane %v3169, 7
        %v3202 = vrot.slane %v3170, 7
        %v3203 = vrot.slane %v3171, 7
        %v3204 = vrot.slane %v3172, 7
        %v3205 = vrot.slane %v3173, 7
        %v3206 = vrot.slane %v3174, 7
        %v3207 = vrot.slane %v3175, 7
        %v3208 = vrot.slane %v3176, 7
        %v3209 = vrot.slane %v3177, 7
        %v3210 = vrot.slane %v3178, 7
        %v3211 = vrot.slane %v3179, 7
        %v3212 = vrot.slane %v3180, 7
        %v3213 = vrot.slane %v3181, 7
        %v3214 = vrot.slane %v3182, 7
        %v3215 = vrot.slane %v3183, 7
        %v3216 = vrot.slane %v3184, 7
        %v3217 = vrot.slane %v3185, 7
        %v3218 = vrot.slane %v3186, 7
        %v3219 = vrot.slane %v3187, 7
        %v3220 = vrot.slane %v3188, 7
        %v3221 = vrot.slane %v3189, 7
        %v3222 = vrot.slane %v3190, 7
        %v3223 = vsel %vm1369, %v3221, %v3222
        %v3224 = vsel %vm1369, %v3220, %v3221
        %v3225 = vsel %vm1369, %v3219, %v3220
        %v3226 = vsel %vm1369, %v3218, %v3219
        %v3227 = vsel %vm1369, %v3217, %v3218
        %v3228 = vsel %vm1369, %v3216, %v3217
        %v3229 = vsel %vm1369, %v3215, %v3216
        %v3230 = vsel %vm1369, %v3214, %v3215
        %v3231 = vsel %vm1369, %v3213, %v3214
        %v3232 = vsel %vm1369, %v3212, %v3213
        %v3233 = vsel %vm1369, %v3211, %v3212
        %v3234 = vsel %vm1369, %v3210, %v3211
        %v3235 = vsel %vm1369, %v3209, %v3210
        %v3236 = vsel %vm1369, %v3208, %v3209
        %v3237 = vsel %vm1369, %v3207, %v3208
        %v3238 = vsel %vm1369, %v3206, %v3207
        %v3239 = vsel %vm1369, %v3205, %v3206
        %v3240 = vsel %vm1369, %v3204, %v3205
        %v3241 = vsel %vm1369, %v3203, %v3204
        %v3242 = vsel %vm1369, %v3202, %v3203
        %v3243 = vsel %vm1369, %v3201, %v3202
        %v3244 = vsel %vm1369, %v3200, %v3201
        %v3245 = vsel %vm1369, %v3199, %v3200
        %v3246 = vsel %vm1369, %v3198, %v3199
        %v3247 = vsel %vm1369, %v3197, %v3198
        %v3248 = vsel %vm1369, %v3196, %v3197
        %v3249 = vsel %vm1369, %v3195, %v3196
        %v3250 = vsel %vm1369, %v3194, %v3195
        %v3251 = vsel %vm1369, %v3193, %v3194
        %v3252 = vsel %vm1369, %v3192, %v3193
        %v3253 = vsel %vm1369, %v3191, %v3192
        %v3254 = vsel %vm1369, %v3222, %v3191
        %v3255 = vsel %vm1434, %v3254, 0.0
        %v3256 = vsel %vm1435, %v3253, 0.0
        %v3257 = vsel %vm1436, %v3252, 0.0
        %v3258 = vsel %vm1437, %v3251, 0.0
        %v3259 = vsel %vm1438, %v3250, 0.0
        %v3260 = vsel %vm1439, %v3249, 0.0
        %v3261 = vsel %vm1440, %v3248, 0.0
        %v3262 = vsel %vm1441, %v3247, 0.0
        %v3263 = vsel %vm1442, %v3246, 0.0
        %v3264 = vsel %vm1443, %v3245, 0.0
        %v3265 = vsel %vm1444, %v3244, 0.0
        %v3266 = vsel %vm1445, %v3243, 0.0
        %v3267 = vsel %vm1446, %v3242, 0.0
        %v3268 = vsel %vm1447, %v3241, 0.0
        %v3269 = vsel %vm1448, %v3240, 0.0
        %v3270 = vsel %vm1449, %v3239, 0.0
        %v3271 = vsel %vm1450, %v3238, 0.0
        %v3272 = vsel %vm1451, %v3237, 0.0
        %v3273 = vsel %vm1452, %v3236, 0.0
        %v3274 = vsel %vm1453, %v3235, 0.0
        %v3275 = vsel %vm1454, %v3234, 0.0
        %v3276 = vsel %vm1455, %v3233, 0.0
        %v3277 = vsel %vm1456, %v3232, 0.0
        %v3278 = vsel %vm1457, %v3231, 0.0
        %v3279 = vsel %vm1458, %v3230, 0.0
        %v3280 = vsel %vm1459, %v3229, 0.0
        %v3281 = vsel %vm1460, %v3228, 0.0
        %v3282 = vsel %vm1461, %v3227, 0.0
        %v3283 = vsel %vm1462, %v3226, 0.0
        %v3284 = vsel %vm1463, %v3225, 0.0
        %v3285 = vsel %vm1464, %v3224, 0.0
        %v3286 = vsel %vm1465, %v3223, 0.0
        %v3287 = vrot.slane %v3159, 1
        %v3288 = vrot.slane %v3160, 1
        %v3289 = vrot.slane %v3161, 1
        %v3290 = vrot.slane %v3162, 1
        %v3291 = vrot.slane %v3163, 1
        %v3292 = vrot.slane %v3164, 1
        %v3293 = vrot.slane %v3165, 1
        %v3294 = vrot.slane %v3166, 1
        %v3295 = vrot.slane %v3167, 1
        %v3296 = vrot.slane %v3168, 1
        %v3297 = vrot.slane %v3169, 1
        %v3298 = vrot.slane %v3170, 1
        %v3299 = vrot.slane %v3171, 1
        %v3300 = vrot.slane %v3172, 1
        %v3301 = vrot.slane %v3173, 1
        %v3302 = vrot.slane %v3174, 1
        %v3303 = vrot.slane %v3175, 1
        %v3304 = vrot.slane %v3176, 1
        %v3305 = vrot.slane %v3177, 1
        %v3306 = vrot.slane %v3178, 1
        %v3307 = vrot.slane %v3179, 1
        %v3308 = vrot.slane %v3180, 1
        %v3309 = vrot.slane %v3181, 1
        %v3310 = vrot.slane %v3182, 1
        %v3311 = vrot.slane %v3183, 1
        %v3312 = vrot.slane %v3184, 1
        %v3313 = vrot.slane %v3185, 1
        %v3314 = vrot.slane %v3186, 1
        %v3315 = vrot.slane %v3187, 1
        %v3316 = vrot.slane %v3188, 1
        %v3317 = vrot.slane %v3189, 1
        %v3318 = vrot.slane %v3190, 1
        %v3319 = vsel %vm1530, %v3317, %v3318
        %v3320 = vsel %vm1530, %v3316, %v3317
        %v3321 = vsel %vm1530, %v3315, %v3316
        %v3322 = vsel %vm1530, %v3314, %v3315
        %v3323 = vsel %vm1530, %v3313, %v3314
        %v3324 = vsel %vm1530, %v3312, %v3313
        %v3325 = vsel %vm1530, %v3311, %v3312
        %v3326 = vsel %vm1530, %v3310, %v3311
        %v3327 = vsel %vm1530, %v3309, %v3310
        %v3328 = vsel %vm1530, %v3308, %v3309
        %v3329 = vsel %vm1530, %v3307, %v3308
        %v3330 = vsel %vm1530, %v3306, %v3307
        %v3331 = vsel %vm1530, %v3305, %v3306
        %v3332 = vsel %vm1530, %v3304, %v3305
        %v3333 = vsel %vm1530, %v3303, %v3304
        %v3334 = vsel %vm1530, %v3302, %v3303
        %v3335 = vsel %vm1530, %v3301, %v3302
        %v3336 = vsel %vm1530, %v3300, %v3301
        %v3337 = vsel %vm1530, %v3299, %v3300
        %v3338 = vsel %vm1530, %v3298, %v3299
        %v3339 = vsel %vm1530, %v3297, %v3298
        %v3340 = vsel %vm1530, %v3296, %v3297
        %v3341 = vsel %vm1530, %v3295, %v3296
        %v3342 = vsel %vm1530, %v3294, %v3295
        %v3343 = vsel %vm1530, %v3293, %v3294
        %v3344 = vsel %vm1530, %v3292, %v3293
        %v3345 = vsel %vm1530, %v3291, %v3292
        %v3346 = vsel %vm1530, %v3290, %v3291
        %v3347 = vsel %vm1530, %v3289, %v3290
        %v3348 = vsel %vm1530, %v3288, %v3289
        %v3349 = vsel %vm1530, %v3287, %v3288
        %v3350 = vsel %vm1530, %v3318, %v3287
        %v3351 = vsel %vm1595, %v3349, 0.0
        %v3352 = vsel %vm1596, %v3348, 0.0
        %v3353 = vsel %vm1597, %v3347, 0.0
        %v3354 = vsel %vm1598, %v3346, 0.0
        %v3355 = vsel %vm1599, %v3345, 0.0
        %v3356 = vsel %vm1600, %v3344, 0.0
        %v3357 = vsel %vm1601, %v3343, 0.0
        %v3358 = vsel %vm1602, %v3342, 0.0
        %v3359 = vsel %vm1603, %v3341, 0.0
        %v3360 = vsel %vm1604, %v3340, 0.0
        %v3361 = vsel %vm1605, %v3339, 0.0
        %v3362 = vsel %vm1606, %v3338, 0.0
        %v3363 = vsel %vm1607, %v3337, 0.0
        %v3364 = vsel %vm1608, %v3336, 0.0
        %v3365 = vsel %vm1609, %v3335, 0.0
        %v3366 = vsel %vm1610, %v3334, 0.0
        %v3367 = vsel %vm1611, %v3333, 0.0
        %v3368 = vsel %vm1612, %v3332, 0.0
        %v3369 = vsel %vm1613, %v3331, 0.0
        %v3370 = vsel %vm1614, %v3330, 0.0
        %v3371 = vsel %vm1615, %v3329, 0.0
        %v3372 = vsel %vm1616, %v3328, 0.0
        %v3373 = vsel %vm1617, %v3327, 0.0
        %v3374 = vsel %vm1618, %v3326, 0.0
        %v3375 = vsel %vm1619, %v3325, 0.0
        %v3376 = vsel %vm1620, %v3324, 0.0
        %v3377 = vsel %vm1621, %v3323, 0.0
        %v3378 = vsel %vm1622, %v3322, 0.0
        %v3379 = vsel %vm1623, %v3321, 0.0
        %v3380 = vsel %vm1624, %v3320, 0.0
        %v3381 = vsel %vm1625, %v3319, 0.0
        %v3382 = vsel %vm1626, %v3350, 0.0
        %3415 = vrot.lane.b32.xlu0 %v3255, 64
        %v3416 = vpop.permute.xlu0 %3415
        %3417 = vrot.lane.b32.xlu0 %v3256, 64
        %v3418 = vpop.permute.xlu0 %3417
        %3419 = vrot.lane.b32.xlu0 %v3257, 64
        %v3420 = vpop.permute.xlu0 %3419
        %3421 = vrot.lane.b32.xlu0 %v3258, 64
        %v3422 = vpop.permute.xlu0 %3421
        %3423 = vrot.lane.b32.xlu0 %v3259, 64
        %v3424 = vpop.permute.xlu0 %3423
        %3425 = vrot.lane.b32.xlu0 %v3260, 64
        %v3426 = vpop.permute.xlu0 %3425
        %3427 = vrot.lane.b32.xlu0 %v3261, 64
        %v3428 = vpop.permute.xlu0 %3427
        %3429 = vrot.lane.b32.xlu0 %v3262, 64
        %v3430 = vpop.permute.xlu0 %3429
        %3431 = vrot.lane.b32.xlu0 %v3263, 64
        %v3432 = vpop.permute.xlu0 %3431
        %3433 = vrot.lane.b32.xlu0 %v3264, 64
        %v3434 = vpop.permute.xlu0 %3433
        %3435 = vrot.lane.b32.xlu0 %v3265, 64
        %v3436 = vpop.permute.xlu0 %3435
        %3437 = vrot.lane.b32.xlu0 %v3266, 64
        %v3438 = vpop.permute.xlu0 %3437
        %3439 = vrot.lane.b32.xlu0 %v3267, 64
        %v3440 = vpop.permute.xlu0 %3439
        %3441 = vrot.lane.b32.xlu0 %v3268, 64
        %v3442 = vpop.permute.xlu0 %3441
        %3443 = vrot.lane.b32.xlu0 %v3269, 64
        %v3444 = vpop.permute.xlu0 %3443
        %3445 = vrot.lane.b32.xlu0 %v3270, 64
        %v3446 = vpop.permute.xlu0 %3445
        %3447 = vrot.lane.b32.xlu0 %v3271, 64
        %v3448 = vpop.permute.xlu0 %3447
        %3449 = vrot.lane.b32.xlu0 %v3272, 64
        %v3450 = vpop.permute.xlu0 %3449
        %3451 = vrot.lane.b32.xlu0 %v3273, 64
        %v3452 = vpop.permute.xlu0 %3451
        %3453 = vrot.lane.b32.xlu0 %v3274, 64
        %v3454 = vpop.permute.xlu0 %3453
        %3455 = vrot.lane.b32.xlu0 %v3275, 64
        %v3456 = vpop.permute.xlu0 %3455
        %3457 = vrot.lane.b32.xlu0 %v3276, 64
        %v3458 = vpop.permute.xlu0 %3457
        %3459 = vrot.lane.b32.xlu0 %v3277, 64
        %v3460 = vpop.permute.xlu0 %3459
        %3461 = vrot.lane.b32.xlu0 %v3278, 64
        %v3462 = vpop.permute.xlu0 %3461
        %3463 = vrot.lane.b32.xlu0 %v3279, 64
        %v3464 = vpop.permute.xlu0 %3463
        %3465 = vrot.lane.b32.xlu0 %v3280, 64
        %v3466 = vpop.permute.xlu0 %3465
        %3467 = vrot.lane.b32.xlu0 %v3281, 64
        %v3468 = vpop.permute.xlu0 %3467
        %3469 = vrot.lane.b32.xlu0 %v3282, 64
        %v3470 = vpop.permute.xlu0 %3469
        %3471 = vrot.lane.b32.xlu0 %v3283, 64
        %v3472 = vpop.permute.xlu0 %3471
        %3473 = vrot.lane.b32.xlu0 %v3284, 64
        %v3474 = vpop.permute.xlu0 %3473
        %3475 = vrot.lane.b32.xlu0 %v3285, 64
        %v3476 = vpop.permute.xlu0 %3475
        %3477 = vrot.lane.b32.xlu0 %v3286, 64
        %v3478 = vpop.permute.xlu0 %3477
        %3543 = vrot.lane.b32.xlu0 %v3159, 112
        %v3544 = vpop.permute.xlu0 %3543
        %3545 = vrot.lane.b32.xlu0 %v3160, 112
        %v3546 = vpop.permute.xlu0 %3545
        %3547 = vrot.lane.b32.xlu0 %v3161, 112
        %v3548 = vpop.permute.xlu0 %3547
        %3549 = vrot.lane.b32.xlu0 %v3162, 112
        %v3550 = vpop.permute.xlu0 %3549
        %3551 = vrot.lane.b32.xlu0 %v3163, 112
        %v3552 = vpop.permute.xlu0 %3551
        %3553 = vrot.lane.b32.xlu0 %v3164, 112
        %v3554 = vpop.permute.xlu0 %3553
        %3555 = vrot.lane.b32.xlu0 %v3165, 112
        %v3556 = vpop.permute.xlu0 %3555
        %3557 = vrot.lane.b32.xlu0 %v3166, 112
        %v3558 = vpop.permute.xlu0 %3557
        %3559 = vrot.lane.b32.xlu0 %v3167, 112
        %v3560 = vpop.permute.xlu0 %3559
        %3561 = vrot.lane.b32.xlu0 %v3168, 112
        %v3562 = vpop.permute.xlu0 %3561
        %3563 = vrot.lane.b32.xlu0 %v3169, 112
        %v3564 = vpop.permute.xlu0 %3563
        %3565 = vrot.lane.b32.xlu0 %v3170, 112
        %v3566 = vpop.permute.xlu0 %3565
        %3567 = vrot.lane.b32.xlu0 %v3171, 112
        %v3568 = vpop.permute.xlu0 %3567
        %3569 = vrot.lane.b32.xlu0 %v3172, 112
        %v3570 = vpop.permute.xlu0 %3569
        %3571 = vrot.lane.b32.xlu0 %v3173, 112
        %v3572 = vpop.permute.xlu0 %3571
        %3573 = vrot.lane.b32.xlu0 %v3174, 112
        %v3574 = vpop.permute.xlu0 %3573
        %3575 = vrot.lane.b32.xlu0 %v3175, 112
        %v3576 = vpop.permute.xlu0 %3575
        %3577 = vrot.lane.b32.xlu0 %v3176, 112
        %v3578 = vpop.permute.xlu0 %3577
        %3579 = vrot.lane.b32.xlu0 %v3177, 112
        %v3580 = vpop.permute.xlu0 %3579
        %3581 = vrot.lane.b32.xlu0 %v3178, 112
        %v3582 = vpop.permute.xlu0 %3581
        %3583 = vrot.lane.b32.xlu0 %v3179, 112
        %v3584 = vpop.permute.xlu0 %3583
        %3585 = vrot.lane.b32.xlu0 %v3180, 112
        %v3586 = vpop.permute.xlu0 %3585
        %3587 = vrot.lane.b32.xlu0 %v3181, 112
        %v3588 = vpop.permute.xlu0 %3587
        %3589 = vrot.lane.b32.xlu0 %v3182, 112
        %v3590 = vpop.permute.xlu0 %3589
        %3591 = vrot.lane.b32.xlu0 %v3183, 112
        %v3592 = vpop.permute.xlu0 %3591
        %3593 = vrot.lane.b32.xlu0 %v3184, 112
        %v3594 = vpop.permute.xlu0 %3593
        %3595 = vrot.lane.b32.xlu0 %v3185, 112
        %v3596 = vpop.permute.xlu0 %3595
        %3597 = vrot.lane.b32.xlu0 %v3186, 112
        %v3598 = vpop.permute.xlu0 %3597
        %3599 = vrot.lane.b32.xlu0 %v3187, 112
        %v3600 = vpop.permute.xlu0 %3599
        %3601 = vrot.lane.b32.xlu0 %v3188, 112
        %v3602 = vpop.permute.xlu0 %3601
        %3603 = vrot.lane.b32.xlu0 %v3189, 112
        %v3604 = vpop.permute.xlu0 %3603
        %3605 = vrot.lane.b32.xlu0 %v3190, 112
        %v3606 = vpop.permute.xlu0 %3605
        %3671 = vrot.lane.b32.xlu0 %v3351, 32
        %v3672 = vpop.permute.xlu0 %3671
        %3673 = vrot.lane.b32.xlu0 %v3352, 32
        %v3674 = vpop.permute.xlu0 %3673
        %3675 = vrot.lane.b32.xlu0 %v3353, 32
        %v3676 = vpop.permute.xlu0 %3675
        %3677 = vrot.lane.b32.xlu0 %v3354, 32
        %v3678 = vpop.permute.xlu0 %3677
        %3679 = vrot.lane.b32.xlu0 %v3355, 32
        %v3680 = vpop.permute.xlu0 %3679
        %3681 = vrot.lane.b32.xlu0 %v3356, 32
        %v3682 = vpop.permute.xlu0 %3681
        %3683 = vrot.lane.b32.xlu0 %v3357, 32
        %v3684 = vpop.permute.xlu0 %3683
        %3685 = vrot.lane.b32.xlu0 %v3358, 32
        %v3686 = vpop.permute.xlu0 %3685
        %3687 = vrot.lane.b32.xlu0 %v3359, 32
        %v3688 = vpop.permute.xlu0 %3687
        %3689 = vrot.lane.b32.xlu0 %v3360, 32
        %v3690 = vpop.permute.xlu0 %3689
        %3691 = vrot.lane.b32.xlu0 %v3361, 32
        %v3692 = vpop.permute.xlu0 %3691
        %3693 = vrot.lane.b32.xlu0 %v3362, 32
        %v3694 = vpop.permute.xlu0 %3693
        %3695 = vrot.lane.b32.xlu0 %v3363, 32
        %v3696 = vpop.permute.xlu0 %3695
        %3697 = vrot.lane.b32.xlu0 %v3364, 32
        %v3698 = vpop.permute.xlu0 %3697
        %3699 = vrot.lane.b32.xlu0 %v3365, 32
        %v3700 = vpop.permute.xlu0 %3699
        %3701 = vrot.lane.b32.xlu0 %v3366, 32
        %v3702 = vpop.permute.xlu0 %3701
        %3703 = vrot.lane.b32.xlu0 %v3367, 32
        %v3704 = vpop.permute.xlu0 %3703
        %3705 = vrot.lane.b32.xlu0 %v3368, 32
        %v3706 = vpop.permute.xlu0 %3705
        %3707 = vrot.lane.b32.xlu0 %v3369, 32
        %v3708 = vpop.permute.xlu0 %3707
        %3709 = vrot.lane.b32.xlu0 %v3370, 32
        %v3710 = vpop.permute.xlu0 %3709
        %3711 = vrot.lane.b32.xlu0 %v3371, 32
        %v3712 = vpop.permute.xlu0 %3711
        %3713 = vrot.lane.b32.xlu0 %v3372, 32
        %v3714 = vpop.permute.xlu0 %3713
        %3715 = vrot.lane.b32.xlu0 %v3373, 32
        %v3716 = vpop.permute.xlu0 %3715
        %3717 = vrot.lane.b32.xlu0 %v3374, 32
        %v3718 = vpop.permute.xlu0 %3717
        %3719 = vrot.lane.b32.xlu0 %v3375, 32
        %v3720 = vpop.permute.xlu0 %3719
        %3721 = vrot.lane.b32.xlu0 %v3376, 32
        %v3722 = vpop.permute.xlu0 %3721
        %3723 = vrot.lane.b32.xlu0 %v3377, 32
        %v3724 = vpop.permute.xlu0 %3723
        %3725 = vrot.lane.b32.xlu0 %v3378, 32
        %v3726 = vpop.permute.xlu0 %3725
        %3727 = vrot.lane.b32.xlu0 %v3379, 32
        %v3728 = vpop.permute.xlu0 %3727
        %3729 = vrot.lane.b32.xlu0 %v3380, 32
        %v3730 = vpop.permute.xlu0 %3729
        %3731 = vrot.lane.b32.xlu0 %v3381, 32
        %v3732 = vpop.permute.xlu0 %3731
        %3733 = vrot.lane.b32.xlu0 %v3382, 32
        %v3734 = vpop.permute.xlu0 %3733
        %v3767 = vsel %vm2043, %v2775, %v3416
        %v3768 = vsel %vm2043, %v2776, %v3418
        %v3769 = vsel %vm2043, %v2777, %v3420
        %v3770 = vsel %vm2043, %v2778, %v3422
        %v3771 = vsel %vm2043, %v2779, %v3424
        %v3772 = vsel %vm2043, %v2780, %v3426
        %v3773 = vsel %vm2043, %v2781, %v3428
        %v3774 = vsel %vm2043, %v2782, %v3430
        %v3775 = vsel %vm2043, %v2783, %v3432
        %v3776 = vsel %vm2043, %v2784, %v3434
        %v3777 = vsel %vm2043, %v2785, %v3436
        %v3778 = vsel %vm2043, %v2786, %v3438
        %v3779 = vsel %vm2043, %v2787, %v3440
        %v3780 = vsel %vm2043, %v2788, %v3442
        %v3781 = vsel %vm2043, %v2789, %v3444
        %v3782 = vsel %vm2043, %v2790, %v3446
        %v3783 = vsel %vm2043, %v2791, %v3448
        %v3784 = vsel %vm2043, %v2792, %v3450
        %v3785 = vsel %vm2043, %v2793, %v3452
        %v3786 = vsel %vm2043, %v2794, %v3454
        %v3787 = vsel %vm2043, %v2795, %v3456
        %v3788 = vsel %vm2043, %v2796, %v3458
        %v3789 = vsel %vm2043, %v2797, %v3460
        %v3790 = vsel %vm2043, %v2798, %v3462
        %v3791 = vsel %vm2043, %v2799, %v3464
        %v3792 = vsel %vm2043, %v2800, %v3466
        %v3793 = vsel %vm2043, %v2801, %v3468
        %v3794 = vsel %vm2043, %v2802, %v3470
        %v3795 = vsel %vm2043, %v2803, %v3472
        %v3796 = vsel %vm2043, %v2804, %v3474
        %v3797 = vsel %vm2043, %v2805, %v3476
        %v3798 = vsel %vm2043, %v2806, %v3478
        %v3799 = vsel %vm2076, %v3767, %v3544
        %v3800 = vsel %vm2076, %v3768, %v3546
        %v3801 = vsel %vm2076, %v3769, %v3548
        %v3802 = vsel %vm2076, %v3770, %v3550
        %v3803 = vsel %vm2076, %v3771, %v3552
        %v3804 = vsel %vm2076, %v3772, %v3554
        %v3805 = vsel %vm2076, %v3773, %v3556
        %v3806 = vsel %vm2076, %v3774, %v3558
        %v3807 = vsel %vm2076, %v3775, %v3560
        %v3808 = vsel %vm2076, %v3776, %v3562
        %v3809 = vsel %vm2076, %v3777, %v3564
        %v3810 = vsel %vm2076, %v3778, %v3566
        %v3811 = vsel %vm2076, %v3779, %v3568
        %v3812 = vsel %vm2076, %v3780, %v3570
        %v3813 = vsel %vm2076, %v3781, %v3572
        %v3814 = vsel %vm2076, %v3782, %v3574
        %v3815 = vsel %vm2076, %v3783, %v3576
        %v3816 = vsel %vm2076, %v3784, %v3578
        %v3817 = vsel %vm2076, %v3785, %v3580
        %v3818 = vsel %vm2076, %v3786, %v3582
        %v3819 = vsel %vm2076, %v3787, %v3584
        %v3820 = vsel %vm2076, %v3788, %v3586
        %v3821 = vsel %vm2076, %v3789, %v3588
        %v3822 = vsel %vm2076, %v3790, %v3590
        %v3823 = vsel %vm2076, %v3791, %v3592
        %v3824 = vsel %vm2076, %v3792, %v3594
        %v3825 = vsel %vm2076, %v3793, %v3596
        %v3826 = vsel %vm2076, %v3794, %v3598
        %v3827 = vsel %vm2076, %v3795, %v3600
        %v3828 = vsel %vm2076, %v3796, %v3602
        %v3829 = vsel %vm2076, %v3797, %v3604
        %v3830 = vsel %vm2076, %v3798, %v3606
        %v3831 = vsel %vm1304, %v3544, %v3672
        %v3832 = vsel %vm1304, %v3546, %v3674
        %v3833 = vsel %vm1304, %v3548, %v3676
        %v3834 = vsel %vm1304, %v3550, %v3678
        %v3835 = vsel %vm1304, %v3552, %v3680
        %v3836 = vsel %vm1304, %v3554, %v3682
        %v3837 = vsel %vm1304, %v3556, %v3684
        %v3838 = vsel %vm1304, %v3558, %v3686
        %v3839 = vsel %vm1304, %v3560, %v3688
        %v3840 = vsel %vm1304, %v3562, %v3690
        %v3841 = vsel %vm1304, %v3564, %v3692
        %v3842 = vsel %vm1304, %v3566, %v3694
        %v3843 = vsel %vm1304, %v3568, %v3696
        %v3844 = vsel %vm1304, %v3570, %v3698
        %v3845 = vsel %vm1304, %v3572, %v3700
        %v3846 = vsel %vm1304, %v3574, %v3702
        %v3847 = vsel %vm1304, %v3576, %v3704
        %v3848 = vsel %vm1304, %v3578, %v3706
        %v3849 = vsel %vm1304, %v3580, %v3708
        %v3850 = vsel %vm1304, %v3582, %v3710
        %v3851 = vsel %vm1304, %v3584, %v3712
        %v3852 = vsel %vm1304, %v3586, %v3714
        %v3853 = vsel %vm1304, %v3588, %v3716
        %v3854 = vsel %vm1304, %v3590, %v3718
        %v3855 = vsel %vm1304, %v3592, %v3720
        %v3856 = vsel %vm1304, %v3594, %v3722
        %v3857 = vsel %vm1304, %v3596, %v3724
        %v3858 = vsel %vm1304, %v3598, %v3726
        %v3859 = vsel %vm1304, %v3600, %v3728
        %v3860 = vsel %vm1304, %v3602, %v3730
        %v3861 = vsel %vm1304, %v3604, %v3732
        %v3862 = vsel %vm1304, %v3606, %v3734
        %v3863 = vsel %vm2141, %v3831, 0.0
        %v3864 = vsel %vm2141, %v3832, 0.0
        %v3865 = vsel %vm2141, %v3833, 0.0
        %v3866 = vsel %vm2141, %v3834, 0.0
        %v3867 = vsel %vm2141, %v3835, 0.0
        %v3868 = vsel %vm2141, %v3836, 0.0
        %v3869 = vsel %vm2141, %v3837, 0.0
        %v3870 = vsel %vm2141, %v3838, 0.0
        %v3871 = vsel %vm2141, %v3839, 0.0
        %v3872 = vsel %vm2141, %v3840, 0.0
        %v3873 = vsel %vm2141, %v3841, 0.0
        %v3874 = vsel %vm2141, %v3842, 0.0
        %v3875 = vsel %vm2141, %v3843, 0.0
        %v3876 = vsel %vm2141, %v3844, 0.0
        %v3877 = vsel %vm2141, %v3845, 0.0
        %v3878 = vsel %vm2141, %v3846, 0.0
        %v3879 = vsel %vm2141, %v3847, 0.0
        %v3880 = vsel %vm2141, %v3848, 0.0
        %v3881 = vsel %vm2141, %v3849, 0.0
        %v3882 = vsel %vm2141, %v3850, 0.0
        %v3883 = vsel %vm2141, %v3851, 0.0
        %v3884 = vsel %vm2141, %v3852, 0.0
        %v3885 = vsel %vm2141, %v3853, 0.0
        %v3886 = vsel %vm2141, %v3854, 0.0
        %v3887 = vsel %vm2141, %v3855, 0.0
        %v3888 = vsel %vm2141, %v3856, 0.0
        %v3889 = vsel %vm2141, %v3857, 0.0
        %v3890 = vsel %vm2141, %v3858, 0.0
        %v3891 = vsel %vm2141, %v3859, 0.0
        %v3892 = vsel %vm2141, %v3860, 0.0
        %v3893 = vsel %vm2141, %v3861, 0.0
        %v3894 = vsel %vm2141, %v3862, 0.0
        %v3895 = vpack.c.bf16 %v3800, %v3799
        %v3896 = vpack.c.bf16 %v3864, %v3863
        %v3897 = vpack.c.bf16 %v3802, %v3801
        %v3898 = vpack.c.bf16 %v3866, %v3865
        %v3899 = vpack.c.bf16 %v3804, %v3803
        %v3900 = vpack.c.bf16 %v3868, %v3867
        %v3901 = vpack.c.bf16 %v3806, %v3805
        %v3902 = vpack.c.bf16 %v3870, %v3869
        %v3903 = vpack.c.bf16 %v3808, %v3807
        %v3904 = vpack.c.bf16 %v3872, %v3871
        %v3905 = vpack.c.bf16 %v3810, %v3809
        %v3906 = vpack.c.bf16 %v3874, %v3873
        %v3907 = vpack.c.bf16 %v3812, %v3811
        %v3908 = vpack.c.bf16 %v3876, %v3875
        %v3909 = vpack.c.bf16 %v3814, %v3813
        %v3910 = vpack.c.bf16 %v3878, %v3877
        %v3911 = vpack.c.bf16 %v3816, %v3815
        %v3912 = vpack.c.bf16 %v3880, %v3879
        %v3913 = vpack.c.bf16 %v3818, %v3817
        %v3914 = vpack.c.bf16 %v3882, %v3881
        %v3915 = vpack.c.bf16 %v3820, %v3819
        %v3916 = vpack.c.bf16 %v3884, %v3883
        %v3917 = vpack.c.bf16 %v3822, %v3821
        %v3918 = vpack.c.bf16 %v3886, %v3885
        %v3919 = vpack.c.bf16 %v3824, %v3823
        %v3920 = vpack.c.bf16 %v3888, %v3887
        %v3921 = vpack.c.bf16 %v3826, %v3825
        %v3922 = vpack.c.bf16 %v3890, %v3889
        %v3923 = vpack.c.bf16 %v3828, %v3827
        %v3924 = vpack.c.bf16 %v3892, %v3891
        %v3925 = vpack.c.bf16 %v3830, %v3829
        %v3926 = vpack.c.bf16 %v3894, %v3893
        %s3927 = scalar_lea.vmem [#allocation5], 128
        %v3928 = vld [vmem:[%s3927] sm:$0xf]
        %v3929 = vld [vmem:[%s3927 + $0x4] sm:$0xf]
        %v3930 = vld [vmem:[%s3927 + $0x8] sm:$0xf]
        %v3931 = vld [vmem:[%s3927 + $0xc] sm:$0xf]
        %v3932 = vld [vmem:[%s3927 + $0x10] sm:$0xf]
        %v3933 = vld [vmem:[%s3927 + $0x14] sm:$0xf]
        %v3934 = vld [vmem:[%s3927 + $0x18] sm:$0xf]
        %v3935 = vld [vmem:[%s3927 + $0x1c] sm:$0xf]
        %v3936 = vld [vmem:[%s3927 + $0x20] sm:$0xf]
        %v3937 = vld [vmem:[%s3927 + $0x24] sm:$0xf]
        %v3938 = vld [vmem:[%s3927 + $0x28] sm:$0xf]
        %v3939 = vld [vmem:[%s3927 + $0x2c] sm:$0xf]
        %v3940 = vld [vmem:[%s3927 + $0x30] sm:$0xf]
        %v3941 = vld [vmem:[%s3927 + $0x34] sm:$0xf]
        %v3942 = vld [vmem:[%s3927 + $0x38] sm:$0xf]
        %v3943 = vld [vmem:[%s3927 + $0x3c] sm:$0xf]
        %v3944 = vld [vmem:[%s3927 + $0x40] sm:$0xf]
        %v3945 = vld [vmem:[%s3927 + $0x44] sm:$0xf]
        %v3946 = vld [vmem:[%s3927 + $0x48] sm:$0xf]
        %v3947 = vld [vmem:[%s3927 + $0x4c] sm:$0xf]
        %v3948 = vld [vmem:[%s3927 + $0x50] sm:$0xf]
        %v3949 = vld [vmem:[%s3927 + $0x54] sm:$0xf]
        %v3950 = vld [vmem:[%s3927 + $0x58] sm:$0xf]
        %v3951 = vld [vmem:[%s3927 + $0x5c] sm:$0xf]
        %v3952 = vld [vmem:[%s3927 + $0x60] sm:$0xf]
        %v3953 = vld [vmem:[%s3927 + $0x64] sm:$0xf]
        %v3954 = vld [vmem:[%s3927 + $0x68] sm:$0xf]
        %v3955 = vld [vmem:[%s3927 + $0x6c] sm:$0xf]
        %v3956 = vld [vmem:[%s3927 + $0x70] sm:$0xf]
        %v3957 = vld [vmem:[%s3927 + $0x74] sm:$0xf]
        %v3958 = vld [vmem:[%s3927 + $0x78] sm:$0xf]
        %v3959 = vld [vmem:[%s3927 + $0x7c] sm:$0xf]
        %s3960 = scalar_lea.vmem %s2, 1
        %v3961 = vld [vmem:[%s3960] sm:$0x1]
        %v3963 = vlaneseq
        %v3964 = vshrl.u32 %v3963, 7
        %v3965 = vsub.s32 0, %v3964
        %v3966 = vrot.slane %v3961, %v3965
        %v4000 = vunpack.c.l.b16 %v3928
        %v4001 = vunpack.c.l.b16 %v3929
        %v4002 = vunpack.c.l.b16 %v3930
        %v4003 = vunpack.c.l.b16 %v3931
        %v4004 = vunpack.c.l.b16 %v3932
        %v4005 = vunpack.c.l.b16 %v3933
        %v4006 = vunpack.c.l.b16 %v3934
        %v4007 = vunpack.c.l.b16 %v3935
        %v4008 = vunpack.c.l.b16 %v3936
        %v4009 = vunpack.c.l.b16 %v3937
        %v4010 = vunpack.c.l.b16 %v3938
        %v4011 = vunpack.c.l.b16 %v3939
        %v4012 = vunpack.c.l.b16 %v3940
        %v4013 = vunpack.c.l.b16 %v3941
        %v4014 = vunpack.c.l.b16 %v3942
        %v4015 = vunpack.c.l.b16 %v3943
        %v4016 = vunpack.c.l.b16 %v3944
        %v4017 = vunpack.c.l.b16 %v3945
        %v4018 = vunpack.c.l.b16 %v3946
        %v4019 = vunpack.c.l.b16 %v3947
        %v4020 = vunpack.c.l.b16 %v3948
        %v4021 = vunpack.c.l.b16 %v3949
        %v4022 = vunpack.c.l.b16 %v3950
        %v4023 = vunpack.c.l.b16 %v3951
        %v4024 = vunpack.c.l.b16 %v3952
        %v4025 = vunpack.c.l.b16 %v3953
        %v4026 = vunpack.c.l.b16 %v3954
        %v4027 = vunpack.c.l.b16 %v3955
        %v4028 = vunpack.c.l.b16 %v3956
        %v4029 = vunpack.c.l.b16 %v3957
        %v4030 = vunpack.c.l.b16 %v3958
        %v4031 = vunpack.c.l.b16 %v3959
        %v4032 = vpack.c.b16 %v4001, %v4000
        %v4033 = vpack.c.b16 %v4003, %v4002
        %v4034 = vpack.c.b16 %v4005, %v4004
        %v4035 = vpack.c.b16 %v4007, %v4006
        %v4036 = vpack.c.b16 %v4009, %v4008
        %v4037 = vpack.c.b16 %v4011, %v4010
        %v4038 = vpack.c.b16 %v4013, %v4012
        %v4039 = vpack.c.b16 %v4015, %v4014
        %v4040 = vpack.c.b16 %v4017, %v4016
        %v4041 = vpack.c.b16 %v4019, %v4018
        %v4042 = vpack.c.b16 %v4021, %v4020
        %v4043 = vpack.c.b16 %v4023, %v4022
        %v4044 = vpack.c.b16 %v4025, %v4024
        %v4045 = vpack.c.b16 %v4027, %v4026
        %v4046 = vpack.c.b16 %v4029, %v4028
        %v4047 = vpack.c.b16 %v4031, %v4030
        %4064 = vmatprep.subr.bf16.mxu0 0
        %4065 = vmatpush1.bf16.msra.mxu0 %v4039
        %4066 = vmatprep.subr.bf16.mxu0 0
        %4067 = vmatpush1.bf16.msra.mxu0 %v4038
        %4068 = vmatprep.subr.bf16.mxu0 0
        %4069 = vmatpush1.bf16.msra.mxu0 %v4037
        %4070 = vmatprep.subr.bf16.mxu0 0
        %4071 = vmatpush1.bf16.msra.mxu0 %v4036
        %4072 = vmatprep.subr.bf16.mxu0 0
        %4073 = vmatpush1.bf16.msra.mxu0 %v4035
        %4074 = vmatprep.subr.bf16.mxu0 0
        %4075 = vmatpush1.bf16.msra.mxu0 %v4034
        %4076 = vmatprep.subr.bf16.mxu0 0
        %4077 = vmatpush1.bf16.msra.mxu0 %v4033
        %4078 = vmatprep.subr.bf16.mxu0 0
        %4079 = vmatpush1.bf16.msra.mxu0 %v4032
        %4080 = vmatprep.subr.bf16.mxu0 0
        %4081 = vmatpush2.bf16.msra.mxu0 %v4047
        %4082 = vmatprep.subr.bf16.mxu0 0
        %4083 = vmatpush2.bf16.msra.mxu0 %v4046
        %4084 = vmatprep.subr.bf16.mxu0 0
        %4085 = vmatpush2.bf16.msra.mxu0 %v4045
        %4086 = vmatprep.subr.bf16.mxu0 0
        %4087 = vmatpush2.bf16.msra.mxu0 %v4044
        %4088 = vmatprep.subr.bf16.mxu0 0
        %4089 = vmatpush2.bf16.msra.mxu0 %v4043
        %4090 = vmatprep.subr.bf16.mxu0 0
        %4091 = vmatpush2.bf16.msra.mxu0 %v4042
        %4092 = vmatprep.subr.bf16.mxu0 0
        %4093 = vmatpush2.bf16.msra.mxu0 %v4041
        %4094 = vmatprep.subr.bf16.mxu0 0
        %4095 = vmatpush2.bf16.msra.mxu0 %v4040
        %4096 = vmatprep.mubr.bf16.mxu0 %v3896
        %4097 = vmatmul.mubr.bf16.gmra.mxu0 %v3895
        %v4098 = vpop.f32.mrf.mxu0
        %v4099 = vadd.f32 %v3966, %v4098
        %v4100 = vpop.f32.mrf.mxu0
        %v4101 = vpop.f32.mrf.mxu0
        %v4102 = vadd.f32 %v3966, %v4101
        %v4103 = vpop.f32.mrf.mxu0
        %4104 = vmatprep.mubr.bf16.mxu0 %v3898
        %4105 = vmatmul.mubr.bf16.gmra.mxu0 %v3897
        %v4106 = vpop.f32.mrf.mxu0
        %v4107 = vadd.f32 %v3966, %v4106
        %v4108 = vpop.f32.mrf.mxu0
        %v4109 = vpop.f32.mrf.mxu0
        %v4110 = vadd.f32 %v3966, %v4109
        %v4111 = vpop.f32.mrf.mxu0
        %4112 = vmatprep.mubr.bf16.mxu0 %v3900
        %4113 = vmatmul.mubr.bf16.gmra.mxu0 %v3899
        %v4114 = vpop.f32.mrf.mxu0
        %v4115 = vadd.f32 %v3966, %v4114
        %v4116 = vpop.f32.mrf.mxu0
        %v4117 = vpop.f32.mrf.mxu0
        %v4118 = vadd.f32 %v3966, %v4117
        %v4119 = vpop.f32.mrf.mxu0
        %4120 = vmatprep.mubr.bf16.mxu0 %v3902
        %4121 = vmatmul.mubr.bf16.gmra.mxu0 %v3901
        %v4122 = vpop.f32.mrf.mxu0
        %v4123 = vadd.f32 %v3966, %v4122
        %v4124 = vpop.f32.mrf.mxu0
        %v4125 = vpop.f32.mrf.mxu0
        %v4126 = vadd.f32 %v3966, %v4125
        %v4127 = vpop.f32.mrf.mxu0
        %4128 = vmatprep.mubr.bf16.mxu0 %v3904
        %4129 = vmatmul.mubr.bf16.gmra.mxu0 %v3903
        %v4130 = vpop.f32.mrf.mxu0
        %v4131 = vadd.f32 %v3966, %v4130
        %v4132 = vpop.f32.mrf.mxu0
        %v4133 = vpop.f32.mrf.mxu0
        %v4134 = vadd.f32 %v3966, %v4133
        %v4135 = vpop.f32.mrf.mxu0
        %4136 = vmatprep.mubr.bf16.mxu0 %v3906
        %4137 = vmatmul.mubr.bf16.gmra.mxu0 %v3905
        %v4138 = vpop.f32.mrf.mxu0
        %v4139 = vadd.f32 %v3966, %v4138
        %v4140 = vpop.f32.mrf.mxu0
        %v4141 = vpop.f32.mrf.mxu0
        %v4142 = vadd.f32 %v3966, %v4141
        %v4143 = vpop.f32.mrf.mxu0
        %4144 = vmatprep.mubr.bf16.mxu0 %v3908
        %4145 = vmatmul.mubr.bf16.gmra.mxu0 %v3907
        %v4146 = vpop.f32.mrf.mxu0
        %v4147 = vadd.f32 %v3966, %v4146
        %v4148 = vpop.f32.mrf.mxu0
        %v4149 = vpop.f32.mrf.mxu0
        %v4150 = vadd.f32 %v3966, %v4149
        %v4151 = vpop.f32.mrf.mxu0
        %4152 = vmatprep.mubr.bf16.mxu0 %v3910
        %4153 = vmatmul.mubr.bf16.gmra.mxu0 %v3909
        %v4154 = vpop.f32.mrf.mxu0
        %v4155 = vadd.f32 %v3966, %v4154
        %v4156 = vpop.f32.mrf.mxu0
        %v4157 = vpop.f32.mrf.mxu0
        %v4158 = vadd.f32 %v3966, %v4157
        %v4159 = vpop.f32.mrf.mxu0
        %4160 = vmatprep.mubr.bf16.mxu0 %v3912
        %4161 = vmatmul.mubr.bf16.gmra.mxu0 %v3911
        %v4162 = vpop.f32.mrf.mxu0
        %v4163 = vadd.f32 %v3966, %v4162
        %v4164 = vpop.f32.mrf.mxu0
        %v4165 = vpop.f32.mrf.mxu0
        %v4166 = vadd.f32 %v3966, %v4165
        %v4167 = vpop.f32.mrf.mxu0
        %4168 = vmatprep.mubr.bf16.mxu0 %v3914
        %4169 = vmatmul.mubr.bf16.gmra.mxu0 %v3913
        %v4170 = vpop.f32.mrf.mxu0
        %v4171 = vadd.f32 %v3966, %v4170
        %v4172 = vpop.f32.mrf.mxu0
        %v4173 = vpop.f32.mrf.mxu0
        %v4174 = vadd.f32 %v3966, %v4173
        %v4175 = vpop.f32.mrf.mxu0
        %4176 = vmatprep.mubr.bf16.mxu0 %v3916
        %4177 = vmatmul.mubr.bf16.gmra.mxu0 %v3915
        %v4178 = vpop.f32.mrf.mxu0
        %v4179 = vadd.f32 %v3966, %v4178
        %v4180 = vpop.f32.mrf.mxu0
        %v4181 = vpop.f32.mrf.mxu0
        %v4182 = vadd.f32 %v3966, %v4181
        %v4183 = vpop.f32.mrf.mxu0
        %4184 = vmatprep.mubr.bf16.mxu0 %v3918
        %4185 = vmatmul.mubr.bf16.gmra.mxu0 %v3917
        %v4186 = vpop.f32.mrf.mxu0
        %v4187 = vadd.f32 %v3966, %v4186
        %v4188 = vpop.f32.mrf.mxu0
        %v4189 = vpop.f32.mrf.mxu0
        %v4190 = vadd.f32 %v3966, %v4189
        %v4191 = vpop.f32.mrf.mxu0
        %4192 = vmatprep.mubr.bf16.mxu0 %v3920
        %4193 = vmatmul.mubr.bf16.gmra.mxu0 %v3919
        %v4194 = vpop.f32.mrf.mxu0
        %v4195 = vadd.f32 %v3966, %v4194
        %v4196 = vpop.f32.mrf.mxu0
        %v4197 = vpop.f32.mrf.mxu0
        %v4198 = vadd.f32 %v3966, %v4197
        %v4199 = vpop.f32.mrf.mxu0
        %4200 = vmatprep.mubr.bf16.mxu0 %v3922
        %4201 = vmatmul.mubr.bf16.gmra.mxu0 %v3921
        %v4202 = vpop.f32.mrf.mxu0
        %v4203 = vadd.f32 %v3966, %v4202
        %v4204 = vpop.f32.mrf.mxu0
        %v4205 = vpop.f32.mrf.mxu0
        %v4206 = vadd.f32 %v3966, %v4205
        %v4207 = vpop.f32.mrf.mxu0
        %4208 = vmatprep.mubr.bf16.mxu0 %v3924
        %4209 = vmatmul.mubr.bf16.gmra.mxu0 %v3923
        %v4210 = vpop.f32.mrf.mxu0
        %v4211 = vadd.f32 %v3966, %v4210
        %v4212 = vpop.f32.mrf.mxu0
        %v4213 = vpop.f32.mrf.mxu0
        %v4214 = vadd.f32 %v3966, %v4213
        %v4215 = vpop.f32.mrf.mxu0
        %4216 = vmatprep.mubr.bf16.mxu0 %v3926
        %4217 = vmatmul.mubr.bf16.gmra.mxu0 %v3925
        %v4218 = vpop.f32.mrf.mxu0
        %v4219 = vadd.f32 %v3966, %v4218
        %v4220 = vpop.f32.mrf.mxu0
        %v4221 = vpop.f32.mrf.mxu0
        %v4222 = vadd.f32 %v3966, %v4221
        %v4223 = vpop.f32.mrf.mxu0
        %4224 = vdwg.mxu0
        %v4225 = vmax.f32 %v4099, 0.0
        %v4226 = vmax.f32 %v4102, 0.0
        %v4227 = vmax.f32 %v4107, 0.0
        %v4228 = vmax.f32 %v4110, 0.0
        %v4229 = vmax.f32 %v4115, 0.0
        %v4230 = vmax.f32 %v4118, 0.0
        %v4231 = vmax.f32 %v4123, 0.0
        %v4232 = vmax.f32 %v4126, 0.0
        %v4233 = vmax.f32 %v4131, 0.0
        %v4234 = vmax.f32 %v4134, 0.0
        %v4235 = vmax.f32 %v4139, 0.0
        %v4236 = vmax.f32 %v4142, 0.0
        %v4237 = vmax.f32 %v4147, 0.0
        %v4238 = vmax.f32 %v4150, 0.0
        %v4239 = vmax.f32 %v4155, 0.0
        %v4240 = vmax.f32 %v4158, 0.0
        %v4241 = vmax.f32 %v4163, 0.0
        %v4242 = vmax.f32 %v4166, 0.0
        %v4243 = vmax.f32 %v4171, 0.0
        %v4244 = vmax.f32 %v4174, 0.0
        %v4245 = vmax.f32 %v4179, 0.0
        %v4246 = vmax.f32 %v4182, 0.0
        %v4247 = vmax.f32 %v4187, 0.0
        %v4248 = vmax.f32 %v4190, 0.0
        %v4249 = vmax.f32 %v4195, 0.0
        %v4250 = vmax.f32 %v4198, 0.0
        %v4251 = vmax.f32 %v4203, 0.0
        %v4252 = vmax.f32 %v4206, 0.0
        %v4253 = vmax.f32 %v4211, 0.0
        %v4254 = vmax.f32 %v4214, 0.0
        %v4255 = vmax.f32 %v4219, 0.0
        %v4256 = vmax.f32 %v4222, 0.0
        %v4257 = vpack.c.bf16 %v4226, %v4225
        %v4258 = vpack.c.bf16 %v4228, %v4227
        %v4259 = vpack.c.bf16 %v4230, %v4229
        %v4260 = vpack.c.bf16 %v4232, %v4231
        %v4261 = vpack.c.bf16 %v4234, %v4233
        %v4262 = vpack.c.bf16 %v4236, %v4235
        %v4263 = vpack.c.bf16 %v4238, %v4237
        %v4264 = vpack.c.bf16 %v4240, %v4239
        %v4265 = vpack.c.bf16 %v4242, %v4241
        %v4266 = vpack.c.bf16 %v4244, %v4243
        %v4267 = vpack.c.bf16 %v4246, %v4245
        %v4268 = vpack.c.bf16 %v4248, %v4247
        %v4269 = vpack.c.bf16 %v4250, %v4249
        %v4270 = vpack.c.bf16 %v4252, %v4251
        %v4271 = vpack.c.bf16 %v4254, %v4253
        %v4272 = vpack.c.bf16 %v4256, %v4255
        %s4273 = scalar_lea.vmem [#allocation7], 64
        %v4274 = vld [vmem:[%s4273] sm:$0xf]
        %v4275 = vld [vmem:[%s4273 + $0x4] sm:$0xf]
        %v4276 = vld [vmem:[%s4273 + $0x8] sm:$0xf]
        %v4277 = vld [vmem:[%s4273 + $0xc] sm:$0xf]
        %v4278 = vld [vmem:[%s4273 + $0x10] sm:$0xf]
        %v4279 = vld [vmem:[%s4273 + $0x14] sm:$0xf]
        %v4280 = vld [vmem:[%s4273 + $0x18] sm:$0xf]
        %v4281 = vld [vmem:[%s4273 + $0x1c] sm:$0xf]
        %v4282 = vld [vmem:[%s4273 + $0x20] sm:$0xf]
        %v4283 = vld [vmem:[%s4273 + $0x24] sm:$0xf]
        %v4284 = vld [vmem:[%s4273 + $0x28] sm:$0xf]
        %v4285 = vld [vmem:[%s4273 + $0x2c] sm:$0xf]
        %v4286 = vld [vmem:[%s4273 + $0x30] sm:$0xf]
        %v4287 = vld [vmem:[%s4273 + $0x34] sm:$0xf]
        %v4288 = vld [vmem:[%s4273 + $0x38] sm:$0xf]
        %v4289 = vld [vmem:[%s4273 + $0x3c] sm:$0xf]
        %v4306 = vunpack.c.l.b16 %v4274
        %v4307 = vunpack.c.l.b16 %v4275
        %v4308 = vunpack.c.l.b16 %v4276
        %v4309 = vunpack.c.l.b16 %v4277
        %v4310 = vunpack.c.l.b16 %v4278
        %v4311 = vunpack.c.l.b16 %v4279
        %v4312 = vunpack.c.l.b16 %v4280
        %v4313 = vunpack.c.l.b16 %v4281
        %v4314 = vunpack.c.l.b16 %v4282
        %v4315 = vunpack.c.l.b16 %v4283
        %v4316 = vunpack.c.l.b16 %v4284
        %v4317 = vunpack.c.l.b16 %v4285
        %v4318 = vunpack.c.l.b16 %v4286
        %v4319 = vunpack.c.l.b16 %v4287
        %v4320 = vunpack.c.l.b16 %v4288
        %v4321 = vunpack.c.l.b16 %v4289
        %v4322 = vpack.c.b16 %v4307, %v4306
        %v4323 = vpack.c.b16 %v4309, %v4308
        %v4324 = vpack.c.b16 %v4311, %v4310
        %v4325 = vpack.c.b16 %v4313, %v4312
        %v4326 = vpack.c.b16 %v4315, %v4314
        %v4327 = vpack.c.b16 %v4317, %v4316
        %v4328 = vpack.c.b16 %v4319, %v4318
        %v4329 = vpack.c.b16 %v4321, %v4320
        %4338 = vmatprep.subr.bf16.mxu0 0
        %4339 = vmatpush1.bf16.msra.mxu0 %v4329
        %4340 = vmatprep.subr.bf16.mxu0 0
        %4341 = vmatpush1.bf16.msra.mxu0 %v4328
        %4342 = vmatprep.subr.bf16.mxu0 0
        %4343 = vmatpush1.bf16.msra.mxu0 %v4327
        %4344 = vmatprep.subr.bf16.mxu0 0
        %4345 = vmatpush1.bf16.msra.mxu0 %v4326
        %4346 = vmatprep.subr.bf16.mxu0 0
        %4347 = vmatpush1.bf16.msra.mxu0 %v4325
        %4348 = vmatprep.subr.bf16.mxu0 0
        %4349 = vmatpush1.bf16.msra.mxu0 %v4324
        %4350 = vmatprep.subr.bf16.mxu0 0
        %4351 = vmatpush1.bf16.msra.mxu0 %v4323
        %4352 = vmatprep.subr.bf16.mxu0 0
        %4353 = vmatpush1.bf16.msra.mxu0 %v4322
        %4354 = vmatprep.subr.bf16.mxu0 0
        %4355 = vmatpush2.bf16.msra.mxu0 0
        %4356 = vmatprep.subr.bf16.mxu0 0
        %4357 = vmatpush2.bf16.msra.mxu0 0
        %4358 = vmatprep.subr.bf16.mxu0 0
        %4359 = vmatpush2.bf16.msra.mxu0 0
        %4360 = vmatprep.subr.bf16.mxu0 0
        %4361 = vmatpush2.bf16.msra.mxu0 0
        %4362 = vmatprep.subr.bf16.mxu0 0
        %4363 = vmatpush2.bf16.msra.mxu0 0
        %4364 = vmatprep.subr.bf16.mxu0 0
        %4365 = vmatpush2.bf16.msra.mxu0 0
        %4366 = vmatprep.subr.bf16.mxu0 0
        %4367 = vmatpush2.bf16.msra.mxu0 0
        %4368 = vmatprep.subr.bf16.mxu0 0
        %4369 = vmatpush2.bf16.msra.mxu0 0
        %4370 = vmatprep.mubr.bf16.mxu0 0
        %4371 = vmatmul.mubr.bf16.gmra.mxu0 %v4257
        %v4372 = vpop.f32.mrf.mxu0
        %v4373 = vadd.f32 0.0, %v4372
        %v4374 = vpop.f32.mrf.mxu0
        %v4375 = vpop.f32.mrf.mxu0
        %v4376 = vadd.f32 0.0, %v4375
        %v4377 = vpop.f32.mrf.mxu0
        %4378 = vmatprep.mubr.bf16.mxu0 0
        %4379 = vmatmul.mubr.bf16.gmra.mxu0 %v4258
        %v4380 = vpop.f32.mrf.mxu0
        %v4381 = vadd.f32 0.0, %v4380
        %v4382 = vpop.f32.mrf.mxu0
        %v4383 = vpop.f32.mrf.mxu0
        %v4384 = vadd.f32 0.0, %v4383
        %v4385 = vpop.f32.mrf.mxu0
        %4386 = vmatprep.mubr.bf16.mxu0 0
        %4387 = vmatmul.mubr.bf16.gmra.mxu0 %v4259
        %v4388 = vpop.f32.mrf.mxu0
        %v4389 = vadd.f32 0.0, %v4388
        %v4390 = vpop.f32.mrf.mxu0
        %v4391 = vpop.f32.mrf.mxu0
        %v4392 = vadd.f32 0.0, %v4391
        %v4393 = vpop.f32.mrf.mxu0
        %4394 = vmatprep.mubr.bf16.mxu0 0
        %4395 = vmatmul.mubr.bf16.gmra.mxu0 %v4260
        %v4396 = vpop.f32.mrf.mxu0
        %v4397 = vadd.f32 0.0, %v4396
        %v4398 = vpop.f32.mrf.mxu0
        %v4399 = vpop.f32.mrf.mxu0
        %v4400 = vadd.f32 0.0, %v4399
        %v4401 = vpop.f32.mrf.mxu0
        %4402 = vmatprep.mubr.bf16.mxu0 0
        %4403 = vmatmul.mubr.bf16.gmra.mxu0 %v4261
        %v4404 = vpop.f32.mrf.mxu0
        %v4405 = vadd.f32 0.0, %v4404
        %v4406 = vpop.f32.mrf.mxu0
        %v4407 = vpop.f32.mrf.mxu0
        %v4408 = vadd.f32 0.0, %v4407
        %v4409 = vpop.f32.mrf.mxu0
        %4410 = vmatprep.mubr.bf16.mxu0 0
        %4411 = vmatmul.mubr.bf16.gmra.mxu0 %v4262
        %v4412 = vpop.f32.mrf.mxu0
        %v4413 = vadd.f32 0.0, %v4412
        %v4414 = vpop.f32.mrf.mxu0
        %v4415 = vpop.f32.mrf.mxu0
        %v4416 = vadd.f32 0.0, %v4415
        %v4417 = vpop.f32.mrf.mxu0
        %4418 = vmatprep.mubr.bf16.mxu0 0
        %4419 = vmatmul.mubr.bf16.gmra.mxu0 %v4263
        %v4420 = vpop.f32.mrf.mxu0
        %v4421 = vadd.f32 0.0, %v4420
        %v4422 = vpop.f32.mrf.mxu0
        %v4423 = vpop.f32.mrf.mxu0
        %v4424 = vadd.f32 0.0, %v4423
        %v4425 = vpop.f32.mrf.mxu0
        %4426 = vmatprep.mubr.bf16.mxu0 0
        %4427 = vmatmul.mubr.bf16.gmra.mxu0 %v4264
        %v4428 = vpop.f32.mrf.mxu0
        %v4429 = vadd.f32 0.0, %v4428
        %v4430 = vpop.f32.mrf.mxu0
        %v4431 = vpop.f32.mrf.mxu0
        %v4432 = vadd.f32 0.0, %v4431
        %v4433 = vpop.f32.mrf.mxu0
        %4434 = vmatprep.mubr.bf16.mxu0 0
        %4435 = vmatmul.mubr.bf16.gmra.mxu0 %v4265
        %v4436 = vpop.f32.mrf.mxu0
        %v4437 = vadd.f32 0.0, %v4436
        %v4438 = vpop.f32.mrf.mxu0
        %v4439 = vpop.f32.mrf.mxu0
        %v4440 = vadd.f32 0.0, %v4439
        %v4441 = vpop.f32.mrf.mxu0
        %4442 = vmatprep.mubr.bf16.mxu0 0
        %4443 = vmatmul.mubr.bf16.gmra.mxu0 %v4266
        %v4444 = vpop.f32.mrf.mxu0
        %v4445 = vadd.f32 0.0, %v4444
        %v4446 = vpop.f32.mrf.mxu0
        %v4447 = vpop.f32.mrf.mxu0
        %v4448 = vadd.f32 0.0, %v4447
        %v4449 = vpop.f32.mrf.mxu0
        %4450 = vmatprep.mubr.bf16.mxu0 0
        %4451 = vmatmul.mubr.bf16.gmra.mxu0 %v4267
        %v4452 = vpop.f32.mrf.mxu0
        %v4453 = vadd.f32 0.0, %v4452
        %v4454 = vpop.f32.mrf.mxu0
        %v4455 = vpop.f32.mrf.mxu0
        %v4456 = vadd.f32 0.0, %v4455
        %v4457 = vpop.f32.mrf.mxu0
        %4458 = vmatprep.mubr.bf16.mxu0 0
        %4459 = vmatmul.mubr.bf16.gmra.mxu0 %v4268
        %v4460 = vpop.f32.mrf.mxu0
        %v4461 = vadd.f32 0.0, %v4460
        %v4462 = vpop.f32.mrf.mxu0
        %v4463 = vpop.f32.mrf.mxu0
        %v4464 = vadd.f32 0.0, %v4463
        %v4465 = vpop.f32.mrf.mxu0
        %4466 = vmatprep.mubr.bf16.mxu0 0
        %4467 = vmatmul.mubr.bf16.gmra.mxu0 %v4269
        %v4468 = vpop.f32.mrf.mxu0
        %v4469 = vadd.f32 0.0, %v4468
        %v4470 = vpop.f32.mrf.mxu0
        %v4471 = vpop.f32.mrf.mxu0
        %v4472 = vadd.f32 0.0, %v4471
        %v4473 = vpop.f32.mrf.mxu0
        %4474 = vmatprep.mubr.bf16.mxu0 0
        %4475 = vmatmul.mubr.bf16.gmra.mxu0 %v4270
        %v4476 = vpop.f32.mrf.mxu0
        %v4477 = vadd.f32 0.0, %v4476
        %v4478 = vpop.f32.mrf.mxu0
        %v4479 = vpop.f32.mrf.mxu0
        %v4480 = vadd.f32 0.0, %v4479
        %v4481 = vpop.f32.mrf.mxu0
        %4482 = vmatprep.mubr.bf16.mxu0 0
        %4483 = vmatmul.mubr.bf16.gmra.mxu0 %v4271
        %v4484 = vpop.f32.mrf.mxu0
        %v4485 = vadd.f32 0.0, %v4484
        %v4486 = vpop.f32.mrf.mxu0
        %v4487 = vpop.f32.mrf.mxu0
        %v4488 = vadd.f32 0.0, %v4487
        %v4489 = vpop.f32.mrf.mxu0
        %4490 = vmatprep.mubr.bf16.mxu0 0
        %4491 = vmatmul.mubr.bf16.gmra.mxu0 %v4272
        %v4492 = vpop.f32.mrf.mxu0
        %v4493 = vadd.f32 0.0, %v4492
        %v4494 = vpop.f32.mrf.mxu0
        %v4495 = vpop.f32.mrf.mxu0
        %v4496 = vadd.f32 0.0, %v4495
        %v4497 = vpop.f32.mrf.mxu0
        %4498 = vdwg.mxu0
        %v4499 = vadd.f32 %v2775, %v4373
        %v4500 = vadd.f32 %v2776, %v4376
        %v4501 = vadd.f32 %v2777, %v4381
        %v4502 = vadd.f32 %v2778, %v4384
        %v4503 = vadd.f32 %v2779, %v4389
        %v4504 = vadd.f32 %v2780, %v4392
        %v4505 = vadd.f32 %v2781, %v4397
        %v4506 = vadd.f32 %v2782, %v4400
        %v4507 = vadd.f32 %v2783, %v4405
        %v4508 = vadd.f32 %v2784, %v4408
        %v4509 = vadd.f32 %v2785, %v4413
        %v4510 = vadd.f32 %v2786, %v4416
        %v4511 = vadd.f32 %v2787, %v4421
        %v4512 = vadd.f32 %v2788, %v4424
        %v4513 = vadd.f32 %v2789, %v4429
        %v4514 = vadd.f32 %v2790, %v4432
        %v4515 = vadd.f32 %v2791, %v4437
        %v4516 = vadd.f32 %v2792, %v4440
        %v4517 = vadd.f32 %v2793, %v4445
        %v4518 = vadd.f32 %v2794, %v4448
        %v4519 = vadd.f32 %v2795, %v4453
        %v4520 = vadd.f32 %v2796, %v4456
        %v4521 = vadd.f32 %v2797, %v4461
        %v4522 = vadd.f32 %v2798, %v4464
        %v4523 = vadd.f32 %v2799, %v4469
        %v4524 = vadd.f32 %v2800, %v4472
        %v4525 = vadd.f32 %v2801, %v4477
        %v4526 = vadd.f32 %v2802, %v4480
        %v4527 = vadd.f32 %v2803, %v4485
        %v4528 = vadd.f32 %v2804, %v4488
        %v4529 = vadd.f32 %v2805, %v4493
        %v4530 = vadd.f32 %v2806, %v4496
        %4531 = vst.msk [vmem:[%s244] sm:$0xff] %vm2043, %v4499
        %4532 = vst.msk [vmem:[%s244 + $0x8] sm:$0xff] %vm2043, %v4500
        %4533 = vst.msk [vmem:[%s244 + $0x10] sm:$0xff] %vm2043, %v4501
        %4534 = vst.msk [vmem:[%s244 + $0x18] sm:$0xff] %vm2043, %v4502
        %4535 = vst.msk [vmem:[%s244 + $0x20] sm:$0xff] %vm2043, %v4503
        %4536 = vst.msk [vmem:[%s244 + $0x28] sm:$0xff] %vm2043, %v4504
        %4537 = vst.msk [vmem:[%s244 + $0x30] sm:$0xff] %vm2043, %v4505
        %4538 = vst.msk [vmem:[%s244 + $0x38] sm:$0xff] %vm2043, %v4506
        %4539 = vst.msk [vmem:[%s244 + $0x40] sm:$0xff] %vm2043, %v4507
        %4540 = vst.msk [vmem:[%s244 + $0x48] sm:$0xff] %vm2043, %v4508
        %4541 = vst.msk [vmem:[%s244 + $0x50] sm:$0xff] %vm2043, %v4509
        %4542 = vst.msk [vmem:[%s244 + $0x58] sm:$0xff] %vm2043, %v4510
        %4543 = vst.msk [vmem:[%s244 + $0x60] sm:$0xff] %vm2043, %v4511
        %4544 = vst.msk [vmem:[%s244 + $0x68] sm:$0xff] %vm2043, %v4512
        %4545 = vst.msk [vmem:[%s244 + $0x70] sm:$0xff] %vm2043, %v4513
        %4546 = vst.msk [vmem:[%s244 + $0x78] sm:$0xff] %vm2043, %v4514
        %4547 = vst.msk [vmem:[%s244 + $0x80] sm:$0xff] %vm2043, %v4515
        %4548 = vst.msk [vmem:[%s244 + $0x88] sm:$0xff] %vm2043, %v4516
        %4549 = vst.msk [vmem:[%s244 + $0x90] sm:$0xff] %vm2043, %v4517
        %4550 = vst.msk [vmem:[%s244 + $0x98] sm:$0xff] %vm2043, %v4518
        %4551 = vst.msk [vmem:[%s244 + $0xa0] sm:$0xff] %vm2043, %v4519
        %4552 = vst.msk [vmem:[%s244 + $0xa8] sm:$0xff] %vm2043, %v4520
        %4553 = vst.msk [vmem:[%s244 + $0xb0] sm:$0xff] %vm2043, %v4521
        %4554 = vst.msk [vmem:[%s244 + $0xb8] sm:$0xff] %vm2043, %v4522
        %4555 = vst.msk [vmem:[%s244 + $0xc0] sm:$0xff] %vm2043, %v4523
        %4556 = vst.msk [vmem:[%s244 + $0xc8] sm:$0xff] %vm2043, %v4524
        %4557 = vst.msk [vmem:[%s244 + $0xd0] sm:$0xff] %vm2043, %v4525
        %4558 = vst.msk [vmem:[%s244 + $0xd8] sm:$0xff] %vm2043, %v4526
        %4559 = vst.msk [vmem:[%s244 + $0xe0] sm:$0xff] %vm2043, %v4527
        %4560 = vst.msk [vmem:[%s244 + $0xe8] sm:$0xff] %vm2043, %v4528
        %4561 = vst.msk [vmem:[%s244 + $0xf0] sm:$0xff] %vm2043, %v4529
        %4562 = vst.msk [vmem:[%s244 + $0xf8] sm:$0xff] %vm2043, %v4530
        %s4563 = sand.u32 %s119, 1
        %s4564 = scalar_lea.sflag [#allocation4], %s4563
        %s4565 = sand.u32 %s119, 1
        %s4566 = smul.addr %s4565, 256
        %s4567 = scalar_lea.vmem [#allocation8], %s4566
        // Predicated region
        $region49: #{basic_stage.1} parent=35 // pred_check
          %p4568 = pneg %p129
        $region50: #{basic_stage.1} parent=35 // pred_check_branch
          %4570 = sbr.rel (%p4568) target = $region52
        $region51: #{basic_stage.1} parent=35 // pred_region
          %s4572 = ssub.s32 4096, 4096
          %4573 = vsyncadd %s4564, %s4572
          %s4574 = smul.addr %s22, 32
          %s4575 = smul.addr %s4574, 128
          %s4576 = scalar_lea.hbm %s4, %s4575
          %s4577 = sshll.u32 %s4567, 4
          %s4578 = int_to_ptr.vmem [resolvable:$true] %s4577
          %4583 = dma.vmem_to_hbm [thread:$0]  %s4578, 4096, %s4576, %s4564, 128, 128, 8
        $region52: #{basic_stage.1} parent=35 // pred_fallthru
          _
      $region36: #{basic_stage.1} parent=5 // pred_fallthru
        _
      %p4584 = scmp.le.s32.totalorder 2, %s17
      // Predicated region
      $region53: #{basic_stage.1} parent=5 // pred_check
        %p4585 = pneg %p4584
      $region54: #{basic_stage.1} parent=5 // pred_check_branch
        %4587 = sbr.rel (%p4585) target = $region56
      $region55: #{basic_stage.1} parent=5 // pred_region
        %s4588 = ssub.s32 %s17, 2
        // Predicated region
        $region57: #{basic_stage.1} parent=55 // pred_check
          %p4589 = pneg %p135
        $region58: #{basic_stage.1} parent=55 // pred_check_branch
          %4591 = sbr.rel (%p4589) target = $region60
        $region59: #{basic_stage.1} parent=55 // pred_region
          %s4592 = sand.u32 %s120, 1
          %s4593 = scalar_lea.sflag [#allocation4], %s4592
          %s4594 = sand.u32 %s120, 1
          %s4595 = smul.addr %s4594, 256
          %s4596 = scalar_lea.vmem [#allocation8], %s4595
          %4597 = dma.done %s4593, 4096
        $region60: #{basic_stage.1} parent=55 // pred_fallthru
          _
      $region56: #{basic_stage.1} parent=5 // pred_fallthru
        _
    $region6: #{basic_stage.1} parent=1 // loop_footer
      %s21 = sadd.s32 1, %s17
    $region7: #{basic_stage.1} parent=1 // loop_footer_branch
      %16 = sbr.rel target = $region3
    $region8: #{basic_stage.1} parent=1 // loop_exit
      _
    %4598 = vsyncpa [#allocation3], 1
    %s4599 = scalar_lea.sflag [#allocation3], 1
    %4600 = vsyncpa %s4599, 1
    %4601 = vsyncpa [#allocation6], 1
    %4602 = vsyncpa [#allocation4], 1
    %s4603 = scalar_lea.sflag [#allocation4], 1
    %4604 = vsyncpa %s4603, 1

</llo_original>
